<compile_context>
chip_gen: v6e
topology: v6e:2x2x1
jax: 0.10.0
libtpu: 0.0.40
codegen_flags: <defaults>
</compile_context>

<pallas_src>
import functools

import jax
import jax.numpy as jnp
import numpy as np
from jax import lax
from jax.experimental import pallas as pl
from jax.experimental.pallas import tpu as pltpu


def graphormer_kernel(x_ref, bias_ref, wqkv_ref, bqkv_ref, wo_ref,
                      w1_ref, b1_ref, w2_ref, vecs_ref, out_ref,
                      *, num_heads, block_b, compute_dtype):
    M, F = x_ref.shape                       # M = block_b * N
    H = num_heads
    N = M // block_b
    d = F // H
    scaling = d ** -0.5
    f32 = jnp.float32
    cdt = compute_dtype

    x = x_ref[...]                           # (M, F) f32, kept for residuals

    # ---- fused QKV projection: one MXU pass, f32 accumulation --------------
    qkv = jnp.dot(x.astype(cdt), wqkv_ref[...],
                  preferred_element_type=f32) + bqkv_ref[0]
    q = qkv[:, :F] * scaling                 # 1/sqrt(d) folded once into q
    k = qkv[:, F:2 * F]
    v = qkv[:, 2 * F:]

    # q @ k^T without materializing a transpose: contract feature axes.
    dn_qk = (((1,), (1,)), ((), ()))

    attn_slabs = []
    for b in range(block_b):                 # static, block_b is small
        r = slice(b * N, (b + 1) * N)
        qb = q[r].astype(cdt)
        kb = k[r].astype(cdt)
        vb = v[r].astype(cdt)
        acc = None                           # post-Wo (N, F) f32 accumulator
        for h in range(H):                   # static head count
            c = slice(h * d, (h + 1) * d)
            s = lax.dot_general(qb[:, c], kb[:, c], dn_qk,
                                preferred_element_type=f32)        # (N, N)
            s = s + bias_ref[b, h]           # bias already holds -1e30 * mask
            s = s - jnp.max(s, axis=-1, keepdims=True)
            p = jnp.exp(s)
            # Exact normalization (approx reciprocal flagged by review).
            p = p / jnp.sum(p, axis=-1, keepdims=True)
            o = jnp.dot(p.astype(cdt), vb[:, c],
                        preferred_element_type=f32)                # (N, d)
            # Contract this head straight against its Wo rows: full lane-width
            # (N, F) accumulation, no sub-128-lane stores and no scratch.
            contrib = jnp.dot(o.astype(cdt), wo_ref[pl.ds(h * d, d), :],
                              preferred_element_type=f32)
            acc = contrib if acc is None else acc + contrib
        attn_slabs.append(acc)
    attn = attn_slabs[0] if block_b == 1 else jnp.concatenate(attn_slabs, axis=0)
    a = attn + vecs_ref[0]                   # + bo

    # ---- residual + attention LayerNorm (norm_first=False, f32 stats) ------
    y = x + a
    mu = jnp.mean(y, axis=-1, keepdims=True)
    var = jnp.mean((y - mu) ** 2, axis=-1, keepdims=True)
    y = (y - mu) * lax.rsqrt(var + 1e-5) * vecs_ref[2] + vecs_ref[3]

    # ---- FFN: Linear -> ReLU -> Linear (dropouts identity in eval mode) ----
    h1 = jnp.dot(y.astype(cdt), w1_ref[...],
                 preferred_element_type=f32) + b1_ref[0]
    h1 = jnp.maximum(h1, 0.0)
    f = jnp.dot(h1.astype(cdt), w2_ref[...],
                preferred_element_type=f32) + vecs_ref[1]          # + b2

    # ---- residual + FFN LayerNorm -------------------------------------------
    z = y + f
    mu2 = jnp.mean(z, axis=-1, keepdims=True)
    var2 = jnp.mean((z - mu2) ** 2, axis=-1, keepdims=True)
    out_ref[...] = (z - mu2) * lax.rsqrt(var2 + 1e-5) * vecs_ref[4] + vecs_ref[5]


def _auto_block_b(B, N, target_m=256):
    """Smallest divisor of B with block_b * N >= target_m, keeping nb >= 2."""
    best = 1
    for cand in range(1, B + 1):
        if B % cand:
            continue
        if cand > 1 and B // cand < 2:
            break
        best = cand
        if cand * N >= target_m:
            break
    return best


def graphormer_layer(nfeat, attn_bias, attn_mask, params, *, num_heads,
                     block_b=None, use_bf16=False, vmem_limit_bytes=None):
    B, N, F = nfeat.shape
    H = num_heads
    hidden = params["w1"].shape[1]
    assert F % H == 0
    if block_b is None:
        block_b = _auto_block_b(B, N)
    assert B % block_b == 0
    nb = B // block_b
    Mb = block_b * N
    assert Mb % 8 == 0 or nb == 1, \
        "block_b * N must be a multiple of 8 (sublane tile) unless nb == 1"

    cdt = jnp.bfloat16 if use_bf16 else jnp.float32

    # ---- host-side layout / packing (plumbing, once per call) ---------------
    x2d = nfeat.reshape(B * N, F).astype(jnp.float32)
    bias_t = jnp.transpose(attn_bias, (0, 3, 1, 2)).astype(jnp.float32)  # (B,H,N,N)
    if attn_mask is not None:
        # Fold mask into the additive bias once (finite -1e30; the module
        # requires >=1 valid key per query row, so no fully-masked rows).
        bias_t = bias_t + (attn_mask != 0).astype(jnp.float32)[:, None] * (-1e30)
    bias_t = bias_t.astype(cdt)

    wqkv = jnp.concatenate([params["wq"], params["wk"], params["wv"]],
                           axis=1).astype(cdt)                           # (F, 3F)
    bqkv = jnp.concatenate([params["bq"], params["bk"], params["bv"]]
                           ).reshape(1, 3 * F).astype(jnp.float32)
    wo = params["wo"].astype(cdt)
    w1 = params["w1"].astype(cdt)
    b1 = params["b1"].reshape(1, hidden).astype(jnp.float32)
    w2 = params["w2"].astype(cdt)
    vecs = jnp.stack([params["bo"], params["b2"],
                      params["ln1_g"], params["ln1_b"],
                      params["ln2_g"], params["ln2_b"]],
                     axis=0).astype(jnp.float32)                         # (6, F)

    kernel = functools.partial(graphormer_kernel, num_heads=H,
                               block_b=block_b, compute_dtype=cdt)

    # ---- VMEM budget: streamed tiles (double-buffered) + single-buffered
    #      weights + rough activation slabs; always set explicitly. ----------
    it = jnp.dtype(cdt).itemsize
    stream = 2 * (Mb * F * 4 + Mb * F * 4 + block_b * H * N * N * it)
    weights = (F * 3 * F + F * F + F * hidden + hidden * F) * it \
        + (3 * F + hidden + 6 * F) * 4
    acts = Mb * (3 * F + hidden + 6 * F) * 4
    if vmem_limit_bytes is None:
        vmem_limit_bytes = int(min(max(1.5 * (stream + weights + acts),
                                       32 * 1024 * 1024),
                                   100 * 1024 * 1024))

    def run(single_buffer_consts):
        def const(shape):
            nd = len(shape)

            def idx(i):
                return (0,) * nd

            if single_buffer_consts:
                # Constant index_map -> fetched once; no need for 2 buffers.
                return pl.BlockSpec(shape, idx, pipeline_mode=pl.Buffered(1))
            return pl.BlockSpec(shape, idx)

        in_specs = [
            pl.BlockSpec((Mb, F), lambda i: (i, 0)),                  # nfeat (flat)
            pl.BlockSpec((block_b, H, N, N), lambda i: (i, 0, 0, 0)), # bias+mask
            const((F, 3 * F)), const((1, 3 * F)),                     # Wqkv, bqkv
            const((F, F)),                                            # Wo
            const((F, hidden)), const((1, hidden)),                   # W1, b1
            const((hidden, F)),                                       # W2
            const((6, F)),                                            # bo,b2,ln*
        ]
        return pl.pallas_call(
            kernel,
            out_shape=jax.ShapeDtypeStruct((B * N, F), jnp.float32),
            grid=(nb,),
            in_specs=in_specs,
            out_specs=pl.BlockSpec((Mb, F), lambda i: (i, 0)),
            compiler_params=pltpu.CompilerParams(
                dimension_semantics=("parallel",),
                vmem_limit_bytes=vmem_limit_bytes),
        )(x2d, bias_t, wqkv, bqkv, wo, w1, b1, w2, vecs)

    try:
        out2d = run(single_buffer_consts=True)
    except Exception:
        # Fallback if this JAX version rejects pl.Buffered(1) on constant
        # blocks; only costs extra VMEM (default double buffering).
        out2d = run(single_buffer_consts=False)
    return out2d.reshape(B, N, F)


def graphormer_reference(nfeat, attn_bias, attn_mask, params, *, num_heads):
    """Pure-JAX reference mirroring the PyTorch forward (eval mode)."""
    B, N, F = nfeat.shape
    H = num_heads
    hd = F // H
    scaling = hd ** -0.5

    def ln(x, g, b):
        m = jnp.mean(x, axis=-1, keepdims=True)
        v = jnp.mean((x - m) ** 2, axis=-1, keepdims=True)
        return (x - m) * lax.rsqrt(v + 1e-5) * g + b

    q = (nfeat @ params["wq"] + params["bq"]).reshape(B, N, H, hd) * scaling
    k = (nfeat @ params["wk"] + params["bk"]).reshape(B, N, H, hd)
    v = (nfeat @ params["wv"] + params["bv"]).reshape(B, N, H, hd)
    s = jnp.einsum("bnhd,bmhd->bhnm", q, k)
    s = s + jnp.transpose(attn_bias, (0, 3, 1, 2))
    s = jnp.where(attn_mask[:, None, :, :] != 0, -jnp.inf, s)
    p = jax.nn.softmax(s, axis=-1)
    a = jnp.einsum("bhnm,bmhd->bnhd", p, v).reshape(B, N, F)
    a = a @ params["wo"] + params["bo"]
    y = ln(nfeat + a, params["ln1_g"], params["ln1_b"])
    f = jnp.maximum(y @ params["w1"] + params["b1"], 0.0) @ params["w2"] + params["b2"]
    return ln(y + f, params["ln2_g"], params["ln2_b"])


if __name__ == "__main__":
    B, N, F, H, HID = 2, 8, 32, 4, 64

    key = jax.random.PRNGKey(0)
    keys = jax.random.split(key, 12)

    def init(k, shape, scale=0.1):
        return (scale * jax.random.normal(k, shape)).astype(jnp.float32)

    params = {
        "wq": init(keys[0], (F, F)), "bq": init(keys[1], (F,)),
        "wk": init(keys[2], (F, F)), "bk": init(keys[3], (F,)),
        "wv": init(keys[4], (F, F)), "bv": init(keys[5], (F,)),
        "wo": init(keys[6], (F, F)), "bo": init(keys[7], (F,)),
        "w1": init(keys[8], (F, HID)), "b1": init(keys[9], (HID,)),
        "w2": init(keys[10], (HID, F)), "b2": jnp.zeros((F,), jnp.float32),
        "ln1_g": jnp.ones((F,), jnp.float32), "ln1_b": jnp.zeros((F,), jnp.float32),
        "ln2_g": jnp.ones((F,), jnp.float32), "ln2_b": jnp.zeros((F,), jnp.float32),
    }

    dkey = jax.random.split(keys[11], 2)
    nfeat = jax.random.normal(dkey[0], (B, N, F), dtype=jnp.float32)
    attn_bias = jax.random.normal(dkey[1], (B, N, N, H), dtype=jnp.float32)
    # mask out the last key position for every query of graph 1 (every row
    # still has valid entries, as the module's docstring requires).
    attn_mask = jnp.zeros((B, N, N), dtype=jnp.float32).at[1, :, N - 1].set(1.0)

    ref = graphormer_reference(nfeat, attn_bias, attn_mask, params, num_heads=H)

    # f32 path: tight check against the f32 reference.
    out = graphormer_layer(nfeat, attn_bias, attn_mask, params, num_heads=H)
    out = jax.block_until_ready(out)
    np.testing.assert_allclose(np.asarray(out), np.asarray(ref),
                               rtol=2e-3, atol=2e-3)

    # bf16-MXU-operand path (v6e/v7x peak); f32 stats, looser sanity tolerance.
    out_bf16 = graphormer_layer(nfeat, attn_bias, attn_mask, params,
                                num_heads=H, use_bf16=True)
    out_bf16 = jax.block_until_ready(out_bf16)
    np.testing.assert_allclose(np.asarray(out_bf16), np.asarray(ref),
                               rtol=5e-2, atol=5e-2)

    print("KERNEL_OK")
</pallas_src>

<mosaic_0001>
module attributes {stable_mosaic.version = 11 : i64} {
  func.func @graphormer_kernel(%arg0: i32, %arg1: memref<8x32xf32, #tpu.memory_space<vmem>>, %arg2: memref<1x4x8x8xf32, #tpu.memory_space<vmem>>, %arg3: memref<32x96xf32, #tpu.memory_space<vmem>>, %arg4: memref<1x96xf32, #tpu.memory_space<vmem>>, %arg5: memref<32x32xf32, #tpu.memory_space<vmem>>, %arg6: memref<32x64xf32, #tpu.memory_space<vmem>>, %arg7: memref<1x64xf32, #tpu.memory_space<vmem>>, %arg8: memref<64x32xf32, #tpu.memory_space<vmem>>, %arg9: memref<6x32xf32, #tpu.memory_space<vmem>>, %arg10: memref<8x32xf32, #tpu.memory_space<vmem>>) attributes {dimension_semantics = [#tpu.dimension_semantics<parallel>], iteration_bounds = array<i64: 2>, scalar_prefetch = 0 : i64, scratch_operands = 0 : i64, tpu.core_type = #tpu.core_type<tc>, window_params = [{transform_indices = @transform_0, window_bounds = array<i64: 8, 32>}, {transform_indices = @transform_1, window_bounds = array<i64: 1, 4, 8, 8>}, {pipeline_mode = #tpu.pipeline_mode<synchronous>, transform_indices = @transform_2, window_bounds = array<i64: 32, 96>}, {pipeline_mode = #tpu.pipeline_mode<synchronous>, transform_indices = @transform_3, window_bounds = array<i64: 1, 96>}, {pipeline_mode = #tpu.pipeline_mode<synchronous>, transform_indices = @transform_4, window_bounds = array<i64: 32, 32>}, {pipeline_mode = #tpu.pipeline_mode<synchronous>, transform_indices = @transform_5, window_bounds = array<i64: 32, 64>}, {pipeline_mode = #tpu.pipeline_mode<synchronous>, transform_indices = @transform_6, window_bounds = array<i64: 1, 64>}, {pipeline_mode = #tpu.pipeline_mode<synchronous>, transform_indices = @transform_7, window_bounds = array<i64: 64, 32>}, {pipeline_mode = #tpu.pipeline_mode<synchronous>, transform_indices = @transform_8, window_bounds = array<i64: 6, 32>}, {transform_indices = @transform_9, window_bounds = array<i64: 8, 32>}]} {
    %c0 = arith.constant 0 : index
    %c0_0 = arith.constant 0 : index
    %0 = vector.load %arg1[%c0, %c0_0] : memref<8x32xf32, #tpu.memory_space<vmem>>, vector<8x32xf32>
    %c0_1 = arith.constant 0 : index
    %c0_2 = arith.constant 0 : index
    %1 = vector.load %arg3[%c0_1, %c0_2] : memref<32x96xf32, #tpu.memory_space<vmem>>, vector<32x96xf32>
    %cst = arith.constant dense<0.000000e+00> : vector<8x96xf32>
    %2 = tpu.matmul %0, %1, %cst {dimension_numbers = #tpu.dot_dimension_numbers<[1], [0], [0], [1], [0, 0, 1, 1], [], []>} : vector<8x32xf32>, vector<32x96xf32>, vector<8x96xf32> -> vector<8x96xf32>
    %c0_3 = arith.constant 0 : index
    %c0_4 = arith.constant 0 : index
    %3 = vector.load %arg4[%c0_3, %c0_4] : memref<1x96xf32, #tpu.memory_space<vmem>>, vector<1x96xf32>
    %4 = vector.shape_cast %3 : vector<1x96xf32> to vector<96xf32>
    %5 = vector.shape_cast %4 : vector<96xf32> to vector<1x96xf32>
    %6 = vector.broadcast %5 : vector<1x96xf32> to vector<8x96xf32>
    %7 = arith.addf %2, %6 : vector<8x96xf32>
    %8 = vector.extract_strided_slice %7 {offsets = [0, 0], sizes = [8, 32], strides = [1, 1]} : vector<8x96xf32> to vector<8x32xf32>
    %cst_5 = arith.constant 0.353553385 : f32
    %9 = vector.broadcast %cst_5 : f32 to vector<8x32xf32>
    %10 = arith.mulf %8, %9 : vector<8x32xf32>
    %11 = vector.extract_strided_slice %7 {offsets = [0, 32], sizes = [8, 32], strides = [1, 1]} : vector<8x96xf32> to vector<8x32xf32>
    %12 = vector.extract_strided_slice %7 {offsets = [0, 64], sizes = [8, 32], strides = [1, 1]} : vector<8x96xf32> to vector<8x32xf32>
    %13 = vector.extract_strided_slice %10 {offsets = [0, 0], sizes = [8, 8], strides = [1, 1]} : vector<8x32xf32> to vector<8x8xf32>
    %14 = vector.extract_strided_slice %11 {offsets = [0, 0], sizes = [8, 8], strides = [1, 1]} : vector<8x32xf32> to vector<8x8xf32>
    %cst_6 = arith.constant dense<0.000000e+00> : vector<8x8xf32>
    %15 = tpu.matmul %13, %14, %cst_6 {dimension_numbers = #tpu.dot_dimension_numbers<[1], [1], [0], [0], [0, 0, 1, 0], [], []>} : vector<8x8xf32>, vector<8x8xf32>, vector<8x8xf32> -> vector<8x8xf32>
    %c0_7 = arith.constant 0 : index
    %c0_8 = arith.constant 0 : index
    %c0_9 = arith.constant 0 : index
    %c0_10 = arith.constant 0 : index
    %16 = vector.load %arg2[%c0_7, %c0_8, %c0_9, %c0_10] : memref<1x4x8x8xf32, #tpu.memory_space<vmem>>, vector<1x1x8x8xf32>
    %17 = vector.shape_cast %16 : vector<1x1x8x8xf32> to vector<8x8xf32>
    %18 = arith.addf %15, %17 : vector<8x8xf32>
    %cst_11 = arith.constant dense<0xFF800000> : vector<8xf32>
    %19 = vector.multi_reduction <maximumf>, %18, %cst_11 [1] : vector<8x8xf32> to vector<8xf32>
    %20 = vector.shape_cast %19 : vector<8xf32> to vector<8x1xf32>
    %21 = vector.broadcast %20 : vector<8x1xf32> to vector<8x8xf32>
    %22 = arith.subf %18, %21 : vector<8x8xf32>
    %23 = math.exp %22 : vector<8x8xf32>
    %cst_12 = arith.constant dense<0.000000e+00> : vector<8xf32>
    %24 = vector.multi_reduction <add>, %23, %cst_12 [1] : vector<8x8xf32> to vector<8xf32>
    %25 = vector.shape_cast %24 : vector<8xf32> to vector<8x1xf32>
    %26 = vector.broadcast %25 : vector<8x1xf32> to vector<8x8xf32>
    %27 = arith.divf %23, %26 : vector<8x8xf32>
    %28 = vector.extract_strided_slice %12 {offsets = [0, 0], sizes = [8, 8], strides = [1, 1]} : vector<8x32xf32> to vector<8x8xf32>
    %cst_13 = arith.constant dense<0.000000e+00> : vector<8x8xf32>
    %29 = tpu.matmul %27, %28, %cst_13 {dimension_numbers = #tpu.dot_dimension_numbers<[1], [0], [0], [1], [0, 0, 1, 1], [], []>} : vector<8x8xf32>, vector<8x8xf32>, vector<8x8xf32> -> vector<8x8xf32>
    %c0_14 = arith.constant 0 : index
    %c0_15 = arith.constant 0 : index
    %30 = vector.load %arg5[%c0_14, %c0_15] : memref<32x32xf32, #tpu.memory_space<vmem>>, vector<8x32xf32>
    %cst_16 = arith.constant dense<0.000000e+00> : vector<8x32xf32>
    %31 = tpu.matmul %29, %30, %cst_16 {dimension_numbers = #tpu.dot_dimension_numbers<[1], [0], [0], [1], [0, 0, 1, 1], [], []>} : vector<8x8xf32>, vector<8x32xf32>, vector<8x32xf32> -> vector<8x32xf32>
    %32 = vector.extract_strided_slice %10 {offsets = [0, 8], sizes = [8, 8], strides = [1, 1]} : vector<8x32xf32> to vector<8x8xf32>
    %33 = vector.extract_strided_slice %11 {offsets = [0, 8], sizes = [8, 8], strides = [1, 1]} : vector<8x32xf32> to vector<8x8xf32>
    %cst_17 = arith.constant dense<0.000000e+00> : vector<8x8xf32>
    %34 = tpu.matmul %32, %33, %cst_17 {dimension_numbers = #tpu.dot_dimension_numbers<[1], [1], [0], [0], [0, 0, 1, 0], [], []>} : vector<8x8xf32>, vector<8x8xf32>, vector<8x8xf32> -> vector<8x8xf32>
    %c0_18 = arith.constant 0 : index
    %c1 = arith.constant 1 : index
    %c0_19 = arith.constant 0 : index
    %c0_20 = arith.constant 0 : index
    %35 = vector.load %arg2[%c0_18, %c1, %c0_19, %c0_20] : memref<1x4x8x8xf32, #tpu.memory_space<vmem>>, vector<1x1x8x8xf32>
    %36 = vector.shape_cast %35 : vector<1x1x8x8xf32> to vector<8x8xf32>
    %37 = arith.addf %34, %36 : vector<8x8xf32>
    %cst_21 = arith.constant dense<0xFF800000> : vector<8xf32>
    %38 = vector.multi_reduction <maximumf>, %37, %cst_21 [1] : vector<8x8xf32> to vector<8xf32>
    %39 = vector.shape_cast %38 : vector<8xf32> to vector<8x1xf32>
    %40 = vector.broadcast %39 : vector<8x1xf32> to vector<8x8xf32>
    %41 = arith.subf %37, %40 : vector<8x8xf32>
    %42 = math.exp %41 : vector<8x8xf32>
    %cst_22 = arith.constant dense<0.000000e+00> : vector<8xf32>
    %43 = vector.multi_reduction <add>, %42, %cst_22 [1] : vector<8x8xf32> to vector<8xf32>
    %44 = vector.shape_cast %43 : vector<8xf32> to vector<8x1xf32>
    %45 = vector.broadcast %44 : vector<8x1xf32> to vector<8x8xf32>
    %46 = arith.divf %42, %45 : vector<8x8xf32>
    %47 = vector.extract_strided_slice %12 {offsets = [0, 8], sizes = [8, 8], strides = [1, 1]} : vector<8x32xf32> to vector<8x8xf32>
    %cst_23 = arith.constant dense<0.000000e+00> : vector<8x8xf32>
    %48 = tpu.matmul %46, %47, %cst_23 {dimension_numbers = #tpu.dot_dimension_numbers<[1], [0], [0], [1], [0, 0, 1, 1], [], []>} : vector<8x8xf32>, vector<8x8xf32>, vector<8x8xf32> -> vector<8x8xf32>
    %c8 = arith.constant 8 : index
    %c0_24 = arith.constant 0 : index
    %49 = vector.load %arg5[%c8, %c0_24] : memref<32x32xf32, #tpu.memory_space<vmem>>, vector<8x32xf32>
    %cst_25 = arith.constant dense<0.000000e+00> : vector<8x32xf32>
    %50 = tpu.matmul %48, %49, %cst_25 {dimension_numbers = #tpu.dot_dimension_numbers<[1], [0], [0], [1], [0, 0, 1, 1], [], []>} : vector<8x8xf32>, vector<8x32xf32>, vector<8x32xf32> -> vector<8x32xf32>
    %51 = arith.addf %31, %50 : vector<8x32xf32>
    %52 = vector.extract_strided_slice %10 {offsets = [0, 16], sizes = [8, 8], strides = [1, 1]} : vector<8x32xf32> to vector<8x8xf32>
    %53 = vector.extract_strided_slice %11 {offsets = [0, 16], sizes = [8, 8], strides = [1, 1]} : vector<8x32xf32> to vector<8x8xf32>
    %cst_26 = arith.constant dense<0.000000e+00> : vector<8x8xf32>
    %54 = tpu.matmul %52, %53, %cst_26 {dimension_numbers = #tpu.dot_dimension_numbers<[1], [1], [0], [0], [0, 0, 1, 0], [], []>} : vector<8x8xf32>, vector<8x8xf32>, vector<8x8xf32> -> vector<8x8xf32>
    %c0_27 = arith.constant 0 : index
    %c2 = arith.constant 2 : index
    %c0_28 = arith.constant 0 : index
    %c0_29 = arith.constant 0 : index
    %55 = vector.load %arg2[%c0_27, %c2, %c0_28, %c0_29] : memref<1x4x8x8xf32, #tpu.memory_space<vmem>>, vector<1x1x8x8xf32>
    %56 = vector.shape_cast %55 : vector<1x1x8x8xf32> to vector<8x8xf32>
    %57 = arith.addf %54, %56 : vector<8x8xf32>
    %cst_30 = arith.constant dense<0xFF800000> : vector<8xf32>
    %58 = vector.multi_reduction <maximumf>, %57, %cst_30 [1] : vector<8x8xf32> to vector<8xf32>
    %59 = vector.shape_cast %58 : vector<8xf32> to vector<8x1xf32>
    %60 = vector.broadcast %59 : vector<8x1xf32> to vector<8x8xf32>
    %61 = arith.subf %57, %60 : vector<8x8xf32>
    %62 = math.exp %61 : vector<8x8xf32>
    %cst_31 = arith.constant dense<0.000000e+00> : vector<8xf32>
    %63 = vector.multi_reduction <add>, %62, %cst_31 [1] : vector<8x8xf32> to vector<8xf32>
    %64 = vector.shape_cast %63 : vector<8xf32> to vector<8x1xf32>
    %65 = vector.broadcast %64 : vector<8x1xf32> to vector<8x8xf32>
    %66 = arith.divf %62, %65 : vector<8x8xf32>
    %67 = vector.extract_strided_slice %12 {offsets = [0, 16], sizes = [8, 8], strides = [1, 1]} : vector<8x32xf32> to vector<8x8xf32>
    %cst_32 = arith.constant dense<0.000000e+00> : vector<8x8xf32>
    %68 = tpu.matmul %66, %67, %cst_32 {dimension_numbers = #tpu.dot_dimension_numbers<[1], [0], [0], [1], [0, 0, 1, 1], [], []>} : vector<8x8xf32>, vector<8x8xf32>, vector<8x8xf32> -> vector<8x8xf32>
    %c16 = arith.constant 16 : index
    %c0_33 = arith.constant 0 : index
    %69 = vector.load %arg5[%c16, %c0_33] : memref<32x32xf32, #tpu.memory_space<vmem>>, vector<8x32xf32>
    %cst_34 = arith.constant dense<0.000000e+00> : vector<8x32xf32>
    %70 = tpu.matmul %68, %69, %cst_34 {dimension_numbers = #tpu.dot_dimension_numbers<[1], [0], [0], [1], [0, 0, 1, 1], [], []>} : vector<8x8xf32>, vector<8x32xf32>, vector<8x32xf32> -> vector<8x32xf32>
    %71 = arith.addf %51, %70 : vector<8x32xf32>
    %72 = vector.extract_strided_slice %10 {offsets = [0, 24], sizes = [8, 8], strides = [1, 1]} : vector<8x32xf32> to vector<8x8xf32>
    %73 = vector.extract_strided_slice %11 {offsets = [0, 24], sizes = [8, 8], strides = [1, 1]} : vector<8x32xf32> to vector<8x8xf32>
    %cst_35 = arith.constant dense<0.000000e+00> : vector<8x8xf32>
    %74 = tpu.matmul %72, %73, %cst_35 {dimension_numbers = #tpu.dot_dimension_numbers<[1], [1], [0], [0], [0, 0, 1, 0], [], []>} : vector<8x8xf32>, vector<8x8xf32>, vector<8x8xf32> -> vector<8x8xf32>
    %c0_36 = arith.constant 0 : index
    %c3 = arith.constant 3 : index
    %c0_37 = arith.constant 0 : index
    %c0_38 = arith.constant 0 : index
    %75 = vector.load %arg2[%c0_36, %c3, %c0_37, %c0_38] : memref<1x4x8x8xf32, #tpu.memory_space<vmem>>, vector<1x1x8x8xf32>
    %76 = vector.shape_cast %75 : vector<1x1x8x8xf32> to vector<8x8xf32>
    %77 = arith.addf %74, %76 : vector<8x8xf32>
    %cst_39 = arith.constant dense<0xFF800000> : vector<8xf32>
    %78 = vector.multi_reduction <maximumf>, %77, %cst_39 [1] : vector<8x8xf32> to vector<8xf32>
    %79 = vector.shape_cast %78 : vector<8xf32> to vector<8x1xf32>
    %80 = vector.broadcast %79 : vector<8x1xf32> to vector<8x8xf32>
    %81 = arith.subf %77, %80 : vector<8x8xf32>
    %82 = math.exp %81 : vector<8x8xf32>
    %cst_40 = arith.constant dense<0.000000e+00> : vector<8xf32>
    %83 = vector.multi_reduction <add>, %82, %cst_40 [1] : vector<8x8xf32> to vector<8xf32>
    %84 = vector.shape_cast %83 : vector<8xf32> to vector<8x1xf32>
    %85 = vector.broadcast %84 : vector<8x1xf32> to vector<8x8xf32>
    %86 = arith.divf %82, %85 : vector<8x8xf32>
    %87 = vector.extract_strided_slice %12 {offsets = [0, 24], sizes = [8, 8], strides = [1, 1]} : vector<8x32xf32> to vector<8x8xf32>
    %cst_41 = arith.constant dense<0.000000e+00> : vector<8x8xf32>
    %88 = tpu.matmul %86, %87, %cst_41 {dimension_numbers = #tpu.dot_dimension_numbers<[1], [0], [0], [1], [0, 0, 1, 1], [], []>} : vector<8x8xf32>, vector<8x8xf32>, vector<8x8xf32> -> vector<8x8xf32>
    %c24 = arith.constant 24 : index
    %c0_42 = arith.constant 0 : index
    %89 = vector.load %arg5[%c24, %c0_42] : memref<32x32xf32, #tpu.memory_space<vmem>>, vector<8x32xf32>
    %cst_43 = arith.constant dense<0.000000e+00> : vector<8x32xf32>
    %90 = tpu.matmul %88, %89, %cst_43 {dimension_numbers = #tpu.dot_dimension_numbers<[1], [0], [0], [1], [0, 0, 1, 1], [], []>} : vector<8x8xf32>, vector<8x32xf32>, vector<8x32xf32> -> vector<8x32xf32>
    %91 = arith.addf %71, %90 : vector<8x32xf32>
    %c0_44 = arith.constant 0 : index
    %c0_45 = arith.constant 0 : index
    %92 = vector.load %arg9[%c0_44, %c0_45] : memref<6x32xf32, #tpu.memory_space<vmem>>, vector<1x32xf32>
    %93 = vector.shape_cast %92 : vector<1x32xf32> to vector<32xf32>
    %94 = vector.shape_cast %93 : vector<32xf32> to vector<1x32xf32>
    %95 = vector.broadcast %94 : vector<1x32xf32> to vector<8x32xf32>
    %96 = arith.addf %91, %95 : vector<8x32xf32>
    %97 = arith.addf %0, %96 : vector<8x32xf32>
    %cst_46 = arith.constant dense<0.000000e+00> : vector<8xf32>
    %98 = vector.multi_reduction <add>, %97, %cst_46 [1] : vector<8x32xf32> to vector<8xf32>
    %99 = vector.shape_cast %98 : vector<8xf32> to vector<8x1xf32>
    %cst_47 = arith.constant 3.200000e+01 : f32
    %100 = vector.broadcast %cst_47 : f32 to vector<8x1xf32>
    %101 = arith.divf %99, %100 : vector<8x1xf32>
    %102 = vector.broadcast %101 : vector<8x1xf32> to vector<8x32xf32>
    %103 = arith.subf %97, %102 : vector<8x32xf32>
    %104 = arith.mulf %103, %103 : vector<8x32xf32>
    %cst_48 = arith.constant dense<0.000000e+00> : vector<8xf32>
    %105 = vector.multi_reduction <add>, %104, %cst_48 [1] : vector<8x32xf32> to vector<8xf32>
    %106 = vector.shape_cast %105 : vector<8xf32> to vector<8x1xf32>
    %cst_49 = arith.constant 3.200000e+01 : f32
    %107 = vector.broadcast %cst_49 : f32 to vector<8x1xf32>
    %108 = arith.divf %106, %107 : vector<8x1xf32>
    %109 = vector.broadcast %101 : vector<8x1xf32> to vector<8x32xf32>
    %110 = arith.subf %97, %109 : vector<8x32xf32>
    %cst_50 = arith.constant 9.99999974E-6 : f32
    %111 = vector.broadcast %cst_50 : f32 to vector<8x1xf32>
    %112 = arith.addf %108, %111 : vector<8x1xf32>
    %113 = math.rsqrt %112 : vector<8x1xf32>
    %114 = vector.broadcast %113 : vector<8x1xf32> to vector<8x32xf32>
    %115 = arith.mulf %110, %114 : vector<8x32xf32>
    %c2_51 = arith.constant 2 : index
    %c0_52 = arith.constant 0 : index
    %116 = vector.load %arg9[%c2_51, %c0_52] : memref<6x32xf32, #tpu.memory_space<vmem>>, vector<1x32xf32>
    %117 = vector.shape_cast %116 : vector<1x32xf32> to vector<32xf32>
    %118 = vector.shape_cast %117 : vector<32xf32> to vector<1x32xf32>
    %119 = vector.broadcast %118 : vector<1x32xf32> to vector<8x32xf32>
    %120 = arith.mulf %115, %119 : vector<8x32xf32>
    %c3_53 = arith.constant 3 : index
    %c0_54 = arith.constant 0 : index
    %121 = vector.load %arg9[%c3_53, %c0_54] : memref<6x32xf32, #tpu.memory_space<vmem>>, vector<1x32xf32>
    %122 = vector.shape_cast %121 : vector<1x32xf32> to vector<32xf32>
    %123 = vector.shape_cast %122 : vector<32xf32> to vector<1x32xf32>
    %124 = vector.broadcast %123 : vector<1x32xf32> to vector<8x32xf32>
    %125 = arith.addf %120, %124 : vector<8x32xf32>
    %c0_55 = arith.constant 0 : index
    %c0_56 = arith.constant 0 : index
    %126 = vector.load %arg6[%c0_55, %c0_56] : memref<32x64xf32, #tpu.memory_space<vmem>>, vector<32x64xf32>
    %cst_57 = arith.constant dense<0.000000e+00> : vector<8x64xf32>
    %127 = tpu.matmul %125, %126, %cst_57 {dimension_numbers = #tpu.dot_dimension_numbers<[1], [0], [0], [1], [0, 0, 1, 1], [], []>} : vector<8x32xf32>, vector<32x64xf32>, vector<8x64xf32> -> vector<8x64xf32>
    %c0_58 = arith.constant 0 : index
    %c0_59 = arith.constant 0 : index
    %128 = vector.load %arg7[%c0_58, %c0_59] : memref<1x64xf32, #tpu.memory_space<vmem>>, vector<1x64xf32>
    %129 = vector.shape_cast %128 : vector<1x64xf32> to vector<64xf32>
    %130 = vector.shape_cast %129 : vector<64xf32> to vector<1x64xf32>
    %131 = vector.broadcast %130 : vector<1x64xf32> to vector<8x64xf32>
    %132 = arith.addf %127, %131 : vector<8x64xf32>
    %cst_60 = arith.constant 0.000000e+00 : f32
    %133 = vector.broadcast %cst_60 : f32 to vector<8x64xf32>
    %134 = arith.maximumf %132, %133 : vector<8x64xf32>
    %c0_61 = arith.constant 0 : index
    %c0_62 = arith.constant 0 : index
    %135 = vector.load %arg8[%c0_61, %c0_62] : memref<64x32xf32, #tpu.memory_space<vmem>>, vector<64x32xf32>
    %cst_63 = arith.constant dense<0.000000e+00> : vector<8x32xf32>
    %136 = tpu.matmul %134, %135, %cst_63 {dimension_numbers = #tpu.dot_dimension_numbers<[1], [0], [0], [1], [0, 0, 1, 1], [], []>} : vector<8x64xf32>, vector<64x32xf32>, vector<8x32xf32> -> vector<8x32xf32>
    %c1_64 = arith.constant 1 : index
    %c0_65 = arith.constant 0 : index
    %137 = vector.load %arg9[%c1_64, %c0_65] : memref<6x32xf32, #tpu.memory_space<vmem>>, vector<1x32xf32>
    %138 = vector.shape_cast %137 : vector<1x32xf32> to vector<32xf32>
    %139 = vector.shape_cast %138 : vector<32xf32> to vector<1x32xf32>
    %140 = vector.broadcast %139 : vector<1x32xf32> to vector<8x32xf32>
    %141 = arith.addf %136, %140 : vector<8x32xf32>
    %142 = arith.addf %125, %141 : vector<8x32xf32>
    %cst_66 = arith.constant dense<0.000000e+00> : vector<8xf32>
    %143 = vector.multi_reduction <add>, %142, %cst_66 [1] : vector<8x32xf32> to vector<8xf32>
    %144 = vector.shape_cast %143 : vector<8xf32> to vector<8x1xf32>
    %cst_67 = arith.constant 3.200000e+01 : f32
    %145 = vector.broadcast %cst_67 : f32 to vector<8x1xf32>
    %146 = arith.divf %144, %145 : vector<8x1xf32>
    %147 = vector.broadcast %146 : vector<8x1xf32> to vector<8x32xf32>
    %148 = arith.subf %142, %147 : vector<8x32xf32>
    %149 = arith.mulf %148, %148 : vector<8x32xf32>
    %cst_68 = arith.constant dense<0.000000e+00> : vector<8xf32>
    %150 = vector.multi_reduction <add>, %149, %cst_68 [1] : vector<8x32xf32> to vector<8xf32>
    %151 = vector.shape_cast %150 : vector<8xf32> to vector<8x1xf32>
    %cst_69 = arith.constant 3.200000e+01 : f32
    %152 = vector.broadcast %cst_69 : f32 to vector<8x1xf32>
    %153 = arith.divf %151, %152 : vector<8x1xf32>
    %154 = vector.broadcast %146 : vector<8x1xf32> to vector<8x32xf32>
    %155 = arith.subf %142, %154 : vector<8x32xf32>
    %cst_70 = arith.constant 9.99999974E-6 : f32
    %156 = vector.broadcast %cst_70 : f32 to vector<8x1xf32>
    %157 = arith.addf %153, %156 : vector<8x1xf32>
    %158 = math.rsqrt %157 : vector<8x1xf32>
    %159 = vector.broadcast %158 : vector<8x1xf32> to vector<8x32xf32>
    %160 = arith.mulf %155, %159 : vector<8x32xf32>
    %c4 = arith.constant 4 : index
    %c0_71 = arith.constant 0 : index
    %161 = vector.load %arg9[%c4, %c0_71] : memref<6x32xf32, #tpu.memory_space<vmem>>, vector<1x32xf32>
    %162 = vector.shape_cast %161 : vector<1x32xf32> to vector<32xf32>
    %163 = vector.shape_cast %162 : vector<32xf32> to vector<1x32xf32>
    %164 = vector.broadcast %163 : vector<1x32xf32> to vector<8x32xf32>
    %165 = arith.mulf %160, %164 : vector<8x32xf32>
    %c5 = arith.constant 5 : index
    %c0_72 = arith.constant 0 : index
    %166 = vector.load %arg9[%c5, %c0_72] : memref<6x32xf32, #tpu.memory_space<vmem>>, vector<1x32xf32>
    %167 = vector.shape_cast %166 : vector<1x32xf32> to vector<32xf32>
    %168 = vector.shape_cast %167 : vector<32xf32> to vector<1x32xf32>
    %169 = vector.broadcast %168 : vector<1x32xf32> to vector<8x32xf32>
    %170 = arith.addf %165, %169 : vector<8x32xf32>
    %c0_73 = arith.constant 0 : index
    %c0_74 = arith.constant 0 : index
    %171 = vector.load %arg10[%c0_73, %c0_74] : memref<8x32xf32, #tpu.memory_space<vmem>>, vector<8x32xf32>
    tpu.vector_store %arg10[%c0_73, %c0_74], %170 {strides = array<i32>} : memref<8x32xf32, #tpu.memory_space<vmem>>, vector<8x32xf32>,
    return
  }
  func.func @transform_0(%arg0: i32) -> (i32, i32) {
    %c0_i32 = arith.constant 0 : i32
    %c0_i32_0 = arith.constant 0 : i32
    return %arg0, %c0_i32 : i32, i32
  }
  func.func @transform_1(%arg0: i32) -> (i32, i32, i32, i32) {
    %c0_i32 = arith.constant 0 : i32
    %c0_i32_0 = arith.constant 0 : i32
    %c0_i32_1 = arith.constant 0 : i32
    %c0_i32_2 = arith.constant 0 : i32
    return %arg0, %c0_i32, %c0_i32_0, %c0_i32_1 : i32, i32, i32, i32
  }
  func.func @transform_2(%arg0: i32) -> (i32, i32) {
    %c0_i32 = arith.constant 0 : i32
    %c0_i32_0 = arith.constant 0 : i32
    %c0_i32_1 = arith.constant 0 : i32
    return %c0_i32, %c0_i32_0 : i32, i32
  }
  func.func @transform_3(%arg0: i32) -> (i32, i32) {
    %c0_i32 = arith.constant 0 : i32
    %c0_i32_0 = arith.constant 0 : i32
    %c0_i32_1 = arith.constant 0 : i32
    return %c0_i32, %c0_i32_0 : i32, i32
  }
  func.func @transform_4(%arg0: i32) -> (i32, i32) {
    %c0_i32 = arith.constant 0 : i32
    %c0_i32_0 = arith.constant 0 : i32
    %c0_i32_1 = arith.constant 0 : i32
    return %c0_i32, %c0_i32_0 : i32, i32
  }
  func.func @transform_5(%arg0: i32) -> (i32, i32) {
    %c0_i32 = arith.constant 0 : i32
    %c0_i32_0 = arith.constant 0 : i32
    %c0_i32_1 = arith.constant 0 : i32
    return %c0_i32, %c0_i32_0 : i32, i32
  }
  func.func @transform_6(%arg0: i32) -> (i32, i32) {
    %c0_i32 = arith.constant 0 : i32
    %c0_i32_0 = arith.constant 0 : i32
    %c0_i32_1 = arith.constant 0 : i32
    return %c0_i32, %c0_i32_0 : i32, i32
  }
  func.func @transform_7(%arg0: i32) -> (i32, i32) {
    %c0_i32 = arith.constant 0 : i32
    %c0_i32_0 = arith.constant 0 : i32
    %c0_i32_1 = arith.constant 0 : i32
    return %c0_i32, %c0_i32_0 : i32, i32
  }
  func.func @transform_8(%arg0: i32) -> (i32, i32) {
    %c0_i32 = arith.constant 0 : i32
    %c0_i32_0 = arith.constant 0 : i32
    %c0_i32_1 = arith.constant 0 : i32
    return %c0_i32, %c0_i32_0 : i32, i32
  }
  func.func @transform_9(%arg0: i32) -> (i32, i32) {
    %c0_i32 = arith.constant 0 : i32
    %c0_i32_0 = arith.constant 0 : i32
    return %arg0, %c0_i32 : i32, i32
  }
}

module attributes {stable_mosaic.version = 11 : i64} {
  func.func @graphormer_kernel(%arg0: i32, %arg1: memref<8x32xf32, #tpu.memory_space<vmem>>, %arg2: memref<1x4x8x8xf32, #tpu.memory_space<vmem>>, %arg3: memref<32x96xf32, #tpu.memory_space<vmem>>, %arg4: memref<1x96xf32, #tpu.memory_space<vmem>>, %arg5: memref<32x32xf32, #tpu.memory_space<vmem>>, %arg6: memref<32x64xf32, #tpu.memory_space<vmem>>, %arg7: memref<1x64xf32, #tpu.memory_space<vmem>>, %arg8: memref<64x32xf32, #tpu.memory_space<vmem>>, %arg9: memref<6x32xf32, #tpu.memory_space<vmem>>, %arg10: memref<8x32xf32, #tpu.memory_space<vmem>>) attributes {dimension_semantics = [#tpu.dimension_semantics<parallel>], iteration_bounds = array<i64: 2>, scalar_prefetch = 0 : i64, scratch_operands = 0 : i64, tpu.core_type = #tpu.core_type<tc>, window_params = [{transform_indices = @transform_0, window_bounds = array<i64: 8, 32>}, {transform_indices = @transform_1, window_bounds = array<i64: 1, 4, 8, 8>}, {pipeline_mode = #tpu.pipeline_mode<synchronous>, transform_indices = @transform_2, window_bounds = array<i64: 32, 96>}, {pipeline_mode = #tpu.pipeline_mode<synchronous>, transform_indices = @transform_3, window_bounds = array<i64: 1, 96>}, {pipeline_mode = #tpu.pipeline_mode<synchronous>, transform_indices = @transform_4, window_bounds = array<i64: 32, 32>}, {pipeline_mode = #tpu.pipeline_mode<synchronous>, transform_indices = @transform_5, window_bounds = array<i64: 32, 64>}, {pipeline_mode = #tpu.pipeline_mode<synchronous>, transform_indices = @transform_6, window_bounds = array<i64: 1, 64>}, {pipeline_mode = #tpu.pipeline_mode<synchronous>, transform_indices = @transform_7, window_bounds = array<i64: 64, 32>}, {pipeline_mode = #tpu.pipeline_mode<synchronous>, transform_indices = @transform_8, window_bounds = array<i64: 6, 32>}, {transform_indices = @transform_9, window_bounds = array<i64: 8, 32>}]} {
    %c0 = arith.constant 0 : index
    %c0_0 = arith.constant 0 : index
    %0 = vector.load %arg1[%c0, %c0_0] : memref<8x32xf32, #tpu.memory_space<vmem>>, vector<8x32xf32>
    %c0_1 = arith.constant 0 : index
    %c0_2 = arith.constant 0 : index
    %1 = vector.load %arg3[%c0_1, %c0_2] : memref<32x96xf32, #tpu.memory_space<vmem>>, vector<32x96xf32>
    %cst = arith.constant dense<0.000000e+00> : vector<8x96xf32>
    %2 = tpu.matmul %0, %1, %cst {dimension_numbers = #tpu.dot_dimension_numbers<[1], [0], [0], [1], [0, 0, 1, 1], [], []>} : vector<8x32xf32>, vector<32x96xf32>, vector<8x96xf32> -> vector<8x96xf32>
    %c0_3 = arith.constant 0 : index
    %c0_4 = arith.constant 0 : index
    %3 = vector.load %arg4[%c0_3, %c0_4] : memref<1x96xf32, #tpu.memory_space<vmem>>, vector<1x96xf32>
    %4 = vector.shape_cast %3 : vector<1x96xf32> to vector<96xf32>
    %5 = vector.shape_cast %4 : vector<96xf32> to vector<1x96xf32>
    %6 = vector.broadcast %5 : vector<1x96xf32> to vector<8x96xf32>
    %7 = arith.addf %2, %6 : vector<8x96xf32>
    %8 = vector.extract_strided_slice %7 {offsets = [0, 0], sizes = [8, 32], strides = [1, 1]} : vector<8x96xf32> to vector<8x32xf32>
    %cst_5 = arith.constant 0.353553385 : f32
    %9 = vector.broadcast %cst_5 : f32 to vector<8x32xf32>
    %10 = arith.mulf %8, %9 : vector<8x32xf32>
    %11 = vector.extract_strided_slice %7 {offsets = [0, 32], sizes = [8, 32], strides = [1, 1]} : vector<8x96xf32> to vector<8x32xf32>
    %12 = vector.extract_strided_slice %7 {offsets = [0, 64], sizes = [8, 32], strides = [1, 1]} : vector<8x96xf32> to vector<8x32xf32>
    %13 = vector.extract_strided_slice %10 {offsets = [0, 0], sizes = [8, 8], strides = [1, 1]} : vector<8x32xf32> to vector<8x8xf32>
    %14 = vector.extract_strided_slice %11 {offsets = [0, 0], sizes = [8, 8], strides = [1, 1]} : vector<8x32xf32> to vector<8x8xf32>
    %cst_6 = arith.constant dense<0.000000e+00> : vector<8x8xf32>
    %15 = tpu.matmul %13, %14, %cst_6 {dimension_numbers = #tpu.dot_dimension_numbers<[1], [1], [0], [0], [0, 0, 1, 0], [], []>} : vector<8x8xf32>, vector<8x8xf32>, vector<8x8xf32> -> vector<8x8xf32>
    %c0_7 = arith.constant 0 : index
    %c0_8 = arith.constant 0 : index
    %c0_9 = arith.constant 0 : index
    %c0_10 = arith.constant 0 : index
    %16 = vector.load %arg2[%c0_7, %c0_8, %c0_9, %c0_10] : memref<1x4x8x8xf32, #tpu.memory_space<vmem>>, vector<1x1x8x8xf32>
    %17 = vector.shape_cast %16 : vector<1x1x8x8xf32> to vector<8x8xf32>
    %18 = arith.addf %15, %17 : vector<8x8xf32>
    %cst_11 = arith.constant dense<0xFF800000> : vector<8xf32>
    %19 = vector.multi_reduction <maximumf>, %18, %cst_11 [1] : vector<8x8xf32> to vector<8xf32>
    %20 = vector.shape_cast %19 : vector<8xf32> to vector<8x1xf32>
    %21 = vector.broadcast %20 : vector<8x1xf32> to vector<8x8xf32>
    %22 = arith.subf %18, %21 : vector<8x8xf32>
    %23 = math.exp %22 : vector<8x8xf32>
    %cst_12 = arith.constant dense<0.000000e+00> : vector<8xf32>
    %24 = vector.multi_reduction <add>, %23, %cst_12 [1] : vector<8x8xf32> to vector<8xf32>
    %25 = vector.shape_cast %24 : vector<8xf32> to vector<8x1xf32>
    %26 = vector.broadcast %25 : vector<8x1xf32> to vector<8x8xf32>
    %27 = arith.divf %23, %26 : vector<8x8xf32>
    %28 = vector.extract_strided_slice %12 {offsets = [0, 0], sizes = [8, 8], strides = [1, 1]} : vector<8x32xf32> to vector<8x8xf32>
    %cst_13 = arith.constant dense<0.000000e+00> : vector<8x8xf32>
    %29 = tpu.matmul %27, %28, %cst_13 {dimension_numbers = #tpu.dot_dimension_numbers<[1], [0], [0], [1], [0, 0, 1, 1], [], []>} : vector<8x8xf32>, vector<8x8xf32>, vector<8x8xf32> -> vector<8x8xf32>
    %c0_14 = arith.constant 0 : index
    %c0_15 = arith.constant 0 : index
    %30 = vector.load %arg5[%c0_14, %c0_15] : memref<32x32xf32, #tpu.memory_space<vmem>>, vector<8x32xf32>
    %cst_16 = arith.constant dense<0.000000e+00> : vector<8x32xf32>
    %31 = tpu.matmul %29, %30, %cst_16 {dimension_numbers = #tpu.dot_dimension_numbers<[1], [0], [0], [1], [0, 0, 1, 1], [], []>} : vector<8x8xf32>, vector<8x32xf32>, vector<8x32xf32> -> vector<8x32xf32>
    %32 = vector.extract_strided_slice %10 {offsets = [0, 8], sizes = [8, 8], strides = [1, 1]} : vector<8x32xf32> to vector<8x8xf32>
    %33 = vector.extract_strided_slice %11 {offsets = [0, 8], sizes = [8, 8], strides = [1, 1]} : vector<8x32xf32> to vector<8x8xf32>
    %cst_17 = arith.constant dense<0.000000e+00> : vector<8x8xf32>
    %34 = tpu.matmul %32, %33, %cst_17 {dimension_numbers = #tpu.dot_dimension_numbers<[1], [1], [0], [0], [0, 0, 1, 0], [], []>} : vector<8x8xf32>, vector<8x8xf32>, vector<8x8xf32> -> vector<8x8xf32>
    %c0_18 = arith.constant 0 : index
    %c1 = arith.constant 1 : index
    %c0_19 = arith.constant 0 : index
    %c0_20 = arith.constant 0 : index
    %35 = vector.load %arg2[%c0_18, %c1, %c0_19, %c0_20] : memref<1x4x8x8xf32, #tpu.memory_space<vmem>>, vector<1x1x8x8xf32>
    %36 = vector.shape_cast %35 : vector<1x1x8x8xf32> to vector<8x8xf32>
    %37 = arith.addf %34, %36 : vector<8x8xf32>
    %cst_21 = arith.constant dense<0xFF800000> : vector<8xf32>
    %38 = vector.multi_reduction <maximumf>, %37, %cst_21 [1] : vector<8x8xf32> to vector<8xf32>
    %39 = vector.shape_cast %38 : vector<8xf32> to vector<8x1xf32>
    %40 = vector.broadcast %39 : vector<8x1xf32> to vector<8x8xf32>
    %41 = arith.subf %37, %40 : vector<8x8xf32>
    %42 = math.exp %41 : vector<8x8xf32>
    %cst_22 = arith.constant dense<0.000000e+00> : vector<8xf32>
    %43 = vector.multi_reduction <add>, %42, %cst_22 [1] : vector<8x8xf32> to vector<8xf32>
    %44 = vector.shape_cast %43 : vector<8xf32> to vector<8x1xf32>
    %45 = vector.broadcast %44 : vector<8x1xf32> to vector<8x8xf32>
    %46 = arith.divf %42, %45 : vector<8x8xf32>
    %47 = vector.extract_strided_slice %12 {offsets = [0, 8], sizes = [8, 8], strides = [1, 1]} : vector<8x32xf32> to vector<8x8xf32>
    %cst_23 = arith.constant dense<0.000000e+00> : vector<8x8xf32>
    %48 = tpu.matmul %46, %47, %cst_23 {dimension_numbers = #tpu.dot_dimension_numbers<[1], [0], [0], [1], [0, 0, 1, 1], [], []>} : vector<8x8xf32>, vector<8x8xf32>, vector<8x8xf32> -> vector<8x8xf32>
    %c8 = arith.constant 8 : index
    %c0_24 = arith.constant 0 : index
    %49 = vector.load %arg5[%c8, %c0_24] : memref<32x32xf32, #tpu.memory_space<vmem>>, vector<8x32xf32>
    %cst_25 = arith.constant dense<0.000000e+00> : vector<8x32xf32>
    %50 = tpu.matmul %48, %49, %cst_25 {dimension_numbers = #tpu.dot_dimension_numbers<[1], [0], [0], [1], [0, 0, 1, 1], [], []>} : vector<8x8xf32>, vector<8x32xf32>, vector<8x32xf32> -> vector<8x32xf32>
    %51 = arith.addf %31, %50 : vector<8x32xf32>
    %52 = vector.extract_strided_slice %10 {offsets = [0, 16], sizes = [8, 8], strides = [1, 1]} : vector<8x32xf32> to vector<8x8xf32>
    %53 = vector.extract_strided_slice %11 {offsets = [0, 16], sizes = [8, 8], strides = [1, 1]} : vector<8x32xf32> to vector<8x8xf32>
    %cst_26 = arith.constant dense<0.000000e+00> : vector<8x8xf32>
    %54 = tpu.matmul %52, %53, %cst_26 {dimension_numbers = #tpu.dot_dimension_numbers<[1], [1], [0], [0], [0, 0, 1, 0], [], []>} : vector<8x8xf32>, vector<8x8xf32>, vector<8x8xf32> -> vector<8x8xf32>
    %c0_27 = arith.constant 0 : index
    %c2 = arith.constant 2 : index
    %c0_28 = arith.constant 0 : index
    %c0_29 = arith.constant 0 : index
    %55 = vector.load %arg2[%c0_27, %c2, %c0_28, %c0_29] : memref<1x4x8x8xf32, #tpu.memory_space<vmem>>, vector<1x1x8x8xf32>
    %56 = vector.shape_cast %55 : vector<1x1x8x8xf32> to vector<8x8xf32>
    %57 = arith.addf %54, %56 : vector<8x8xf32>
    %cst_30 = arith.constant dense<0xFF800000> : vector<8xf32>
    %58 = vector.multi_reduction <maximumf>, %57, %cst_30 [1] : vector<8x8xf32> to vector<8xf32>
    %59 = vector.shape_cast %58 : vector<8xf32> to vector<8x1xf32>
    %60 = vector.broadcast %59 : vector<8x1xf32> to vector<8x8xf32>
    %61 = arith.subf %57, %60 : vector<8x8xf32>
    %62 = math.exp %61 : vector<8x8xf32>
    %cst_31 = arith.constant dense<0.000000e+00> : vector<8xf32>
    %63 = vector.multi_reduction <add>, %62, %cst_31 [1] : vector<8x8xf32> to vector<8xf32>
    %64 = vector.shape_cast %63 : vector<8xf32> to vector<8x1xf32>
    %65 = vector.broadcast %64 : vector<8x1xf32> to vector<8x8xf32>
    %66 = arith.divf %62, %65 : vector<8x8xf32>
    %67 = vector.extract_strided_slice %12 {offsets = [0, 16], sizes = [8, 8], strides = [1, 1]} : vector<8x32xf32> to vector<8x8xf32>
    %cst_32 = arith.constant dense<0.000000e+00> : vector<8x8xf32>
    %68 = tpu.matmul %66, %67, %cst_32 {dimension_numbers = #tpu.dot_dimension_numbers<[1], [0], [0], [1], [0, 0, 1, 1], [], []>} : vector<8x8xf32>, vector<8x8xf32>, vector<8x8xf32> -> vector<8x8xf32>
    %c16 = arith.constant 16 : index
    %c0_33 = arith.constant 0 : index
    %69 = vector.load %arg5[%c16, %c0_33] : memref<32x32xf32, #tpu.memory_space<vmem>>, vector<8x32xf32>
    %cst_34 = arith.constant dense<0.000000e+00> : vector<8x32xf32>
    %70 = tpu.matmul %68, %69, %cst_34 {dimension_numbers = #tpu.dot_dimension_numbers<[1], [0], [0], [1], [0, 0, 1, 1], [], []>} : vector<8x8xf32>, vector<8x32xf32>, vector<8x32xf32> -> vector<8x32xf32>
    %71 = arith.addf %51, %70 : vector<8x32xf32>
    %72 = vector.extract_strided_slice %10 {offsets = [0, 24], sizes = [8, 8], strides = [1, 1]} : vector<8x32xf32> to vector<8x8xf32>
    %73 = vector.extract_strided_slice %11 {offsets = [0, 24], sizes = [8, 8], strides = [1, 1]} : vector<8x32xf32> to vector<8x8xf32>
    %cst_35 = arith.constant dense<0.000000e+00> : vector<8x8xf32>
    %74 = tpu.matmul %72, %73, %cst_35 {dimension_numbers = #tpu.dot_dimension_numbers<[1], [1], [0], [0], [0, 0, 1, 0], [], []>} : vector<8x8xf32>, vector<8x8xf32>, vector<8x8xf32> -> vector<8x8xf32>
    %c0_36 = arith.constant 0 : index
    %c3 = arith.constant 3 : index
    %c0_37 = arith.constant 0 : index
    %c0_38 = arith.constant 0 : index
    %75 = vector.load %arg2[%c0_36, %c3, %c0_37, %c0_38] : memref<1x4x8x8xf32, #tpu.memory_space<vmem>>, vector<1x1x8x8xf32>
    %76 = vector.shape_cast %75 : vector<1x1x8x8xf32> to vector<8x8xf32>
    %77 = arith.addf %74, %76 : vector<8x8xf32>
    %cst_39 = arith.constant dense<0xFF800000> : vector<8xf32>
    %78 = vector.multi_reduction <maximumf>, %77, %cst_39 [1] : vector<8x8xf32> to vector<8xf32>
    %79 = vector.shape_cast %78 : vector<8xf32> to vector<8x1xf32>
    %80 = vector.broadcast %79 : vector<8x1xf32> to vector<8x8xf32>
    %81 = arith.subf %77, %80 : vector<8x8xf32>
    %82 = math.exp %81 : vector<8x8xf32>
    %cst_40 = arith.constant dense<0.000000e+00> : vector<8xf32>
    %83 = vector.multi_reduction <add>, %82, %cst_40 [1] : vector<8x8xf32> to vector<8xf32>
    %84 = vector.shape_cast %83 : vector<8xf32> to vector<8x1xf32>
    %85 = vector.broadcast %84 : vector<8x1xf32> to vector<8x8xf32>
    %86 = arith.divf %82, %85 : vector<8x8xf32>
    %87 = vector.extract_strided_slice %12 {offsets = [0, 24], sizes = [8, 8], strides = [1, 1]} : vector<8x32xf32> to vector<8x8xf32>
    %cst_41 = arith.constant dense<0.000000e+00> : vector<8x8xf32>
    %88 = tpu.matmul %86, %87, %cst_41 {dimension_numbers = #tpu.dot_dimension_numbers<[1], [0], [0], [1], [0, 0, 1, 1], [], []>} : vector<8x8xf32>, vector<8x8xf32>, vector<8x8xf32> -> vector<8x8xf32>
    %c24 = arith.constant 24 : index
    %c0_42 = arith.constant 0 : index
    %89 = vector.load %arg5[%c24, %c0_42] : memref<32x32xf32, #tpu.memory_space<vmem>>, vector<8x32xf32>
    %cst_43 = arith.constant dense<0.000000e+00> : vector<8x32xf32>
    %90 = tpu.matmul %88, %89, %cst_43 {dimension_numbers = #tpu.dot_dimension_numbers<[1], [0], [0], [1], [0, 0, 1, 1], [], []>} : vector<8x8xf32>, vector<8x32xf32>, vector<8x32xf32> -> vector<8x32xf32>
    %91 = arith.addf %71, %90 : vector<8x32xf32>
    %c0_44 = arith.constant 0 : index
    %c0_45 = arith.constant 0 : index
    %92 = vector.load %arg9[%c0_44, %c0_45] : memref<6x32xf32, #tpu.memory_space<vmem>>, vector<1x32xf32>
    %93 = vector.shape_cast %92 : vector<1x32xf32> to vector<32xf32>
    %94 = vector.shape_cast %93 : vector<32xf32> to vector<1x32xf32>
    %95 = vector.broadcast %94 : vector<1x32xf32> to vector<8x32xf32>
    %96 = arith.addf %91, %95 : vector<8x32xf32>
    %97 = arith.addf %0, %96 : vector<8x32xf32>
    %cst_46 = arith.constant dense<0.000000e+00> : vector<8xf32>
    %98 = vector.multi_reduction <add>, %97, %cst_46 [1] : vector<8x32xf32> to vector<8xf32>
    %99 = vector.shape_cast %98 : vector<8xf32> to vector<8x1xf32>
    %cst_47 = arith.constant 3.200000e+01 : f32
    %100 = vector.broadcast %cst_47 : f32 to vector<8x1xf32>
    %101 = arith.divf %99, %100 : vector<8x1xf32>
    %102 = vector.broadcast %101 : vector<8x1xf32> to vector<8x32xf32>
    %103 = arith.subf %97, %102 : vector<8x32xf32>
    %104 = arith.mulf %103, %103 : vector<8x32xf32>
    %cst_48 = arith.constant dense<0.000000e+00> : vector<8xf32>
    %105 = vector.multi_reduction <add>, %104, %cst_48 [1] : vector<8x32xf32> to vector<8xf32>
    %106 = vector.shape_cast %105 : vector<8xf32> to vector<8x1xf32>
    %cst_49 = arith.constant 3.200000e+01 : f32
    %107 = vector.broadcast %cst_49 : f32 to vector<8x1xf32>
    %108 = arith.divf %106, %107 : vector<8x1xf32>
    %109 = vector.broadcast %101 : vector<8x1xf32> to vector<8x32xf32>
    %110 = arith.subf %97, %109 : vector<8x32xf32>
    %cst_50 = arith.constant 9.99999974E-6 : f32
    %111 = vector.broadcast %cst_50 : f32 to vector<8x1xf32>
    %112 = arith.addf %108, %111 : vector<8x1xf32>
    %113 = math.rsqrt %112 : vector<8x1xf32>
    %114 = vector.broadcast %113 : vector<8x1xf32> to vector<8x32xf32>
    %115 = arith.mulf %110, %114 : vector<8x32xf32>
    %c2_51 = arith.constant 2 : index
    %c0_52 = arith.constant 0 : index
    %116 = vector.load %arg9[%c2_51, %c0_52] : memref<6x32xf32, #tpu.memory_space<vmem>>, vector<1x32xf32>
    %117 = vector.shape_cast %116 : vector<1x32xf32> to vector<32xf32>
    %118 = vector.shape_cast %117 : vector<32xf32> to vector<1x32xf32>
    %119 = vector.broadcast %118 : vector<1x32xf32> to vector<8x32xf32>
    %120 = arith.mulf %115, %119 : vector<8x32xf32>
    %c3_53 = arith.constant 3 : index
    %c0_54 = arith.constant 0 : index
    %121 = vector.load %arg9[%c3_53, %c0_54] : memref<6x32xf32, #tpu.memory_space<vmem>>, vector<1x32xf32>
    %122 = vector.shape_cast %121 : vector<1x32xf32> to vector<32xf32>
    %123 = vector.shape_cast %122 : vector<32xf32> to vector<1x32xf32>
    %124 = vector.broadcast %123 : vector<1x32xf32> to vector<8x32xf32>
    %125 = arith.addf %120, %124 : vector<8x32xf32>
    %c0_55 = arith.constant 0 : index
    %c0_56 = arith.constant 0 : index
    %126 = vector.load %arg6[%c0_55, %c0_56] : memref<32x64xf32, #tpu.memory_space<vmem>>, vector<32x64xf32>
    %cst_57 = arith.constant dense<0.000000e+00> : vector<8x64xf32>
    %127 = tpu.matmul %125, %126, %cst_57 {dimension_numbers = #tpu.dot_dimension_numbers<[1], [0], [0], [1], [0, 0, 1, 1], [], []>} : vector<8x32xf32>, vector<32x64xf32>, vector<8x64xf32> -> vector<8x64xf32>
    %c0_58 = arith.constant 0 : index
    %c0_59 = arith.constant 0 : index
    %128 = vector.load %arg7[%c0_58, %c0_59] : memref<1x64xf32, #tpu.memory_space<vmem>>, vector<1x64xf32>
    %129 = vector.shape_cast %128 : vector<1x64xf32> to vector<64xf32>
    %130 = vector.shape_cast %129 : vector<64xf32> to vector<1x64xf32>
    %131 = vector.broadcast %130 : vector<1x64xf32> to vector<8x64xf32>
    %132 = arith.addf %127, %131 : vector<8x64xf32>
    %cst_60 = arith.constant 0.000000e+00 : f32
    %133 = vector.broadcast %cst_60 : f32 to vector<8x64xf32>
    %134 = arith.maximumf %132, %133 : vector<8x64xf32>
    %c0_61 = arith.constant 0 : index
    %c0_62 = arith.constant 0 : index
    %135 = vector.load %arg8[%c0_61, %c0_62] : memref<64x32xf32, #tpu.memory_space<vmem>>, vector<64x32xf32>
    %cst_63 = arith.constant dense<0.000000e+00> : vector<8x32xf32>
    %136 = tpu.matmul %134, %135, %cst_63 {dimension_numbers = #tpu.dot_dimension_numbers<[1], [0], [0], [1], [0, 0, 1, 1], [], []>} : vector<8x64xf32>, vector<64x32xf32>, vector<8x32xf32> -> vector<8x32xf32>
    %c1_64 = arith.constant 1 : index
    %c0_65 = arith.constant 0 : index
    %137 = vector.load %arg9[%c1_64, %c0_65] : memref<6x32xf32, #tpu.memory_space<vmem>>, vector<1x32xf32>
    %138 = vector.shape_cast %137 : vector<1x32xf32> to vector<32xf32>
    %139 = vector.shape_cast %138 : vector<32xf32> to vector<1x32xf32>
    %140 = vector.broadcast %139 : vector<1x32xf32> to vector<8x32xf32>
    %141 = arith.addf %136, %140 : vector<8x32xf32>
    %142 = arith.addf %125, %141 : vector<8x32xf32>
    %cst_66 = arith.constant dense<0.000000e+00> : vector<8xf32>
    %143 = vector.multi_reduction <add>, %142, %cst_66 [1] : vector<8x32xf32> to vector<8xf32>
    %144 = vector.shape_cast %143 : vector<8xf32> to vector<8x1xf32>
    %cst_67 = arith.constant 3.200000e+01 : f32
    %145 = vector.broadcast %cst_67 : f32 to vector<8x1xf32>
    %146 = arith.divf %144, %145 : vector<8x1xf32>
    %147 = vector.broadcast %146 : vector<8x1xf32> to vector<8x32xf32>
    %148 = arith.subf %142, %147 : vector<8x32xf32>
    %149 = arith.mulf %148, %148 : vector<8x32xf32>
    %cst_68 = arith.constant dense<0.000000e+00> : vector<8xf32>
    %150 = vector.multi_reduction <add>, %149, %cst_68 [1] : vector<8x32xf32> to vector<8xf32>
    %151 = vector.shape_cast %150 : vector<8xf32> to vector<8x1xf32>
    %cst_69 = arith.constant 3.200000e+01 : f32
    %152 = vector.broadcast %cst_69 : f32 to vector<8x1xf32>
    %153 = arith.divf %151, %152 : vector<8x1xf32>
    %154 = vector.broadcast %146 : vector<8x1xf32> to vector<8x32xf32>
    %155 = arith.subf %142, %154 : vector<8x32xf32>
    %cst_70 = arith.constant 9.99999974E-6 : f32
    %156 = vector.broadcast %cst_70 : f32 to vector<8x1xf32>
    %157 = arith.addf %153, %156 : vector<8x1xf32>
    %158 = math.rsqrt %157 : vector<8x1xf32>
    %159 = vector.broadcast %158 : vector<8x1xf32> to vector<8x32xf32>
    %160 = arith.mulf %155, %159 : vector<8x32xf32>
    %c4 = arith.constant 4 : index
    %c0_71 = arith.constant 0 : index
    %161 = vector.load %arg9[%c4, %c0_71] : memref<6x32xf32, #tpu.memory_space<vmem>>, vector<1x32xf32>
    %162 = vector.shape_cast %161 : vector<1x32xf32> to vector<32xf32>
    %163 = vector.shape_cast %162 : vector<32xf32> to vector<1x32xf32>
    %164 = vector.broadcast %163 : vector<1x32xf32> to vector<8x32xf32>
    %165 = arith.mulf %160, %164 : vector<8x32xf32>
    %c5 = arith.constant 5 : index
    %c0_72 = arith.constant 0 : index
    %166 = vector.load %arg9[%c5, %c0_72] : memref<6x32xf32, #tpu.memory_space<vmem>>, vector<1x32xf32>
    %167 = vector.shape_cast %166 : vector<1x32xf32> to vector<32xf32>
    %168 = vector.shape_cast %167 : vector<32xf32> to vector<1x32xf32>
    %169 = vector.broadcast %168 : vector<1x32xf32> to vector<8x32xf32>
    %170 = arith.addf %165, %169 : vector<8x32xf32>
    %c0_73 = arith.constant 0 : index
    %c0_74 = arith.constant 0 : index
    %171 = vector.load %arg10[%c0_73, %c0_74] : memref<8x32xf32, #tpu.memory_space<vmem>>, vector<8x32xf32>
    tpu.vector_store %arg10[%c0_73, %c0_74], %170 {strides = array<i32>} : memref<8x32xf32, #tpu.memory_space<vmem>>, vector<8x32xf32>,
    return
  }
  func.func @transform_0(%arg0: i32) -> (i32, i32) {
    %c0_i32 = arith.constant 0 : i32
    %c0_i32_0 = arith.constant 0 : i32
    return %arg0, %c0_i32 : i32, i32
  }
  func.func @transform_1(%arg0: i32) -> (i32, i32, i32, i32) {
    %c0_i32 = arith.constant 0 : i32
    %c0_i32_0 = arith.constant 0 : i32
    %c0_i32_1 = arith.constant 0 : i32
    %c0_i32_2 = arith.constant 0 : i32
    return %arg0, %c0_i32, %c0_i32_0, %c0_i32_1 : i32, i32, i32, i32
  }
  func.func @transform_2(%arg0: i32) -> (i32, i32) {
    %c0_i32 = arith.constant 0 : i32
    %c0_i32_0 = arith.constant 0 : i32
    %c0_i32_1 = arith.constant 0 : i32
    return %c0_i32, %c0_i32_0 : i32, i32
  }
  func.func @transform_3(%arg0: i32) -> (i32, i32) {
    %c0_i32 = arith.constant 0 : i32
    %c0_i32_0 = arith.constant 0 : i32
    %c0_i32_1 = arith.constant 0 : i32
    return %c0_i32, %c0_i32_0 : i32, i32
  }
  func.func @transform_4(%arg0: i32) -> (i32, i32) {
    %c0_i32 = arith.constant 0 : i32
    %c0_i32_0 = arith.constant 0 : i32
    %c0_i32_1 = arith.constant 0 : i32
    return %c0_i32, %c0_i32_0 : i32, i32
  }
  func.func @transform_5(%arg0: i32) -> (i32, i32) {
    %c0_i32 = arith.constant 0 : i32
    %c0_i32_0 = arith.constant 0 : i32
    %c0_i32_1 = arith.constant 0 : i32
    return %c0_i32, %c0_i32_0 : i32, i32
  }
  func.func @transform_6(%arg0: i32) -> (i32, i32) {
    %c0_i32 = arith.constant 0 : i32
    %c0_i32_0 = arith.constant 0 : i32
    %c0_i32_1 = arith.constant 0 : i32
    return %c0_i32, %c0_i32_0 : i32, i32
  }
  func.func @transform_7(%arg0: i32) -> (i32, i32) {
    %c0_i32 = arith.constant 0 : i32
    %c0_i32_0 = arith.constant 0 : i32
    %c0_i32_1 = arith.constant 0 : i32
    return %c0_i32, %c0_i32_0 : i32, i32
  }
  func.func @transform_8(%arg0: i32) -> (i32, i32) {
    %c0_i32 = arith.constant 0 : i32
    %c0_i32_0 = arith.constant 0 : i32
    %c0_i32_1 = arith.constant 0 : i32
    return %c0_i32, %c0_i32_0 : i32, i32
  }
  func.func @transform_9(%arg0: i32) -> (i32, i32) {
    %c0_i32 = arith.constant 0 : i32
    %c0_i32_0 = arith.constant 0 : i32
    return %arg0, %c0_i32 : i32, i32
  }
}

</mosaic_0001>

<llo_original>
// kernel: tpu_custom_call.1
$region0: #{tpu_custom_call.1}
  #allocation0 [shape = 'u32[]', space=smem, size = 0x4, offset = 0x4, fixed_abs, tag = 'smem constant byte address 0x4 - core index']
  #allocation1 [shape = 'u32[144,128]{1,0:T(1,128)}', space=vmem, size = 0x12000, scoped, tag = 'internal scratch']
  %s0 = inlined_call_operand.hbm [shape: f32[16,32], index: 0, kind: input, shape index: {}]
  %s1 = inlined_call_operand.vmem [shape: f32[2,4,8,8], index: 1, kind: input, shape index: {}]
  %s2 = inlined_call_operand.vmem [shape: f32[32,96], index: 2, kind: input, shape index: {}]
  %s3 = inlined_call_operand.vmem [shape: f32[1,96], index: 3, kind: input, shape index: {}]
  %s4 = inlined_call_operand.hbm [shape: f32[32,32], index: 4, kind: input, shape index: {}]
  %s5 = inlined_call_operand.hbm [shape: f32[32,64], index: 5, kind: input, shape index: {}]
  %s6 = inlined_call_operand.vmem [shape: f32[1,64], index: 6, kind: input, shape index: {}]
  %s7 = inlined_call_operand.vmem [shape: f32[64,32], index: 7, kind: input, shape index: {}]
  %s8 = inlined_call_operand.vmem [shape: f32[6,32], index: 8, kind: input, shape index: {}]
  %s9 = inlined_call_operand.hbm [shape: f32[16,32], index: 9, kind: output, shape index: {}]
  %s10 = sld [smem:[#allocation0]]
  $region81: #{tpu_custom_call.1} parent=0
    _
  %s12 = ssub.s32 1, %s10
  %s13 = scalar_select 0, %s12, %s10
  $region1: #{tpu_custom_call.1} parent=0
    #allocation2 [shape = 'u8[8192]{0}', space=vmem, size = 0x2000, scoped, tag = 'input window, operand 0']
    #allocation3 [shape = 's32[2]{0}', space=sflag, size = 0x8, scoped, tag = 'scoped memory for tpu_custom_call.1']
    #allocation4 [shape = 's32[2]{0}', space=sflag, size = 0x8, scoped, tag = 'scoped memory for tpu_custom_call.1']
    #allocation5 [shape = 'u8[16384]{0}', space=vmem, size = 0x4000, scoped, tag = 'input window, operand 4, single buffered']
    #allocation6 [shape = 's32[1]{0}', space=sflag, size = 0x4, scoped, tag = 'scoped memory for tpu_custom_call.1']
    #allocation7 [shape = 'u8[16384]{0}', space=vmem, size = 0x4000, scoped, tag = 'input window, operand 5, single buffered']
    #allocation8 [shape = 'u8[8192]{0}', space=vmem, size = 0x2000, scoped, tag = 'output window, operand 0']
    %14 = vsyncpa [#allocation3], 0
    %s15 = scalar_lea.sflag [#allocation3], 1
    %16 = vsyncpa %s15, 0
    %17 = vsyncpa [#allocation6], 0
    %18 = vsyncpa [#allocation4], 0
    %s19 = scalar_lea.sflag [#allocation4], 1
    %20 = vsyncpa %s19, 0
    loop: start=0, step=1, limit=4
    $region2: #{tpu_custom_call.1} parent=1 // loop_pre_header
      _
    $region3: #{tpu_custom_call.1} parent=1 // loop_header
      %s22 = sphi 0, %s26
      %p23 = scmp.ge.s32.totalorder %s22, 4
      %s32 = sphi 0, %s34
      %s35 = sphi 0, %s32
      %s36 = sphi 0, %s35
      %s52 = sphi 0, %s36
      %s58 = sphi 0, %s60
      %s61 = sphi 0, %s58
      %s62 = sphi 0, %s61
      %s78 = sphi 0, %s62
      %s82 = sphi 0, %s82
      %s84 = sphi 0, %s82
      %s85 = sphi 0, %s84
      %s99 = sphi 0, %s85
      %s103 = sphi 0, %s103
      %s105 = sphi 0, %s103
      %s106 = sphi 0, %s105
      %s120 = sphi 0, %s106
      %s124 = sphi 0, %s124
      %s126 = sphi 0, %s124
      %s127 = sphi 0, %s126
      %s141 = sphi 0, %s127
      %s145 = sphi 0, %s145
      %s147 = sphi 0, %s145
      %s148 = sphi 0, %s147
      %s162 = sphi 0, %s148
      %s166 = sphi 0, %s166
      %s168 = sphi 0, %s166
      %s169 = sphi 0, %s168
      %s183 = sphi 0, %s169
      %s187 = sphi 0, %s187
      %s189 = sphi 0, %s187
      %s190 = sphi 0, %s189
      %s204 = sphi 0, %s190
      %s208 = sphi 0, %s208
      %s210 = sphi 0, %s208
      %s211 = sphi 0, %s210
      %s225 = sphi 0, %s211
      %s231 = sphi 0, %s233
      %s234 = sphi 0, %s231
      %s235 = sphi 0, %s234
      %s251 = sphi 0, %s235
    $region4: #{tpu_custom_call.1} parent=1 // loop_header_branch
      %25 = sbr.rel (%p23) target = $region8
    $region5: #{tpu_custom_call.1} parent=1 // loop_body
      %s27 = ssub.s32 %s22, 1
      %s28 = ssub.s32 %s22, 2
      %s29 = sadd.s32 %s22, 1
      %s30 = ssub.s32 %s22, %s29
      %p31 = scmp.eq.s32.totalorder %s30, 0
      %s33 = sadd.s32 %s32, 1
      %s34 = scalar_select %p31, %s32, %s33
      %p37 = pneg %p31
      %p38 = scmp.eq.s32.totalorder %s22, 1
      %p39 = por %p37, %p38
      %p40 = scmp.ne.s32.totalorder %s32, %s35
      %p41 = scmp.eq.s32.totalorder %s22, 0
      %p42 = por %p40, %p41
      %p43 = scmp.ne.s32.totalorder %s32, %s35
      %p44 = scmp.eq.s32.totalorder %s27, 1
      %p45 = por %p43, %p44
      %p46 = scmp.ne.s32.totalorder %s35, %s36
      %p47 = scmp.eq.s32.totalorder %s27, 0
      %p48 = por %p46, %p47
      %p49 = scmp.ne.s32.totalorder %s35, %s36
      %p50 = scmp.eq.s32.totalorder %s28, 1
      %p51 = por %p49, %p50
      %p53 = scmp.ne.s32.totalorder %s36, %s52
      %p54 = scmp.eq.s32.totalorder %s28, 0
      %p55 = por %p53, %p54
      %s56 = ssub.s32 %s22, %s29
      %p57 = scmp.eq.s32.totalorder %s56, 0
      %s59 = sadd.s32 %s58, 1
      %s60 = scalar_select %p57, %s58, %s59
      %p63 = pneg %p57
      %p64 = scmp.eq.s32.totalorder %s22, 1
      %p65 = por %p63, %p64
      %p66 = scmp.ne.s32.totalorder %s58, %s61
      %p67 = scmp.eq.s32.totalorder %s22, 0
      %p68 = por %p66, %p67
      %p69 = scmp.ne.s32.totalorder %s58, %s61
      %p70 = scmp.eq.s32.totalorder %s27, 1
      %p71 = por %p69, %p70
      %p72 = scmp.ne.s32.totalorder %s61, %s62
      %p73 = scmp.eq.s32.totalorder %s27, 0
      %p74 = por %p72, %p73
      %p75 = scmp.ne.s32.totalorder %s61, %s62
      %p76 = scmp.eq.s32.totalorder %s28, 1
      %p77 = por %p75, %p76
      %p79 = scmp.ne.s32.totalorder %s62, %s78
      %p80 = scmp.eq.s32.totalorder %s28, 0
      %p81 = por %p79, %p80
      %s83 = sadd.s32 %s82, 1
      %p86 = scmp.eq.s32.totalorder %s22, 1
      %p87 = scmp.ne.s32.totalorder %s82, %s84
      %p88 = scmp.eq.s32.totalorder %s22, 0
      %p89 = por %p87, %p88
      %p90 = scmp.ne.s32.totalorder %s82, %s84
      %p91 = scmp.eq.s32.totalorder %s27, 1
      %p92 = por %p90, %p91
      %p93 = scmp.ne.s32.totalorder %s84, %s85
      %p94 = scmp.eq.s32.totalorder %s27, 0
      %p95 = por %p93, %p94
      %p96 = scmp.ne.s32.totalorder %s84, %s85
      %p97 = scmp.eq.s32.totalorder %s28, 1
      %p98 = por %p96, %p97
      %p100 = scmp.ne.s32.totalorder %s85, %s99
      %p101 = scmp.eq.s32.totalorder %s28, 0
      %p102 = por %p100, %p101
      %s104 = sadd.s32 %s103, 1
      %p107 = scmp.eq.s32.totalorder %s22, 1
      %p108 = scmp.ne.s32.totalorder %s103, %s105
      %p109 = scmp.eq.s32.totalorder %s22, 0
      %p110 = por %p108, %p109
      %p111 = scmp.ne.s32.totalorder %s103, %s105
      %p112 = scmp.eq.s32.totalorder %s27, 1
      %p113 = por %p111, %p112
      %p114 = scmp.ne.s32.totalorder %s105, %s106
      %p115 = scmp.eq.s32.totalorder %s27, 0
      %p116 = por %p114, %p115
      %p117 = scmp.ne.s32.totalorder %s105, %s106
      %p118 = scmp.eq.s32.totalorder %s28, 1
      %p119 = por %p117, %p118
      %p121 = scmp.ne.s32.totalorder %s106, %s120
      %p122 = scmp.eq.s32.totalorder %s28, 0
      %p123 = por %p121, %p122
      %s125 = sadd.s32 %s124, 1
      %p128 = scmp.eq.s32.totalorder %s22, 1
      %p129 = scmp.ne.s32.totalorder %s124, %s126
      %p130 = scmp.eq.s32.totalorder %s22, 0
      %p131 = por %p129, %p130
      %p132 = scmp.ne.s32.totalorder %s124, %s126
      %p133 = scmp.eq.s32.totalorder %s27, 1
      %p134 = por %p132, %p133
      %p135 = scmp.ne.s32.totalorder %s126, %s127
      %p136 = scmp.eq.s32.totalorder %s27, 0
      %p137 = por %p135, %p136
      %p138 = scmp.ne.s32.totalorder %s126, %s127
      %p139 = scmp.eq.s32.totalorder %s28, 1
      %p140 = por %p138, %p139
      %p142 = scmp.ne.s32.totalorder %s127, %s141
      %p143 = scmp.eq.s32.totalorder %s28, 0
      %p144 = por %p142, %p143
      %s146 = sadd.s32 %s145, 1
      %p149 = scmp.eq.s32.totalorder %s22, 1
      %p150 = scmp.ne.s32.totalorder %s145, %s147
      %p151 = scmp.eq.s32.totalorder %s22, 0
      %p152 = por %p150, %p151
      %p153 = scmp.ne.s32.totalorder %s145, %s147
      %p154 = scmp.eq.s32.totalorder %s27, 1
      %p155 = por %p153, %p154
      %p156 = scmp.ne.s32.totalorder %s147, %s148
      %p157 = scmp.eq.s32.totalorder %s27, 0
      %p158 = por %p156, %p157
      %p159 = scmp.ne.s32.totalorder %s147, %s148
      %p160 = scmp.eq.s32.totalorder %s28, 1
      %p161 = por %p159, %p160
      %p163 = scmp.ne.s32.totalorder %s148, %s162
      %p164 = scmp.eq.s32.totalorder %s28, 0
      %p165 = por %p163, %p164
      %s167 = sadd.s32 %s166, 1
      %p170 = scmp.eq.s32.totalorder %s22, 1
      %p171 = scmp.ne.s32.totalorder %s166, %s168
      %p172 = scmp.eq.s32.totalorder %s22, 0
      %p173 = por %p171, %p172
      %p174 = scmp.ne.s32.totalorder %s166, %s168
      %p175 = scmp.eq.s32.totalorder %s27, 1
      %p176 = por %p174, %p175
      %p177 = scmp.ne.s32.totalorder %s168, %s169
      %p178 = scmp.eq.s32.totalorder %s27, 0
      %p179 = por %p177, %p178
      %p180 = scmp.ne.s32.totalorder %s168, %s169
      %p181 = scmp.eq.s32.totalorder %s28, 1
      %p182 = por %p180, %p181
      %p184 = scmp.ne.s32.totalorder %s169, %s183
      %p185 = scmp.eq.s32.totalorder %s28, 0
      %p186 = por %p184, %p185
      %s188 = sadd.s32 %s187, 1
      %p191 = scmp.eq.s32.totalorder %s22, 1
      %p192 = scmp.ne.s32.totalorder %s187, %s189
      %p193 = scmp.eq.s32.totalorder %s22, 0
      %p194 = por %p192, %p193
      %p195 = scmp.ne.s32.totalorder %s187, %s189
      %p196 = scmp.eq.s32.totalorder %s27, 1
      %p197 = por %p195, %p196
      %p198 = scmp.ne.s32.totalorder %s189, %s190
      %p199 = scmp.eq.s32.totalorder %s27, 0
      %p200 = por %p198, %p199
      %p201 = scmp.ne.s32.totalorder %s189, %s190
      %p202 = scmp.eq.s32.totalorder %s28, 1
      %p203 = por %p201, %p202
      %p205 = scmp.ne.s32.totalorder %s190, %s204
      %p206 = scmp.eq.s32.totalorder %s28, 0
      %p207 = por %p205, %p206
      %s209 = sadd.s32 %s208, 1
      %p212 = scmp.eq.s32.totalorder %s22, 1
      %p213 = scmp.ne.s32.totalorder %s208, %s210
      %p214 = scmp.eq.s32.totalorder %s22, 0
      %p215 = por %p213, %p214
      %p216 = scmp.ne.s32.totalorder %s208, %s210
      %p217 = scmp.eq.s32.totalorder %s27, 1
      %p218 = por %p216, %p217
      %p219 = scmp.ne.s32.totalorder %s210, %s211
      %p220 = scmp.eq.s32.totalorder %s27, 0
      %p221 = por %p219, %p220
      %p222 = scmp.ne.s32.totalorder %s210, %s211
      %p223 = scmp.eq.s32.totalorder %s28, 1
      %p224 = por %p222, %p223
      %p226 = scmp.ne.s32.totalorder %s211, %s225
      %p227 = scmp.eq.s32.totalorder %s28, 0
      %p228 = por %p226, %p227
      %s229 = ssub.s32 %s22, %s29
      %p230 = scmp.eq.s32.totalorder %s229, 0
      %s232 = sadd.s32 %s231, 1
      %s233 = scalar_select %p230, %s231, %s232
      %p236 = pneg %p230
      %p237 = scmp.eq.s32.totalorder %s22, 1
      %p238 = por %p236, %p237
      %p239 = scmp.ne.s32.totalorder %s231, %s234
      %p240 = scmp.eq.s32.totalorder %s22, 0
      %p241 = por %p239, %p240
      %p242 = scmp.ne.s32.totalorder %s231, %s234
      %p243 = scmp.eq.s32.totalorder %s27, 1
      %p244 = por %p242, %p243
      %p245 = scmp.ne.s32.totalorder %s234, %s235
      %p246 = scmp.eq.s32.totalorder %s27, 0
      %p247 = por %p245, %p246
      %p248 = scmp.ne.s32.totalorder %s234, %s235
      %p249 = scmp.eq.s32.totalorder %s28, 1
      %p250 = por %p248, %p249
      %p252 = scmp.ne.s32.totalorder %s235, %s251
      %p253 = scmp.eq.s32.totalorder %s28, 0
      %p254 = por %p252, %p253
      %p255 = scmp.le.s32.totalorder 1, %s22
      %p256 = scmp.lt.s32.totalorder %s22, 3
      %p257 = pnand %p255, %p256
      %p258 = pneg %p257
      // Predicated region
      $region9: #{tpu_custom_call.1} parent=5 // pred_check
        _
      $region10: #{tpu_custom_call.1} parent=5 // pred_check_branch
        %260 = sbr.rel (%p257) target = $region12
      $region11: #{tpu_custom_call.1} parent=5 // pred_region
        %s261 = ssub.s32 %s22, 1
        // Predicated region
        $region13: #{tpu_custom_call.1} parent=11 // pred_check
          %p262 = pneg %p95
        $region14: #{tpu_custom_call.1} parent=11 // pred_check_branch
          %264 = sbr.rel (%p262) target = $region16
        $region15: #{tpu_custom_call.1} parent=11 // pred_region
          _
        $region16: #{tpu_custom_call.1} parent=11 // pred_fallthru
          _
        // Predicated region
        $region17: #{tpu_custom_call.1} parent=11 // pred_check
          %p265 = pneg %p116
        $region18: #{tpu_custom_call.1} parent=11 // pred_check_branch
          %267 = sbr.rel (%p265) target = $region20
        $region19: #{tpu_custom_call.1} parent=11 // pred_region
          _
        $region20: #{tpu_custom_call.1} parent=11 // pred_fallthru
          _
        // Predicated region
        $region21: #{tpu_custom_call.1} parent=11 // pred_check
          %p268 = pneg %p137
        $region22: #{tpu_custom_call.1} parent=11 // pred_check_branch
          %270 = sbr.rel (%p268) target = $region24
        $region23: #{tpu_custom_call.1} parent=11 // pred_region
          %s272 = ssub.s32 512, 512
          %273 = vsyncadd [#allocation6], %s272
          %s274 = sshll.u32 [#allocation5], 4
          %s275 = int_to_ptr.vmem [resolvable:$true] %s274
          %280 = dma.hbm_to_vmem [thread:$0]  %s4, 512, %s275, [#allocation6], 128, 128, 8
        $region24: #{tpu_custom_call.1} parent=11 // pred_fallthru
          _
        // Predicated region
        $region25: #{tpu_custom_call.1} parent=11 // pred_check
          %p281 = pneg %p158
        $region26: #{tpu_custom_call.1} parent=11 // pred_check_branch
          %283 = sbr.rel (%p281) target = $region28
        $region27: #{tpu_custom_call.1} parent=11 // pred_region
          %s285 = ssub.s32 512, 512
          %286 = vsyncadd [#allocation6], %s285
          %s287 = sshll.u32 [#allocation7], 4
          %s288 = int_to_ptr.vmem [resolvable:$true] %s287
          %293 = dma.hbm_to_vmem [thread:$0]  %s5, 512, %s288, [#allocation6], 128, 128, 8
        $region28: #{tpu_custom_call.1} parent=11 // pred_fallthru
          _
        // Predicated region
        $region29: #{tpu_custom_call.1} parent=11 // pred_check
          %p294 = pneg %p179
        $region30: #{tpu_custom_call.1} parent=11 // pred_check_branch
          %296 = sbr.rel (%p294) target = $region32
        $region31: #{tpu_custom_call.1} parent=11 // pred_region
          _
        $region32: #{tpu_custom_call.1} parent=11 // pred_fallthru
          _
        // Predicated region
        $region33: #{tpu_custom_call.1} parent=11 // pred_check
          %p297 = pneg %p200
        $region34: #{tpu_custom_call.1} parent=11 // pred_check_branch
          %299 = sbr.rel (%p297) target = $region36
        $region35: #{tpu_custom_call.1} parent=11 // pred_region
          _
        $region36: #{tpu_custom_call.1} parent=11 // pred_fallthru
          _
        // Predicated region
        $region37: #{tpu_custom_call.1} parent=11 // pred_check
          %p300 = pneg %p221
        $region38: #{tpu_custom_call.1} parent=11 // pred_check_branch
          %302 = sbr.rel (%p300) target = $region40
        $region39: #{tpu_custom_call.1} parent=11 // pred_region
          _
        $region40: #{tpu_custom_call.1} parent=11 // pred_fallthru
          _
      $region12: #{tpu_custom_call.1} parent=5 // pred_fallthru
        _
      %p303 = scmp.lt.s32.totalorder %s22, 2
      // Predicated region
      $region41: #{tpu_custom_call.1} parent=5 // pred_check
        %p304 = pneg %p303
      $region42: #{tpu_custom_call.1} parent=5 // pred_check_branch
        %306 = sbr.rel (%p304) target = $region44
      $region43: #{tpu_custom_call.1} parent=5 // pred_region
        // Predicated region
        $region45: #{tpu_custom_call.1} parent=43 // pred_check
          %p307 = pneg %p42
        $region46: #{tpu_custom_call.1} parent=43 // pred_check_branch
          %309 = sbr.rel (%p307) target = $region48
        $region47: #{tpu_custom_call.1} parent=43 // pred_region
          %s310 = sand.u32 %s32, 1
          %s311 = scalar_lea.sflag [#allocation3], %s310
          %s312 = sand.u32 %s32, 1
          %s313 = smul.addr %s312, 8
          %s314 = scalar_lea.vmem [#allocation2], %s313
          %s316 = ssub.s32 128, 128
          %317 = vsyncadd %s311, %s316
          %s318 = smul.addr %s22, 128
          %s319 = scalar_lea.hbm %s0, %s318
          %s321 = sshll.u32 %s314, 4
          %s322 = int_to_ptr.vmem [resolvable:$true] %s321
          %324 = dma.hbm_to_vmem [thread:$0]  %s319, 128, %s322, %s311
        $region48: #{tpu_custom_call.1} parent=43 // pred_fallthru
          _
        // Predicated region
        $region49: #{tpu_custom_call.1} parent=43 // pred_check
          %p325 = pneg %p68
        $region50: #{tpu_custom_call.1} parent=43 // pred_check_branch
          %327 = sbr.rel (%p325) target = $region52
        $region51: #{tpu_custom_call.1} parent=43 // pred_region
          %p328 = scmp.lt.s32.totalorder %s22, 1
          %s329 = scalar_select %p328, %s22, 1
          %s330 = smul.addr %s329, 4
          %s331 = smul.addr %s330, 8
          %s332 = scalar_lea.vmem %s1, %s331
        $region52: #{tpu_custom_call.1} parent=43 // pred_fallthru
          _
      $region44: #{tpu_custom_call.1} parent=5 // pred_fallthru
        _
      %p333 = scmp.le.s32.totalorder 1, %s22
      %p334 = scmp.lt.s32.totalorder %s22, 3
      %p335 = pnand %p333, %p334
      %p336 = pneg %p335
      // Predicated region
      $region53: #{tpu_custom_call.1} parent=5 // pred_check
        _
      $region54: #{tpu_custom_call.1} parent=5 // pred_check_branch
        %338 = sbr.rel (%p335) target = $region56
      $region55: #{tpu_custom_call.1} parent=5 // pred_region
        %s339 = ssub.s32 %s22, 1
        %s340 = sand.u32 %s35, 1
        %s341 = scalar_lea.sflag [#allocation3], %s340
        %s342 = sand.u32 %s35, 1
        %s343 = smul.addr %s342, 8
        %s344 = scalar_lea.vmem [#allocation2], %s343
        // Predicated region
        $region57: #{tpu_custom_call.1} parent=55 // pred_check
          %p345 = pneg %p48
        $region58: #{tpu_custom_call.1} parent=55 // pred_check_branch
          %347 = sbr.rel (%p345) target = $region60
        $region59: #{tpu_custom_call.1} parent=55 // pred_region
          %348 = dma.done %s341, 128
        $region60: #{tpu_custom_call.1} parent=55 // pred_fallthru
          _
        // Predicated region
        $region61: #{tpu_custom_call.1} parent=55 // pred_check
          %p349 = pneg %p137
        $region62: #{tpu_custom_call.1} parent=55 // pred_check_branch
          %351 = sbr.rel (%p349) target = $region64
        $region63: #{tpu_custom_call.1} parent=55 // pred_region
          %352 = dma.done [#allocation6], 512
        $region64: #{tpu_custom_call.1} parent=55 // pred_fallthru
          _
        // Predicated region
        $region65: #{tpu_custom_call.1} parent=55 // pred_check
          %p353 = pneg %p158
        $region66: #{tpu_custom_call.1} parent=55 // pred_check_branch
          %355 = sbr.rel (%p353) target = $region68
        $region67: #{tpu_custom_call.1} parent=55 // pred_region
          %356 = dma.done [#allocation6], 512
        $region68: #{tpu_custom_call.1} parent=55 // pred_fallthru
          _
        %s357 = sand.u32 %s35, 1
        %s358 = scalar_lea.sflag [#allocation3], %s357
        %s359 = sand.u32 %s35, 1
        %s360 = smul.addr %s359, 8
        %s361 = scalar_lea.vmem [#allocation2], %s360
        %p362 = pneg %p48
        %p363 = pneg %p45
        %p364 = scmp.lt.s32.totalorder %s27, 1
        %s365 = scalar_select %p364, %s27, 1
        %s366 = smul.addr %s365, 4
        %s367 = smul.addr %s366, 8
        %s368 = scalar_lea.vmem %s1, %s367
        %p369 = pneg %p74
        %p370 = pneg %p71
        %p371 = pneg %p95
        %p372 = pneg %p92
        %p373 = pneg %p116
        %p374 = pneg %p113
        %p375 = pneg %p137
        %p376 = pneg %p134
        %p377 = pneg %p158
        %p378 = pneg %p155
        %p379 = pneg %p179
        %p380 = pneg %p176
        %p381 = pneg %p200
        %p382 = pneg %p197
        %p383 = pneg %p221
        %p384 = pneg %p218
        %p385 = pneg %p247
        %p386 = pneg %p244
        %s387 = sand.u32 %s234, 1
        %s388 = scalar_lea.sflag [#allocation4], %s387
        %s389 = sand.u32 %s234, 1
        %s390 = smul.addr %s389, 8
        %s391 = scalar_lea.vmem [#allocation8], %s390
        %p392 = scmp.lt.s32.totalorder %s27, 1
        %s393 = scalar_select %p392, %s27, 1
        %s394 = smul.addr %s393, 4
        %s395 = smul.addr %s394, 8
        %s396 = scalar_lea.vmem %s1, %s395
        %v397 = vld [vmem:[%s344] sm:$0xff]
        %v398 = vld [vmem:[%s2] sm:$0xff]
        %v399 = vld [vmem:[%s2 + $0x8] sm:$0xff]
        %v400 = vld [vmem:[%s2 + $0x10] sm:$0xff]
        %v401 = vld [vmem:[%s2 + $0x18] sm:$0xff]
        %v402 = vld [vmem:[%s3] sm:$0x1]
        %v404 = vlaneseq
        %v405 = vshrl.u32 %v404, 7
        %v406 = vsub.s32 0, %v405
        %v407 = vrot.slane %v402, %v406
        %vm409 = vcmask 261120
        %v411 = vsel %vm409, %v397, 0
        %413 = vmatprep.subr.mxu0 0.0
        %414 = vmatpush1.msra.mxu0 0.0
        %415 = vmatprep.subr.mxu0 0.0
        %416 = vmatpush1.msra.mxu0 0.0
        %417 = vmatprep.subr.mxu0 0.0
        %418 = vmatpush1.msra.mxu0 0.0
        %419 = vmatprep.subr.mxu0 0.0
        %420 = vmatpush1.msra.mxu0 0.0
        %421 = vmatprep.subr.mxu0 0.0
        %422 = vmatpush1.msra.mxu0 0.0
        %423 = vmatprep.subr.mxu0 0.0
        %424 = vmatpush1.msra.mxu0 0.0
        %425 = vmatprep.subr.mxu0 0.0
        %426 = vmatpush1.msra.mxu0 0.0
        %427 = vmatprep.subr.mxu0 0.0
        %428 = vmatpush1.msra.mxu0 0.0
        %429 = vmatprep.subr.mxu0 0.0
        %430 = vmatpush1.msra.mxu0 0.0
        %431 = vmatprep.subr.mxu0 0.0
        %432 = vmatpush1.msra.mxu0 0.0
        %433 = vmatprep.subr.mxu0 0.0
        %434 = vmatpush1.msra.mxu0 0.0
        %435 = vmatprep.subr.mxu0 0.0
        %436 = vmatpush1.msra.mxu0 0.0
        %437 = vmatprep.subr.mxu0 0.0
        %438 = vmatpush1.msra.mxu0 %v401
        %439 = vmatprep.subr.mxu0 0.0
        %440 = vmatpush1.msra.mxu0 %v400
        %441 = vmatprep.subr.mxu0 0.0
        %442 = vmatpush1.msra.mxu0 %v399
        %443 = vmatprep.subr.mxu0 0.0
        %444 = vmatpush1.msra.mxu0 %v398
        %445 = vmatprep.subr.mxu0 0.0
        %446 = vmatpush2.msra.mxu0 0.0
        %447 = vmatprep.subr.mxu0 0.0
        %448 = vmatpush2.msra.mxu0 0.0
        %449 = vmatprep.subr.mxu0 0.0
        %450 = vmatpush2.msra.mxu0 0.0
        %451 = vmatprep.subr.mxu0 0.0
        %452 = vmatpush2.msra.mxu0 0.0
        %453 = vmatprep.subr.mxu0 0.0
        %454 = vmatpush2.msra.mxu0 0.0
        %455 = vmatprep.subr.mxu0 0.0
        %456 = vmatpush2.msra.mxu0 0.0
        %457 = vmatprep.subr.mxu0 0.0
        %458 = vmatpush2.msra.mxu0 0.0
        %459 = vmatprep.subr.mxu0 0.0
        %460 = vmatpush2.msra.mxu0 0.0
        %461 = vmatprep.subr.mxu0 0.0
        %462 = vmatpush2.msra.mxu0 0.0
        %463 = vmatprep.subr.mxu0 0.0
        %464 = vmatpush2.msra.mxu0 0.0
        %465 = vmatprep.subr.mxu0 0.0
        %466 = vmatpush2.msra.mxu0 0.0
        %467 = vmatprep.subr.mxu0 0.0
        %468 = vmatpush2.msra.mxu0 0.0
        %469 = vmatprep.subr.mxu0 0.0
        %470 = vmatpush2.msra.mxu0 0.0
        %471 = vmatprep.subr.mxu0 0.0
        %472 = vmatpush2.msra.mxu0 0.0
        %473 = vmatprep.subr.mxu0 0.0
        %474 = vmatpush2.msra.mxu0 0.0
        %475 = vmatprep.subr.mxu0 0.0
        %476 = vmatpush2.msra.mxu0 0.0
        %477 = vmatprep.mubr.f32.mxu0 0.0
        %478 = vmatmul.mubr.f32.gmra.mxu0 %v411
        %v479 = vpop.f32.mrf.mxu0
        %v480 = vadd.f32 %v407, %v479
        %v481 = vpop.f32.mrf.mxu0
        %482 = vdwg.mxu0
        %v483 = vmul.f32 %v480, 0.35355338
        %v484 = vld [vmem:[%s396] sm:$0xff]
        %486 = vrot.lane.b32.xlu0 %v480, 96
        %v487 = vpop.permute.xlu0 %486
        %vm488 = vcmask 64512
        %v490 = vsel %vm488, %v483, 0
        %v492 = vsel %vm488, %v487, 0
        %494 = vmatprep.subr.mxu0 0.0
        %495 = vmatpush1.xpose.msra.mxu0 0.0
        %496 = vmatprep.subr.mxu0 0.0
        %497 = vmatpush1.xpose.msra.mxu0 0.0
        %498 = vmatprep.subr.mxu0 0.0
        %499 = vmatpush1.xpose.msra.mxu0 0.0
        %500 = vmatprep.subr.mxu0 0.0
        %501 = vmatpush1.xpose.msra.mxu0 0.0
        %502 = vmatprep.subr.mxu0 0.0
        %503 = vmatpush1.xpose.msra.mxu0 0.0
        %504 = vmatprep.subr.mxu0 0.0
        %505 = vmatpush1.xpose.msra.mxu0 0.0
        %506 = vmatprep.subr.mxu0 0.0
        %507 = vmatpush1.xpose.msra.mxu0 0.0
        %508 = vmatprep.subr.mxu0 0.0
        %509 = vmatpush1.xpose.msra.mxu0 0.0
        %510 = vmatprep.subr.mxu0 0.0
        %511 = vmatpush1.xpose.msra.mxu0 0.0
        %512 = vmatprep.subr.mxu0 0.0
        %513 = vmatpush1.xpose.msra.mxu0 0.0
        %514 = vmatprep.subr.mxu0 0.0
        %515 = vmatpush1.xpose.msra.mxu0 0.0
        %516 = vmatprep.subr.mxu0 0.0
        %517 = vmatpush1.xpose.msra.mxu0 0.0
        %518 = vmatprep.subr.mxu0 0.0
        %519 = vmatpush1.xpose.msra.mxu0 0.0
        %520 = vmatprep.subr.mxu0 0.0
        %521 = vmatpush1.xpose.msra.mxu0 0.0
        %522 = vmatprep.subr.mxu0 0.0
        %523 = vmatpush1.xpose.msra.mxu0 0.0
        %524 = vmatprep.subr.mxu0 0.0
        %525 = vmatpush1.xpose.msra.mxu0 %v492
        %526 = vmatprep.subr.mxu0 0.0
        %527 = vmatpush2.xpose.msra.mxu0 0.0
        %528 = vmatprep.subr.mxu0 0.0
        %529 = vmatpush2.xpose.msra.mxu0 0.0
        %530 = vmatprep.subr.mxu0 0.0
        %531 = vmatpush2.xpose.msra.mxu0 0.0
        %532 = vmatprep.subr.mxu0 0.0
        %533 = vmatpush2.xpose.msra.mxu0 0.0
        %534 = vmatprep.subr.mxu0 0.0
        %535 = vmatpush2.xpose.msra.mxu0 0.0
        %536 = vmatprep.subr.mxu0 0.0
        %537 = vmatpush2.xpose.msra.mxu0 0.0
        %538 = vmatprep.subr.mxu0 0.0
        %539 = vmatpush2.xpose.msra.mxu0 0.0
        %540 = vmatprep.subr.mxu0 0.0
        %541 = vmatpush2.xpose.msra.mxu0 0.0
        %542 = vmatprep.subr.mxu0 0.0
        %543 = vmatpush2.xpose.msra.mxu0 0.0
        %544 = vmatprep.subr.mxu0 0.0
        %545 = vmatpush2.xpose.msra.mxu0 0.0
        %546 = vmatprep.subr.mxu0 0.0
        %547 = vmatpush2.xpose.msra.mxu0 0.0
        %548 = vmatprep.subr.mxu0 0.0
        %549 = vmatpush2.xpose.msra.mxu0 0.0
        %550 = vmatprep.subr.mxu0 0.0
        %551 = vmatpush2.xpose.msra.mxu0 0.0
        %552 = vmatprep.subr.mxu0 0.0
        %553 = vmatpush2.xpose.msra.mxu0 0.0
        %554 = vmatprep.subr.mxu0 0.0
        %555 = vmatpush2.xpose.msra.mxu0 0.0
        %556 = vmatprep.subr.mxu0 0.0
        %557 = vmatpush2.xpose.msra.mxu0 0.0
        %558 = vmatprep.mubr.f32.mxu0 0.0
        %559 = vmatmul.mubr.f32.gmra.mxu0 %v490
        %v560 = vpop.f32.mrf.mxu0
        %v561 = vadd.f32 %v484, %v560
        %v562 = vpop.f32.mrf.mxu0
        %563 = vdwg.mxu0
        %v564 = vsel %vm488, %v561, -inf
        %565 = vmax.xlane.f32.xlu0 %v564
        %v566 = vpop.xlane.xlu0 %565
        %v567 = vsub.f32 %v561, %v566
        %v568 = vmul.f32 %v567, 1.442695
        %v569 = vpow.pop %v568
        %v570 = vsel %vm488, %v569, 0.0
        %571 = vadd.xlane.f32.xlu0 %v570
        %v572 = vpop.xlane.xlu0 %571
        %v573 = vrcp.pop %v572
        %v574 = vmul.f32 %v569, %v573
        %575 = vrot.lane.b32.xlu0 %v480, 64
        %v576 = vpop.permute.xlu0 %575
        %v579 = vsel %vm488, %v574, 0
        %581 = vmatprep.subr.mxu0 0.0
        %582 = vmatpush1.msra.mxu0 0.0
        %583 = vmatprep.subr.mxu0 0.0
        %584 = vmatpush1.msra.mxu0 0.0
        %585 = vmatprep.subr.mxu0 0.0
        %586 = vmatpush1.msra.mxu0 0.0
        %587 = vmatprep.subr.mxu0 0.0
        %588 = vmatpush1.msra.mxu0 0.0
        %589 = vmatprep.subr.mxu0 0.0
        %590 = vmatpush1.msra.mxu0 0.0
        %591 = vmatprep.subr.mxu0 0.0
        %592 = vmatpush1.msra.mxu0 0.0
        %593 = vmatprep.subr.mxu0 0.0
        %594 = vmatpush1.msra.mxu0 0.0
        %595 = vmatprep.subr.mxu0 0.0
        %596 = vmatpush1.msra.mxu0 0.0
        %597 = vmatprep.subr.mxu0 0.0
        %598 = vmatpush1.msra.mxu0 0.0
        %599 = vmatprep.subr.mxu0 0.0
        %600 = vmatpush1.msra.mxu0 0.0
        %601 = vmatprep.subr.mxu0 0.0
        %602 = vmatpush1.msra.mxu0 0.0
        %603 = vmatprep.subr.mxu0 0.0
        %604 = vmatpush1.msra.mxu0 0.0
        %605 = vmatprep.subr.mxu0 0.0
        %606 = vmatpush1.msra.mxu0 0.0
        %607 = vmatprep.subr.mxu0 0.0
        %608 = vmatpush1.msra.mxu0 0.0
        %609 = vmatprep.subr.mxu0 0.0
        %610 = vmatpush1.msra.mxu0 0.0
        %611 = vmatprep.subr.mxu0 0.0
        %612 = vmatpush1.msra.mxu0 %v576
        %613 = vmatprep.subr.mxu0 0.0
        %614 = vmatpush2.msra.mxu0 0.0
        %615 = vmatprep.subr.mxu0 0.0
        %616 = vmatpush2.msra.mxu0 0.0
        %617 = vmatprep.subr.mxu0 0.0
        %618 = vmatpush2.msra.mxu0 0.0
        %619 = vmatprep.subr.mxu0 0.0
        %620 = vmatpush2.msra.mxu0 0.0
        %621 = vmatprep.subr.mxu0 0.0
        %622 = vmatpush2.msra.mxu0 0.0
        %623 = vmatprep.subr.mxu0 0.0
        %624 = vmatpush2.msra.mxu0 0.0
        %625 = vmatprep.subr.mxu0 0.0
        %626 = vmatpush2.msra.mxu0 0.0
        %627 = vmatprep.subr.mxu0 0.0
        %628 = vmatpush2.msra.mxu0 0.0
        %629 = vmatprep.subr.mxu0 0.0
        %630 = vmatpush2.msra.mxu0 0.0
        %631 = vmatprep.subr.mxu0 0.0
        %632 = vmatpush2.msra.mxu0 0.0
        %633 = vmatprep.subr.mxu0 0.0
        %634 = vmatpush2.msra.mxu0 0.0
        %635 = vmatprep.subr.mxu0 0.0
        %636 = vmatpush2.msra.mxu0 0.0
        %637 = vmatprep.subr.mxu0 0.0
        %638 = vmatpush2.msra.mxu0 0.0
        %639 = vmatprep.subr.mxu0 0.0
        %640 = vmatpush2.msra.mxu0 0.0
        %641 = vmatprep.subr.mxu0 0.0
        %642 = vmatpush2.msra.mxu0 0.0
        %643 = vmatprep.subr.mxu0 0.0
        %644 = vmatpush2.msra.mxu0 0.0
        %645 = vmatprep.mubr.f32.mxu0 0.0
        %646 = vmatmul.mubr.f32.gmra.mxu0 %v579
        %v647 = vpop.f32.mrf.mxu0
        %v648 = vadd.f32 0.0, %v647
        %v649 = vpop.f32.mrf.mxu0
        %650 = vdwg.mxu0
        %v651 = vld [vmem:[#allocation5] sm:$0xff]
        %s652 = scalar_lea.vmem %s396, 8
        %v653 = vld [vmem:[%s652] sm:$0xff]
        %654 = vrot.lane.b32.xlu0 %v483, 120
        %v655 = vpop.permute.xlu0 %654
        %656 = vrot.lane.b32.xlu0 %v480, 88
        %v657 = vpop.permute.xlu0 %656
        %v658 = vsel %vm488, %v655, 0
        %v660 = vsel %vm488, %v657, 0
        %662 = vmatprep.subr.mxu0 0.0
        %663 = vmatpush1.xpose.msra.mxu0 0.0
        %664 = vmatprep.subr.mxu0 0.0
        %665 = vmatpush1.xpose.msra.mxu0 0.0
        %666 = vmatprep.subr.mxu0 0.0
        %667 = vmatpush1.xpose.msra.mxu0 0.0
        %668 = vmatprep.subr.mxu0 0.0
        %669 = vmatpush1.xpose.msra.mxu0 0.0
        %670 = vmatprep.subr.mxu0 0.0
        %671 = vmatpush1.xpose.msra.mxu0 0.0
        %672 = vmatprep.subr.mxu0 0.0
        %673 = vmatpush1.xpose.msra.mxu0 0.0
        %674 = vmatprep.subr.mxu0 0.0
        %675 = vmatpush1.xpose.msra.mxu0 0.0
        %676 = vmatprep.subr.mxu0 0.0
        %677 = vmatpush1.xpose.msra.mxu0 0.0
        %678 = vmatprep.subr.mxu0 0.0
        %679 = vmatpush1.xpose.msra.mxu0 0.0
        %680 = vmatprep.subr.mxu0 0.0
        %681 = vmatpush1.xpose.msra.mxu0 0.0
        %682 = vmatprep.subr.mxu0 0.0
        %683 = vmatpush1.xpose.msra.mxu0 0.0
        %684 = vmatprep.subr.mxu0 0.0
        %685 = vmatpush1.xpose.msra.mxu0 0.0
        %686 = vmatprep.subr.mxu0 0.0
        %687 = vmatpush1.xpose.msra.mxu0 0.0
        %688 = vmatprep.subr.mxu0 0.0
        %689 = vmatpush1.xpose.msra.mxu0 0.0
        %690 = vmatprep.subr.mxu0 0.0
        %691 = vmatpush1.xpose.msra.mxu0 0.0
        %692 = vmatprep.subr.mxu0 0.0
        %693 = vmatpush1.xpose.msra.mxu0 %v660
        %694 = vmatprep.subr.mxu0 0.0
        %695 = vmatpush2.xpose.msra.mxu0 0.0
        %696 = vmatprep.subr.mxu0 0.0
        %697 = vmatpush2.xpose.msra.mxu0 0.0
        %698 = vmatprep.subr.mxu0 0.0
        %699 = vmatpush2.xpose.msra.mxu0 0.0
        %700 = vmatprep.subr.mxu0 0.0
        %701 = vmatpush2.xpose.msra.mxu0 0.0
        %702 = vmatprep.subr.mxu0 0.0
        %703 = vmatpush2.xpose.msra.mxu0 0.0
        %704 = vmatprep.subr.mxu0 0.0
        %705 = vmatpush2.xpose.msra.mxu0 0.0
        %706 = vmatprep.subr.mxu0 0.0
        %707 = vmatpush2.xpose.msra.mxu0 0.0
        %708 = vmatprep.subr.mxu0 0.0
        %709 = vmatpush2.xpose.msra.mxu0 0.0
        %710 = vmatprep.subr.mxu0 0.0
        %711 = vmatpush2.xpose.msra.mxu0 0.0
        %712 = vmatprep.subr.mxu0 0.0
        %713 = vmatpush2.xpose.msra.mxu0 0.0
        %714 = vmatprep.subr.mxu0 0.0
        %715 = vmatpush2.xpose.msra.mxu0 0.0
        %716 = vmatprep.subr.mxu0 0.0
        %717 = vmatpush2.xpose.msra.mxu0 0.0
        %718 = vmatprep.subr.mxu0 0.0
        %719 = vmatpush2.xpose.msra.mxu0 0.0
        %720 = vmatprep.subr.mxu0 0.0
        %721 = vmatpush2.xpose.msra.mxu0 0.0
        %722 = vmatprep.subr.mxu0 0.0
        %723 = vmatpush2.xpose.msra.mxu0 0.0
        %724 = vmatprep.subr.mxu0 0.0
        %725 = vmatpush2.xpose.msra.mxu0 0.0
        %726 = vmatprep.mubr.f32.mxu0 0.0
        %727 = vmatmul.mubr.f32.gmra.mxu0 %v658
        %v728 = vpop.f32.mrf.mxu0
        %v729 = vadd.f32 %v653, %v728
        %v730 = vpop.f32.mrf.mxu0
        %731 = vdwg.mxu0
        %v732 = vsel %vm488, %v729, -inf
        %733 = vmax.xlane.f32.xlu0 %v732
        %v734 = vpop.xlane.xlu0 %733
        %v735 = vsub.f32 %v729, %v734
        %v736 = vmul.f32 %v735, 1.442695
        %v737 = vpow.pop %v736
        %v738 = vsel %vm488, %v737, 0.0
        %739 = vadd.xlane.f32.xlu0 %v738
        %v740 = vpop.xlane.xlu0 %739
        %v741 = vrcp.pop %v740
        %v742 = vmul.f32 %v737, %v741
        %743 = vrot.lane.b32.xlu0 %v480, 56
        %v744 = vpop.permute.xlu0 %743
        %v747 = vsel %vm488, %v742, 0
        %749 = vmatprep.subr.mxu0 0.0
        %750 = vmatpush1.msra.mxu0 0.0
        %751 = vmatprep.subr.mxu0 0.0
        %752 = vmatpush1.msra.mxu0 0.0
        %753 = vmatprep.subr.mxu0 0.0
        %754 = vmatpush1.msra.mxu0 0.0
        %755 = vmatprep.subr.mxu0 0.0
        %756 = vmatpush1.msra.mxu0 0.0
        %757 = vmatprep.subr.mxu0 0.0
        %758 = vmatpush1.msra.mxu0 0.0
        %759 = vmatprep.subr.mxu0 0.0
        %760 = vmatpush1.msra.mxu0 0.0
        %761 = vmatprep.subr.mxu0 0.0
        %762 = vmatpush1.msra.mxu0 0.0
        %763 = vmatprep.subr.mxu0 0.0
        %764 = vmatpush1.msra.mxu0 0.0
        %765 = vmatprep.subr.mxu0 0.0
        %766 = vmatpush1.msra.mxu0 0.0
        %767 = vmatprep.subr.mxu0 0.0
        %768 = vmatpush1.msra.mxu0 0.0
        %769 = vmatprep.subr.mxu0 0.0
        %770 = vmatpush1.msra.mxu0 0.0
        %771 = vmatprep.subr.mxu0 0.0
        %772 = vmatpush1.msra.mxu0 0.0
        %773 = vmatprep.subr.mxu0 0.0
        %774 = vmatpush1.msra.mxu0 0.0
        %775 = vmatprep.subr.mxu0 0.0
        %776 = vmatpush1.msra.mxu0 0.0
        %777 = vmatprep.subr.mxu0 0.0
        %778 = vmatpush1.msra.mxu0 0.0
        %779 = vmatprep.subr.mxu0 0.0
        %780 = vmatpush1.msra.mxu0 %v744
        %781 = vmatprep.subr.mxu0 0.0
        %782 = vmatpush2.msra.mxu0 0.0
        %783 = vmatprep.subr.mxu0 0.0
        %784 = vmatpush2.msra.mxu0 0.0
        %785 = vmatprep.subr.mxu0 0.0
        %786 = vmatpush2.msra.mxu0 0.0
        %787 = vmatprep.subr.mxu0 0.0
        %788 = vmatpush2.msra.mxu0 0.0
        %789 = vmatprep.subr.mxu0 0.0
        %790 = vmatpush2.msra.mxu0 0.0
        %791 = vmatprep.subr.mxu0 0.0
        %792 = vmatpush2.msra.mxu0 0.0
        %793 = vmatprep.subr.mxu0 0.0
        %794 = vmatpush2.msra.mxu0 0.0
        %795 = vmatprep.subr.mxu0 0.0
        %796 = vmatpush2.msra.mxu0 0.0
        %797 = vmatprep.subr.mxu0 0.0
        %798 = vmatpush2.msra.mxu0 0.0
        %799 = vmatprep.subr.mxu0 0.0
        %800 = vmatpush2.msra.mxu0 0.0
        %801 = vmatprep.subr.mxu0 0.0
        %802 = vmatpush2.msra.mxu0 0.0
        %803 = vmatprep.subr.mxu0 0.0
        %804 = vmatpush2.msra.mxu0 0.0
        %805 = vmatprep.subr.mxu0 0.0
        %806 = vmatpush2.msra.mxu0 0.0
        %807 = vmatprep.subr.mxu0 0.0
        %808 = vmatpush2.msra.mxu0 0.0
        %809 = vmatprep.subr.mxu0 0.0
        %810 = vmatpush2.msra.mxu0 0.0
        %811 = vmatprep.subr.mxu0 0.0
        %812 = vmatpush2.msra.mxu0 0.0
        %813 = vmatprep.mubr.f32.mxu0 0.0
        %814 = vmatmul.mubr.f32.gmra.mxu0 %v747
        %v815 = vpop.f32.mrf.mxu0
        %v816 = vadd.f32 0.0, %v815
        %v817 = vpop.f32.mrf.mxu0
        %818 = vdwg.mxu0
        %v819 = vld [vmem:[#allocation5 + $0x8] sm:$0xff]
        %v821 = vsel %vm488, %v816, 0
        %823 = vmatprep.subr.mxu0 0.0
        %824 = vmatpush1.msra.mxu0 0.0
        %825 = vmatprep.subr.mxu0 0.0
        %826 = vmatpush1.msra.mxu0 0.0
        %827 = vmatprep.subr.mxu0 0.0
        %828 = vmatpush1.msra.mxu0 0.0
        %829 = vmatprep.subr.mxu0 0.0
        %830 = vmatpush1.msra.mxu0 0.0
        %831 = vmatprep.subr.mxu0 0.0
        %832 = vmatpush1.msra.mxu0 0.0
        %833 = vmatprep.subr.mxu0 0.0
        %834 = vmatpush1.msra.mxu0 0.0
        %835 = vmatprep.subr.mxu0 0.0
        %836 = vmatpush1.msra.mxu0 0.0
        %837 = vmatprep.subr.mxu0 0.0
        %838 = vmatpush1.msra.mxu0 0.0
        %839 = vmatprep.subr.mxu0 0.0
        %840 = vmatpush1.msra.mxu0 0.0
        %841 = vmatprep.subr.mxu0 0.0
        %842 = vmatpush1.msra.mxu0 0.0
        %843 = vmatprep.subr.mxu0 0.0
        %844 = vmatpush1.msra.mxu0 0.0
        %845 = vmatprep.subr.mxu0 0.0
        %846 = vmatpush1.msra.mxu0 0.0
        %847 = vmatprep.subr.mxu0 0.0
        %848 = vmatpush1.msra.mxu0 0.0
        %849 = vmatprep.subr.mxu0 0.0
        %850 = vmatpush1.msra.mxu0 0.0
        %851 = vmatprep.subr.mxu0 0.0
        %852 = vmatpush1.msra.mxu0 0.0
        %853 = vmatprep.subr.mxu0 0.0
        %854 = vmatpush1.msra.mxu0 %v819
        %855 = vmatprep.subr.mxu0 0.0
        %856 = vmatpush2.msra.mxu0 0.0
        %857 = vmatprep.subr.mxu0 0.0
        %858 = vmatpush2.msra.mxu0 0.0
        %859 = vmatprep.subr.mxu0 0.0
        %860 = vmatpush2.msra.mxu0 0.0
        %861 = vmatprep.subr.mxu0 0.0
        %862 = vmatpush2.msra.mxu0 0.0
        %863 = vmatprep.subr.mxu0 0.0
        %864 = vmatpush2.msra.mxu0 0.0
        %865 = vmatprep.subr.mxu0 0.0
        %866 = vmatpush2.msra.mxu0 0.0
        %867 = vmatprep.subr.mxu0 0.0
        %868 = vmatpush2.msra.mxu0 0.0
        %869 = vmatprep.subr.mxu0 0.0
        %870 = vmatpush2.msra.mxu0 0.0
        %871 = vmatprep.subr.mxu0 0.0
        %872 = vmatpush2.msra.mxu0 0.0
        %873 = vmatprep.subr.mxu0 0.0
        %874 = vmatpush2.msra.mxu0 0.0
        %875 = vmatprep.subr.mxu0 0.0
        %876 = vmatpush2.msra.mxu0 0.0
        %877 = vmatprep.subr.mxu0 0.0
        %878 = vmatpush2.msra.mxu0 0.0
        %879 = vmatprep.subr.mxu0 0.0
        %880 = vmatpush2.msra.mxu0 0.0
        %881 = vmatprep.subr.mxu0 0.0
        %882 = vmatpush2.msra.mxu0 0.0
        %883 = vmatprep.subr.mxu0 0.0
        %884 = vmatpush2.msra.mxu0 0.0
        %885 = vmatprep.subr.mxu0 0.0
        %886 = vmatpush2.msra.mxu0 0.0
        %887 = vmatprep.mubr.f32.mxu0 0.0
        %888 = vmatmul.mubr.f32.gmra.mxu0 %v821
        %v889 = vpop.f32.mrf.mxu0
        %v890 = vadd.f32 0.0, %v889
        %v891 = vpop.f32.mrf.mxu0
        %892 = vdwg.mxu0
        %v894 = vsel %vm488, %v648, 0
        %896 = vmatprep.subr.mxu0 0.0
        %897 = vmatpush1.msra.mxu0 0.0
        %898 = vmatprep.subr.mxu0 0.0
        %899 = vmatpush1.msra.mxu0 0.0
        %900 = vmatprep.subr.mxu0 0.0
        %901 = vmatpush1.msra.mxu0 0.0
        %902 = vmatprep.subr.mxu0 0.0
        %903 = vmatpush1.msra.mxu0 0.0
        %904 = vmatprep.subr.mxu0 0.0
        %905 = vmatpush1.msra.mxu0 0.0
        %906 = vmatprep.subr.mxu0 0.0
        %907 = vmatpush1.msra.mxu0 0.0
        %908 = vmatprep.subr.mxu0 0.0
        %909 = vmatpush1.msra.mxu0 0.0
        %910 = vmatprep.subr.mxu0 0.0
        %911 = vmatpush1.msra.mxu0 0.0
        %912 = vmatprep.subr.mxu0 0.0
        %913 = vmatpush1.msra.mxu0 0.0
        %914 = vmatprep.subr.mxu0 0.0
        %915 = vmatpush1.msra.mxu0 0.0
        %916 = vmatprep.subr.mxu0 0.0
        %917 = vmatpush1.msra.mxu0 0.0
        %918 = vmatprep.subr.mxu0 0.0
        %919 = vmatpush1.msra.mxu0 0.0
        %920 = vmatprep.subr.mxu0 0.0
        %921 = vmatpush1.msra.mxu0 0.0
        %922 = vmatprep.subr.mxu0 0.0
        %923 = vmatpush1.msra.mxu0 0.0
        %924 = vmatprep.subr.mxu0 0.0
        %925 = vmatpush1.msra.mxu0 0.0
        %926 = vmatprep.subr.mxu0 0.0
        %927 = vmatpush1.msra.mxu0 %v651
        %928 = vmatprep.subr.mxu0 0.0
        %929 = vmatpush2.msra.mxu0 0.0
        %930 = vmatprep.subr.mxu0 0.0
        %931 = vmatpush2.msra.mxu0 0.0
        %932 = vmatprep.subr.mxu0 0.0
        %933 = vmatpush2.msra.mxu0 0.0
        %934 = vmatprep.subr.mxu0 0.0
        %935 = vmatpush2.msra.mxu0 0.0
        %936 = vmatprep.subr.mxu0 0.0
        %937 = vmatpush2.msra.mxu0 0.0
        %938 = vmatprep.subr.mxu0 0.0
        %939 = vmatpush2.msra.mxu0 0.0
        %940 = vmatprep.subr.mxu0 0.0
        %941 = vmatpush2.msra.mxu0 0.0
        %942 = vmatprep.subr.mxu0 0.0
        %943 = vmatpush2.msra.mxu0 0.0
        %944 = vmatprep.subr.mxu0 0.0
        %945 = vmatpush2.msra.mxu0 0.0
        %946 = vmatprep.subr.mxu0 0.0
        %947 = vmatpush2.msra.mxu0 0.0
        %948 = vmatprep.subr.mxu0 0.0
        %949 = vmatpush2.msra.mxu0 0.0
        %950 = vmatprep.subr.mxu0 0.0
        %951 = vmatpush2.msra.mxu0 0.0
        %952 = vmatprep.subr.mxu0 0.0
        %953 = vmatpush2.msra.mxu0 0.0
        %954 = vmatprep.subr.mxu0 0.0
        %955 = vmatpush2.msra.mxu0 0.0
        %956 = vmatprep.subr.mxu0 0.0
        %957 = vmatpush2.msra.mxu0 0.0
        %958 = vmatprep.subr.mxu0 0.0
        %959 = vmatpush2.msra.mxu0 0.0
        %960 = vmatprep.mubr.f32.mxu0 0.0
        %961 = vmatmul.mubr.f32.gmra.mxu0 %v894
        %v962 = vpop.f32.mrf.mxu0
        %v963 = vadd.f32 %v890, %v962
        %v964 = vpop.f32.mrf.mxu0
        %965 = vdwg.mxu0
        %s966 = scalar_lea.vmem %s396, 16
        %v967 = vld [vmem:[%s966] sm:$0xff]
        %968 = vrot.lane.b32.xlu0 %v483, 112
        %v969 = vpop.permute.xlu0 %968
        %970 = vrot.lane.b32.xlu0 %v480, 80
        %v971 = vpop.permute.xlu0 %970
        %v972 = vsel %vm488, %v969, 0
        %v974 = vsel %vm488, %v971, 0
        %976 = vmatprep.subr.mxu0 0.0
        %977 = vmatpush1.xpose.msra.mxu0 0.0
        %978 = vmatprep.subr.mxu0 0.0
        %979 = vmatpush1.xpose.msra.mxu0 0.0
        %980 = vmatprep.subr.mxu0 0.0
        %981 = vmatpush1.xpose.msra.mxu0 0.0
        %982 = vmatprep.subr.mxu0 0.0
        %983 = vmatpush1.xpose.msra.mxu0 0.0
        %984 = vmatprep.subr.mxu0 0.0
        %985 = vmatpush1.xpose.msra.mxu0 0.0
        %986 = vmatprep.subr.mxu0 0.0
        %987 = vmatpush1.xpose.msra.mxu0 0.0
        %988 = vmatprep.subr.mxu0 0.0
        %989 = vmatpush1.xpose.msra.mxu0 0.0
        %990 = vmatprep.subr.mxu0 0.0
        %991 = vmatpush1.xpose.msra.mxu0 0.0
        %992 = vmatprep.subr.mxu0 0.0
        %993 = vmatpush1.xpose.msra.mxu0 0.0
        %994 = vmatprep.subr.mxu0 0.0
        %995 = vmatpush1.xpose.msra.mxu0 0.0
        %996 = vmatprep.subr.mxu0 0.0
        %997 = vmatpush1.xpose.msra.mxu0 0.0
        %998 = vmatprep.subr.mxu0 0.0
        %999 = vmatpush1.xpose.msra.mxu0 0.0
        %1000 = vmatprep.subr.mxu0 0.0
        %1001 = vmatpush1.xpose.msra.mxu0 0.0
        %1002 = vmatprep.subr.mxu0 0.0
        %1003 = vmatpush1.xpose.msra.mxu0 0.0
        %1004 = vmatprep.subr.mxu0 0.0
        %1005 = vmatpush1.xpose.msra.mxu0 0.0
        %1006 = vmatprep.subr.mxu0 0.0
        %1007 = vmatpush1.xpose.msra.mxu0 %v974
        %1008 = vmatprep.subr.mxu0 0.0
        %1009 = vmatpush2.xpose.msra.mxu0 0.0
        %1010 = vmatprep.subr.mxu0 0.0
        %1011 = vmatpush2.xpose.msra.mxu0 0.0
        %1012 = vmatprep.subr.mxu0 0.0
        %1013 = vmatpush2.xpose.msra.mxu0 0.0
        %1014 = vmatprep.subr.mxu0 0.0
        %1015 = vmatpush2.xpose.msra.mxu0 0.0
        %1016 = vmatprep.subr.mxu0 0.0
        %1017 = vmatpush2.xpose.msra.mxu0 0.0
        %1018 = vmatprep.subr.mxu0 0.0
        %1019 = vmatpush2.xpose.msra.mxu0 0.0
        %1020 = vmatprep.subr.mxu0 0.0
        %1021 = vmatpush2.xpose.msra.mxu0 0.0
        %1022 = vmatprep.subr.mxu0 0.0
        %1023 = vmatpush2.xpose.msra.mxu0 0.0
        %1024 = vmatprep.subr.mxu0 0.0
        %1025 = vmatpush2.xpose.msra.mxu0 0.0
        %1026 = vmatprep.subr.mxu0 0.0
        %1027 = vmatpush2.xpose.msra.mxu0 0.0
        %1028 = vmatprep.subr.mxu0 0.0
        %1029 = vmatpush2.xpose.msra.mxu0 0.0
        %1030 = vmatprep.subr.mxu0 0.0
        %1031 = vmatpush2.xpose.msra.mxu0 0.0
        %1032 = vmatprep.subr.mxu0 0.0
        %1033 = vmatpush2.xpose.msra.mxu0 0.0
        %1034 = vmatprep.subr.mxu0 0.0
        %1035 = vmatpush2.xpose.msra.mxu0 0.0
        %1036 = vmatprep.subr.mxu0 0.0
        %1037 = vmatpush2.xpose.msra.mxu0 0.0
        %1038 = vmatprep.subr.mxu0 0.0
        %1039 = vmatpush2.xpose.msra.mxu0 0.0
        %1040 = vmatprep.mubr.f32.mxu0 0.0
        %1041 = vmatmul.mubr.f32.gmra.mxu0 %v972
        %v1042 = vpop.f32.mrf.mxu0
        %v1043 = vadd.f32 %v967, %v1042
        %v1044 = vpop.f32.mrf.mxu0
        %1045 = vdwg.mxu0
        %v1046 = vsel %vm488, %v1043, -inf
        %1047 = vmax.xlane.f32.xlu0 %v1046
        %v1048 = vpop.xlane.xlu0 %1047
        %v1049 = vsub.f32 %v1043, %v1048
        %v1050 = vmul.f32 %v1049, 1.442695
        %v1051 = vpow.pop %v1050
        %v1052 = vsel %vm488, %v1051, 0.0
        %1053 = vadd.xlane.f32.xlu0 %v1052
        %v1054 = vpop.xlane.xlu0 %1053
        %v1055 = vrcp.pop %v1054
        %v1056 = vmul.f32 %v1051, %v1055
        %1057 = vrot.lane.b32.xlu0 %v480, 48
        %v1058 = vpop.permute.xlu0 %1057
        %v1061 = vsel %vm488, %v1056, 0
        %1063 = vmatprep.subr.mxu0 0.0
        %1064 = vmatpush1.msra.mxu0 0.0
        %1065 = vmatprep.subr.mxu0 0.0
        %1066 = vmatpush1.msra.mxu0 0.0
        %1067 = vmatprep.subr.mxu0 0.0
        %1068 = vmatpush1.msra.mxu0 0.0
        %1069 = vmatprep.subr.mxu0 0.0
        %1070 = vmatpush1.msra.mxu0 0.0
        %1071 = vmatprep.subr.mxu0 0.0
        %1072 = vmatpush1.msra.mxu0 0.0
        %1073 = vmatprep.subr.mxu0 0.0
        %1074 = vmatpush1.msra.mxu0 0.0
        %1075 = vmatprep.subr.mxu0 0.0
        %1076 = vmatpush1.msra.mxu0 0.0
        %1077 = vmatprep.subr.mxu0 0.0
        %1078 = vmatpush1.msra.mxu0 0.0
        %1079 = vmatprep.subr.mxu0 0.0
        %1080 = vmatpush1.msra.mxu0 0.0
        %1081 = vmatprep.subr.mxu0 0.0
        %1082 = vmatpush1.msra.mxu0 0.0
        %1083 = vmatprep.subr.mxu0 0.0
        %1084 = vmatpush1.msra.mxu0 0.0
        %1085 = vmatprep.subr.mxu0 0.0
        %1086 = vmatpush1.msra.mxu0 0.0
        %1087 = vmatprep.subr.mxu0 0.0
        %1088 = vmatpush1.msra.mxu0 0.0
        %1089 = vmatprep.subr.mxu0 0.0
        %1090 = vmatpush1.msra.mxu0 0.0
        %1091 = vmatprep.subr.mxu0 0.0
        %1092 = vmatpush1.msra.mxu0 0.0
        %1093 = vmatprep.subr.mxu0 0.0
        %1094 = vmatpush1.msra.mxu0 %v1058
        %1095 = vmatprep.subr.mxu0 0.0
        %1096 = vmatpush2.msra.mxu0 0.0
        %1097 = vmatprep.subr.mxu0 0.0
        %1098 = vmatpush2.msra.mxu0 0.0
        %1099 = vmatprep.subr.mxu0 0.0
        %1100 = vmatpush2.msra.mxu0 0.0
        %1101 = vmatprep.subr.mxu0 0.0
        %1102 = vmatpush2.msra.mxu0 0.0
        %1103 = vmatprep.subr.mxu0 0.0
        %1104 = vmatpush2.msra.mxu0 0.0
        %1105 = vmatprep.subr.mxu0 0.0
        %1106 = vmatpush2.msra.mxu0 0.0
        %1107 = vmatprep.subr.mxu0 0.0
        %1108 = vmatpush2.msra.mxu0 0.0
        %1109 = vmatprep.subr.mxu0 0.0
        %1110 = vmatpush2.msra.mxu0 0.0
        %1111 = vmatprep.subr.mxu0 0.0
        %1112 = vmatpush2.msra.mxu0 0.0
        %1113 = vmatprep.subr.mxu0 0.0
        %1114 = vmatpush2.msra.mxu0 0.0
        %1115 = vmatprep.subr.mxu0 0.0
        %1116 = vmatpush2.msra.mxu0 0.0
        %1117 = vmatprep.subr.mxu0 0.0
        %1118 = vmatpush2.msra.mxu0 0.0
        %1119 = vmatprep.subr.mxu0 0.0
        %1120 = vmatpush2.msra.mxu0 0.0
        %1121 = vmatprep.subr.mxu0 0.0
        %1122 = vmatpush2.msra.mxu0 0.0
        %1123 = vmatprep.subr.mxu0 0.0
        %1124 = vmatpush2.msra.mxu0 0.0
        %1125 = vmatprep.subr.mxu0 0.0
        %1126 = vmatpush2.msra.mxu0 0.0
        %1127 = vmatprep.mubr.f32.mxu0 0.0
        %1128 = vmatmul.mubr.f32.gmra.mxu0 %v1061
        %v1129 = vpop.f32.mrf.mxu0
        %v1130 = vadd.f32 0.0, %v1129
        %v1131 = vpop.f32.mrf.mxu0
        %1132 = vdwg.mxu0
        %v1133 = vld [vmem:[#allocation5 + $0x10] sm:$0xff]
        %v1135 = vsel %vm488, %v1130, 0
        %1137 = vmatprep.subr.mxu0 0.0
        %1138 = vmatpush1.msra.mxu0 0.0
        %1139 = vmatprep.subr.mxu0 0.0
        %1140 = vmatpush1.msra.mxu0 0.0
        %1141 = vmatprep.subr.mxu0 0.0
        %1142 = vmatpush1.msra.mxu0 0.0
        %1143 = vmatprep.subr.mxu0 0.0
        %1144 = vmatpush1.msra.mxu0 0.0
        %1145 = vmatprep.subr.mxu0 0.0
        %1146 = vmatpush1.msra.mxu0 0.0
        %1147 = vmatprep.subr.mxu0 0.0
        %1148 = vmatpush1.msra.mxu0 0.0
        %1149 = vmatprep.subr.mxu0 0.0
        %1150 = vmatpush1.msra.mxu0 0.0
        %1151 = vmatprep.subr.mxu0 0.0
        %1152 = vmatpush1.msra.mxu0 0.0
        %1153 = vmatprep.subr.mxu0 0.0
        %1154 = vmatpush1.msra.mxu0 0.0
        %1155 = vmatprep.subr.mxu0 0.0
        %1156 = vmatpush1.msra.mxu0 0.0
        %1157 = vmatprep.subr.mxu0 0.0
        %1158 = vmatpush1.msra.mxu0 0.0
        %1159 = vmatprep.subr.mxu0 0.0
        %1160 = vmatpush1.msra.mxu0 0.0
        %1161 = vmatprep.subr.mxu0 0.0
        %1162 = vmatpush1.msra.mxu0 0.0
        %1163 = vmatprep.subr.mxu0 0.0
        %1164 = vmatpush1.msra.mxu0 0.0
        %1165 = vmatprep.subr.mxu0 0.0
        %1166 = vmatpush1.msra.mxu0 0.0
        %1167 = vmatprep.subr.mxu0 0.0
        %1168 = vmatpush1.msra.mxu0 %v1133
        %1169 = vmatprep.subr.mxu0 0.0
        %1170 = vmatpush2.msra.mxu0 0.0
        %1171 = vmatprep.subr.mxu0 0.0
        %1172 = vmatpush2.msra.mxu0 0.0
        %1173 = vmatprep.subr.mxu0 0.0
        %1174 = vmatpush2.msra.mxu0 0.0
        %1175 = vmatprep.subr.mxu0 0.0
        %1176 = vmatpush2.msra.mxu0 0.0
        %1177 = vmatprep.subr.mxu0 0.0
        %1178 = vmatpush2.msra.mxu0 0.0
        %1179 = vmatprep.subr.mxu0 0.0
        %1180 = vmatpush2.msra.mxu0 0.0
        %1181 = vmatprep.subr.mxu0 0.0
        %1182 = vmatpush2.msra.mxu0 0.0
        %1183 = vmatprep.subr.mxu0 0.0
        %1184 = vmatpush2.msra.mxu0 0.0
        %1185 = vmatprep.subr.mxu0 0.0
        %1186 = vmatpush2.msra.mxu0 0.0
        %1187 = vmatprep.subr.mxu0 0.0
        %1188 = vmatpush2.msra.mxu0 0.0
        %1189 = vmatprep.subr.mxu0 0.0
        %1190 = vmatpush2.msra.mxu0 0.0
        %1191 = vmatprep.subr.mxu0 0.0
        %1192 = vmatpush2.msra.mxu0 0.0
        %1193 = vmatprep.subr.mxu0 0.0
        %1194 = vmatpush2.msra.mxu0 0.0
        %1195 = vmatprep.subr.mxu0 0.0
        %1196 = vmatpush2.msra.mxu0 0.0
        %1197 = vmatprep.subr.mxu0 0.0
        %1198 = vmatpush2.msra.mxu0 0.0
        %1199 = vmatprep.subr.mxu0 0.0
        %1200 = vmatpush2.msra.mxu0 0.0
        %1201 = vmatprep.mubr.f32.mxu0 0.0
        %1202 = vmatmul.mubr.f32.gmra.mxu0 %v1135
        %v1203 = vpop.f32.mrf.mxu0
        %v1204 = vadd.f32 0.0, %v1203
        %v1205 = vpop.f32.mrf.mxu0
        %1206 = vdwg.mxu0
        %v1207 = vadd.f32 %v963, %v1204
        %s1208 = scalar_lea.vmem %s396, 24
        %v1209 = vld [vmem:[%s1208] sm:$0xff]
        %1210 = vrot.lane.b32.xlu0 %v483, 104
        %v1211 = vpop.permute.xlu0 %1210
        %1212 = vrot.lane.b32.xlu0 %v480, 72
        %v1213 = vpop.permute.xlu0 %1212
        %v1214 = vsel %vm488, %v1211, 0
        %v1216 = vsel %vm488, %v1213, 0
        %1218 = vmatprep.subr.mxu0 0.0
        %1219 = vmatpush1.xpose.msra.mxu0 0.0
        %1220 = vmatprep.subr.mxu0 0.0
        %1221 = vmatpush1.xpose.msra.mxu0 0.0
        %1222 = vmatprep.subr.mxu0 0.0
        %1223 = vmatpush1.xpose.msra.mxu0 0.0
        %1224 = vmatprep.subr.mxu0 0.0
        %1225 = vmatpush1.xpose.msra.mxu0 0.0
        %1226 = vmatprep.subr.mxu0 0.0
        %1227 = vmatpush1.xpose.msra.mxu0 0.0
        %1228 = vmatprep.subr.mxu0 0.0
        %1229 = vmatpush1.xpose.msra.mxu0 0.0
        %1230 = vmatprep.subr.mxu0 0.0
        %1231 = vmatpush1.xpose.msra.mxu0 0.0
        %1232 = vmatprep.subr.mxu0 0.0
        %1233 = vmatpush1.xpose.msra.mxu0 0.0
        %1234 = vmatprep.subr.mxu0 0.0
        %1235 = vmatpush1.xpose.msra.mxu0 0.0
        %1236 = vmatprep.subr.mxu0 0.0
        %1237 = vmatpush1.xpose.msra.mxu0 0.0
        %1238 = vmatprep.subr.mxu0 0.0
        %1239 = vmatpush1.xpose.msra.mxu0 0.0
        %1240 = vmatprep.subr.mxu0 0.0
        %1241 = vmatpush1.xpose.msra.mxu0 0.0
        %1242 = vmatprep.subr.mxu0 0.0
        %1243 = vmatpush1.xpose.msra.mxu0 0.0
        %1244 = vmatprep.subr.mxu0 0.0
        %1245 = vmatpush1.xpose.msra.mxu0 0.0
        %1246 = vmatprep.subr.mxu0 0.0
        %1247 = vmatpush1.xpose.msra.mxu0 0.0
        %1248 = vmatprep.subr.mxu0 0.0
        %1249 = vmatpush1.xpose.msra.mxu0 %v1216
        %1250 = vmatprep.subr.mxu0 0.0
        %1251 = vmatpush2.xpose.msra.mxu0 0.0
        %1252 = vmatprep.subr.mxu0 0.0
        %1253 = vmatpush2.xpose.msra.mxu0 0.0
        %1254 = vmatprep.subr.mxu0 0.0
        %1255 = vmatpush2.xpose.msra.mxu0 0.0
        %1256 = vmatprep.subr.mxu0 0.0
        %1257 = vmatpush2.xpose.msra.mxu0 0.0
        %1258 = vmatprep.subr.mxu0 0.0
        %1259 = vmatpush2.xpose.msra.mxu0 0.0
        %1260 = vmatprep.subr.mxu0 0.0
        %1261 = vmatpush2.xpose.msra.mxu0 0.0
        %1262 = vmatprep.subr.mxu0 0.0
        %1263 = vmatpush2.xpose.msra.mxu0 0.0
        %1264 = vmatprep.subr.mxu0 0.0
        %1265 = vmatpush2.xpose.msra.mxu0 0.0
        %1266 = vmatprep.subr.mxu0 0.0
        %1267 = vmatpush2.xpose.msra.mxu0 0.0
        %1268 = vmatprep.subr.mxu0 0.0
        %1269 = vmatpush2.xpose.msra.mxu0 0.0
        %1270 = vmatprep.subr.mxu0 0.0
        %1271 = vmatpush2.xpose.msra.mxu0 0.0
        %1272 = vmatprep.subr.mxu0 0.0
        %1273 = vmatpush2.xpose.msra.mxu0 0.0
        %1274 = vmatprep.subr.mxu0 0.0
        %1275 = vmatpush2.xpose.msra.mxu0 0.0
        %1276 = vmatprep.subr.mxu0 0.0
        %1277 = vmatpush2.xpose.msra.mxu0 0.0
        %1278 = vmatprep.subr.mxu0 0.0
        %1279 = vmatpush2.xpose.msra.mxu0 0.0
        %1280 = vmatprep.subr.mxu0 0.0
        %1281 = vmatpush2.xpose.msra.mxu0 0.0
        %1282 = vmatprep.mubr.f32.mxu0 0.0
        %1283 = vmatmul.mubr.f32.gmra.mxu0 %v1214
        %v1284 = vpop.f32.mrf.mxu0
        %v1285 = vadd.f32 %v1209, %v1284
        %v1286 = vpop.f32.mrf.mxu0
        %1287 = vdwg.mxu0
        %v1288 = vsel %vm488, %v1285, -inf
        %1289 = vmax.xlane.f32.xlu0 %v1288
        %v1290 = vpop.xlane.xlu0 %1289
        %v1291 = vsub.f32 %v1285, %v1290
        %v1292 = vmul.f32 %v1291, 1.442695
        %v1293 = vpow.pop %v1292
        %v1294 = vsel %vm488, %v1293, 0.0
        %1295 = vadd.xlane.f32.xlu0 %v1294
        %v1296 = vpop.xlane.xlu0 %1295
        %v1297 = vrcp.pop %v1296
        %v1298 = vmul.f32 %v1293, %v1297
        %1299 = vrot.lane.b32.xlu0 %v480, 40
        %v1300 = vpop.permute.xlu0 %1299
        %v1303 = vsel %vm488, %v1298, 0
        %1305 = vmatprep.subr.mxu0 0.0
        %1306 = vmatpush1.msra.mxu0 0.0
        %1307 = vmatprep.subr.mxu0 0.0
        %1308 = vmatpush1.msra.mxu0 0.0
        %1309 = vmatprep.subr.mxu0 0.0
        %1310 = vmatpush1.msra.mxu0 0.0
        %1311 = vmatprep.subr.mxu0 0.0
        %1312 = vmatpush1.msra.mxu0 0.0
        %1313 = vmatprep.subr.mxu0 0.0
        %1314 = vmatpush1.msra.mxu0 0.0
        %1315 = vmatprep.subr.mxu0 0.0
        %1316 = vmatpush1.msra.mxu0 0.0
        %1317 = vmatprep.subr.mxu0 0.0
        %1318 = vmatpush1.msra.mxu0 0.0
        %1319 = vmatprep.subr.mxu0 0.0
        %1320 = vmatpush1.msra.mxu0 0.0
        %1321 = vmatprep.subr.mxu0 0.0
        %1322 = vmatpush1.msra.mxu0 0.0
        %1323 = vmatprep.subr.mxu0 0.0
        %1324 = vmatpush1.msra.mxu0 0.0
        %1325 = vmatprep.subr.mxu0 0.0
        %1326 = vmatpush1.msra.mxu0 0.0
        %1327 = vmatprep.subr.mxu0 0.0
        %1328 = vmatpush1.msra.mxu0 0.0
        %1329 = vmatprep.subr.mxu0 0.0
        %1330 = vmatpush1.msra.mxu0 0.0
        %1331 = vmatprep.subr.mxu0 0.0
        %1332 = vmatpush1.msra.mxu0 0.0
        %1333 = vmatprep.subr.mxu0 0.0
        %1334 = vmatpush1.msra.mxu0 0.0
        %1335 = vmatprep.subr.mxu0 0.0
        %1336 = vmatpush1.msra.mxu0 %v1300
        %1337 = vmatprep.subr.mxu0 0.0
        %1338 = vmatpush2.msra.mxu0 0.0
        %1339 = vmatprep.subr.mxu0 0.0
        %1340 = vmatpush2.msra.mxu0 0.0
        %1341 = vmatprep.subr.mxu0 0.0
        %1342 = vmatpush2.msra.mxu0 0.0
        %1343 = vmatprep.subr.mxu0 0.0
        %1344 = vmatpush2.msra.mxu0 0.0
        %1345 = vmatprep.subr.mxu0 0.0
        %1346 = vmatpush2.msra.mxu0 0.0
        %1347 = vmatprep.subr.mxu0 0.0
        %1348 = vmatpush2.msra.mxu0 0.0
        %1349 = vmatprep.subr.mxu0 0.0
        %1350 = vmatpush2.msra.mxu0 0.0
        %1351 = vmatprep.subr.mxu0 0.0
        %1352 = vmatpush2.msra.mxu0 0.0
        %1353 = vmatprep.subr.mxu0 0.0
        %1354 = vmatpush2.msra.mxu0 0.0
        %1355 = vmatprep.subr.mxu0 0.0
        %1356 = vmatpush2.msra.mxu0 0.0
        %1357 = vmatprep.subr.mxu0 0.0
        %1358 = vmatpush2.msra.mxu0 0.0
        %1359 = vmatprep.subr.mxu0 0.0
        %1360 = vmatpush2.msra.mxu0 0.0
        %1361 = vmatprep.subr.mxu0 0.0
        %1362 = vmatpush2.msra.mxu0 0.0
        %1363 = vmatprep.subr.mxu0 0.0
        %1364 = vmatpush2.msra.mxu0 0.0
        %1365 = vmatprep.subr.mxu0 0.0
        %1366 = vmatpush2.msra.mxu0 0.0
        %1367 = vmatprep.subr.mxu0 0.0
        %1368 = vmatpush2.msra.mxu0 0.0
        %1369 = vmatprep.mubr.f32.mxu0 0.0
        %1370 = vmatmul.mubr.f32.gmra.mxu0 %v1303
        %v1371 = vpop.f32.mrf.mxu0
        %v1372 = vadd.f32 0.0, %v1371
        %v1373 = vpop.f32.mrf.mxu0
        %1374 = vdwg.mxu0
        %v1375 = vld [vmem:[#allocation5 + $0x18] sm:$0xff]
        %v1377 = vsel %vm488, %v1372, 0
        %1379 = vmatprep.subr.mxu0 0.0
        %1380 = vmatpush1.msra.mxu0 0.0
        %1381 = vmatprep.subr.mxu0 0.0
        %1382 = vmatpush1.msra.mxu0 0.0
        %1383 = vmatprep.subr.mxu0 0.0
        %1384 = vmatpush1.msra.mxu0 0.0
        %1385 = vmatprep.subr.mxu0 0.0
        %1386 = vmatpush1.msra.mxu0 0.0
        %1387 = vmatprep.subr.mxu0 0.0
        %1388 = vmatpush1.msra.mxu0 0.0
        %1389 = vmatprep.subr.mxu0 0.0
        %1390 = vmatpush1.msra.mxu0 0.0
        %1391 = vmatprep.subr.mxu0 0.0
        %1392 = vmatpush1.msra.mxu0 0.0
        %1393 = vmatprep.subr.mxu0 0.0
        %1394 = vmatpush1.msra.mxu0 0.0
        %1395 = vmatprep.subr.mxu0 0.0
        %1396 = vmatpush1.msra.mxu0 0.0
        %1397 = vmatprep.subr.mxu0 0.0
        %1398 = vmatpush1.msra.mxu0 0.0
        %1399 = vmatprep.subr.mxu0 0.0
        %1400 = vmatpush1.msra.mxu0 0.0
        %1401 = vmatprep.subr.mxu0 0.0
        %1402 = vmatpush1.msra.mxu0 0.0
        %1403 = vmatprep.subr.mxu0 0.0
        %1404 = vmatpush1.msra.mxu0 0.0
        %1405 = vmatprep.subr.mxu0 0.0
        %1406 = vmatpush1.msra.mxu0 0.0
        %1407 = vmatprep.subr.mxu0 0.0
        %1408 = vmatpush1.msra.mxu0 0.0
        %1409 = vmatprep.subr.mxu0 0.0
        %1410 = vmatpush1.msra.mxu0 %v1375
        %1411 = vmatprep.subr.mxu0 0.0
        %1412 = vmatpush2.msra.mxu0 0.0
        %1413 = vmatprep.subr.mxu0 0.0
        %1414 = vmatpush2.msra.mxu0 0.0
        %1415 = vmatprep.subr.mxu0 0.0
        %1416 = vmatpush2.msra.mxu0 0.0
        %1417 = vmatprep.subr.mxu0 0.0
        %1418 = vmatpush2.msra.mxu0 0.0
        %1419 = vmatprep.subr.mxu0 0.0
        %1420 = vmatpush2.msra.mxu0 0.0
        %1421 = vmatprep.subr.mxu0 0.0
        %1422 = vmatpush2.msra.mxu0 0.0
        %1423 = vmatprep.subr.mxu0 0.0
        %1424 = vmatpush2.msra.mxu0 0.0
        %1425 = vmatprep.subr.mxu0 0.0
        %1426 = vmatpush2.msra.mxu0 0.0
        %1427 = vmatprep.subr.mxu0 0.0
        %1428 = vmatpush2.msra.mxu0 0.0
        %1429 = vmatprep.subr.mxu0 0.0
        %1430 = vmatpush2.msra.mxu0 0.0
        %1431 = vmatprep.subr.mxu0 0.0
        %1432 = vmatpush2.msra.mxu0 0.0
        %1433 = vmatprep.subr.mxu0 0.0
        %1434 = vmatpush2.msra.mxu0 0.0
        %1435 = vmatprep.subr.mxu0 0.0
        %1436 = vmatpush2.msra.mxu0 0.0
        %1437 = vmatprep.subr.mxu0 0.0
        %1438 = vmatpush2.msra.mxu0 0.0
        %1439 = vmatprep.subr.mxu0 0.0
        %1440 = vmatpush2.msra.mxu0 0.0
        %1441 = vmatprep.subr.mxu0 0.0
        %1442 = vmatpush2.msra.mxu0 0.0
        %1443 = vmatprep.mubr.f32.mxu0 0.0
        %1444 = vmatmul.mubr.f32.gmra.mxu0 %v1377
        %v1445 = vpop.f32.mrf.mxu0
        %v1446 = vadd.f32 0.0, %v1445
        %v1447 = vpop.f32.mrf.mxu0
        %1448 = vdwg.mxu0
        %v1449 = vadd.f32 %v1207, %v1446
        %v1450 = vld [vmem:[%s8] sm:$0x1]
        %v1451 = vlaneseq
        %v1452 = vshrl.u32 %v1451, 7
        %v1453 = vsub.s32 0, %v1452
        %v1454 = vrot.slane %v1450, %v1453
        %v1455 = vadd.f32 %v1449, %v1454
        %v1456 = vadd.f32 %v397, %v1455
        %v1457 = vsel %vm409, %v1456, 0.0
        %1458 = vadd.xlane.f32.xlu0 %v1457
        %v1459 = vpop.xlane.xlu0 %1458
        %v1460 = vrcp.pop 32.0
        %v1461 = vmul.f32 %v1459, %v1460
        %v1462 = vsub.f32 %v1456, %v1461
        %v1463 = vmul.f32 %v1462, %v1462
        %v1464 = vsel %vm409, %v1463, 0.0
        %1465 = vadd.xlane.f32.xlu0 %v1464
        %v1466 = vpop.xlane.xlu0 %1465
        %v1467 = vmul.f32 %v1466, %v1460
        %v1468 = vadd.f32 %v1467, 1e-05
        %v1469 = vrsqrt.pop %v1468
        %v1470 = vmul.f32 %v1462, %v1469
        %v1471 = vld [vmem:[%s8 + $0x2] sm:$0x1]
        %v1472 = vlaneseq
        %v1473 = vshrl.u32 %v1472, 7
        %v1474 = vsub.s32 0, %v1473
        %v1475 = vrot.slane %v1471, %v1474
        %v1476 = vmul.f32 %v1470, %v1475
        %v1477 = vld [vmem:[%s8 + $0x3] sm:$0x1]
        %v1478 = vlaneseq
        %v1479 = vshrl.u32 %v1478, 7
        %v1480 = vsub.s32 0, %v1479
        %v1481 = vrot.slane %v1477, %v1480
        %v1482 = vadd.f32 %v1476, %v1481
        %v1483 = vld [vmem:[#allocation7] sm:$0xff]
        %v1484 = vld [vmem:[#allocation7 + $0x8] sm:$0xff]
        %v1485 = vld [vmem:[#allocation7 + $0x10] sm:$0xff]
        %v1486 = vld [vmem:[#allocation7 + $0x18] sm:$0xff]
        %v1487 = vld [vmem:[%s6] sm:$0x1]
        %v1489 = vlaneseq
        %v1490 = vshrl.u32 %v1489, 7
        %v1491 = vsub.s32 0, %v1490
        %v1492 = vrot.slane %v1487, %v1491
        %v1495 = vsel %vm409, %v1482, 0
        %1497 = vmatprep.subr.mxu0 0.0
        %1498 = vmatpush1.msra.mxu0 0.0
        %1499 = vmatprep.subr.mxu0 0.0
        %1500 = vmatpush1.msra.mxu0 0.0
        %1501 = vmatprep.subr.mxu0 0.0
        %1502 = vmatpush1.msra.mxu0 0.0
        %1503 = vmatprep.subr.mxu0 0.0
        %1504 = vmatpush1.msra.mxu0 0.0
        %1505 = vmatprep.subr.mxu0 0.0
        %1506 = vmatpush1.msra.mxu0 0.0
        %1507 = vmatprep.subr.mxu0 0.0
        %1508 = vmatpush1.msra.mxu0 0.0
        %1509 = vmatprep.subr.mxu0 0.0
        %1510 = vmatpush1.msra.mxu0 0.0
        %1511 = vmatprep.subr.mxu0 0.0
        %1512 = vmatpush1.msra.mxu0 0.0
        %1513 = vmatprep.subr.mxu0 0.0
        %1514 = vmatpush1.msra.mxu0 0.0
        %1515 = vmatprep.subr.mxu0 0.0
        %1516 = vmatpush1.msra.mxu0 0.0
        %1517 = vmatprep.subr.mxu0 0.0
        %1518 = vmatpush1.msra.mxu0 0.0
        %1519 = vmatprep.subr.mxu0 0.0
        %1520 = vmatpush1.msra.mxu0 0.0
        %1521 = vmatprep.subr.mxu0 0.0
        %1522 = vmatpush1.msra.mxu0 %v1486
        %1523 = vmatprep.subr.mxu0 0.0
        %1524 = vmatpush1.msra.mxu0 %v1485
        %1525 = vmatprep.subr.mxu0 0.0
        %1526 = vmatpush1.msra.mxu0 %v1484
        %1527 = vmatprep.subr.mxu0 0.0
        %1528 = vmatpush1.msra.mxu0 %v1483
        %1529 = vmatprep.subr.mxu0 0.0
        %1530 = vmatpush2.msra.mxu0 0.0
        %1531 = vmatprep.subr.mxu0 0.0
        %1532 = vmatpush2.msra.mxu0 0.0
        %1533 = vmatprep.subr.mxu0 0.0
        %1534 = vmatpush2.msra.mxu0 0.0
        %1535 = vmatprep.subr.mxu0 0.0
        %1536 = vmatpush2.msra.mxu0 0.0
        %1537 = vmatprep.subr.mxu0 0.0
        %1538 = vmatpush2.msra.mxu0 0.0
        %1539 = vmatprep.subr.mxu0 0.0
        %1540 = vmatpush2.msra.mxu0 0.0
        %1541 = vmatprep.subr.mxu0 0.0
        %1542 = vmatpush2.msra.mxu0 0.0
        %1543 = vmatprep.subr.mxu0 0.0
        %1544 = vmatpush2.msra.mxu0 0.0
        %1545 = vmatprep.subr.mxu0 0.0
        %1546 = vmatpush2.msra.mxu0 0.0
        %1547 = vmatprep.subr.mxu0 0.0
        %1548 = vmatpush2.msra.mxu0 0.0
        %1549 = vmatprep.subr.mxu0 0.0
        %1550 = vmatpush2.msra.mxu0 0.0
        %1551 = vmatprep.subr.mxu0 0.0
        %1552 = vmatpush2.msra.mxu0 0.0
        %1553 = vmatprep.subr.mxu0 0.0
        %1554 = vmatpush2.msra.mxu0 0.0
        %1555 = vmatprep.subr.mxu0 0.0
        %1556 = vmatpush2.msra.mxu0 0.0
        %1557 = vmatprep.subr.mxu0 0.0
        %1558 = vmatpush2.msra.mxu0 0.0
        %1559 = vmatprep.subr.mxu0 0.0
        %1560 = vmatpush2.msra.mxu0 0.0
        %1561 = vmatprep.mubr.f32.mxu0 0.0
        %1562 = vmatmul.mubr.f32.gmra.mxu0 %v1495
        %v1563 = vpop.f32.mrf.mxu0
        %v1564 = vadd.f32 %v1492, %v1563
        %v1565 = vpop.f32.mrf.mxu0
        %1566 = vdwg.mxu0
        %v1567 = vmax.f32 %v1564, 0.0
        %v1568 = vld [vmem:[%s7] sm:$0xff]
        %v1569 = vld [vmem:[%s7 + $0x8] sm:$0xff]
        %v1570 = vld [vmem:[%s7 + $0x10] sm:$0xff]
        %v1571 = vld [vmem:[%s7 + $0x18] sm:$0xff]
        %v1572 = vld [vmem:[%s7 + $0x20] sm:$0xff]
        %v1573 = vld [vmem:[%s7 + $0x28] sm:$0xff]
        %v1574 = vld [vmem:[%s7 + $0x30] sm:$0xff]
        %v1575 = vld [vmem:[%s7 + $0x38] sm:$0xff]
        %v1576 = vld [vmem:[%s8 + $0x1] sm:$0x1]
        %v1577 = vlaneseq
        %v1578 = vshrl.u32 %v1577, 7
        %v1579 = vsub.s32 0, %v1578
        %v1580 = vrot.slane %v1576, %v1579
        %vm1581 = vcmask 523264
        %v1583 = vsel %vm1581, %v1567, 0
        %1585 = vmatprep.subr.mxu0 0.0
        %1586 = vmatpush1.msra.mxu0 0.0
        %1587 = vmatprep.subr.mxu0 0.0
        %1588 = vmatpush1.msra.mxu0 0.0
        %1589 = vmatprep.subr.mxu0 0.0
        %1590 = vmatpush1.msra.mxu0 0.0
        %1591 = vmatprep.subr.mxu0 0.0
        %1592 = vmatpush1.msra.mxu0 0.0
        %1593 = vmatprep.subr.mxu0 0.0
        %1594 = vmatpush1.msra.mxu0 0.0
        %1595 = vmatprep.subr.mxu0 0.0
        %1596 = vmatpush1.msra.mxu0 0.0
        %1597 = vmatprep.subr.mxu0 0.0
        %1598 = vmatpush1.msra.mxu0 0.0
        %1599 = vmatprep.subr.mxu0 0.0
        %1600 = vmatpush1.msra.mxu0 0.0
        %1601 = vmatprep.subr.mxu0 0.0
        %1602 = vmatpush1.msra.mxu0 %v1575
        %1603 = vmatprep.subr.mxu0 0.0
        %1604 = vmatpush1.msra.mxu0 %v1574
        %1605 = vmatprep.subr.mxu0 0.0
        %1606 = vmatpush1.msra.mxu0 %v1573
        %1607 = vmatprep.subr.mxu0 0.0
        %1608 = vmatpush1.msra.mxu0 %v1572
        %1609 = vmatprep.subr.mxu0 0.0
        %1610 = vmatpush1.msra.mxu0 %v1571
        %1611 = vmatprep.subr.mxu0 0.0
        %1612 = vmatpush1.msra.mxu0 %v1570
        %1613 = vmatprep.subr.mxu0 0.0
        %1614 = vmatpush1.msra.mxu0 %v1569
        %1615 = vmatprep.subr.mxu0 0.0
        %1616 = vmatpush1.msra.mxu0 %v1568
        %1617 = vmatprep.subr.mxu0 0.0
        %1618 = vmatpush2.msra.mxu0 0.0
        %1619 = vmatprep.subr.mxu0 0.0
        %1620 = vmatpush2.msra.mxu0 0.0
        %1621 = vmatprep.subr.mxu0 0.0
        %1622 = vmatpush2.msra.mxu0 0.0
        %1623 = vmatprep.subr.mxu0 0.0
        %1624 = vmatpush2.msra.mxu0 0.0
        %1625 = vmatprep.subr.mxu0 0.0
        %1626 = vmatpush2.msra.mxu0 0.0
        %1627 = vmatprep.subr.mxu0 0.0
        %1628 = vmatpush2.msra.mxu0 0.0
        %1629 = vmatprep.subr.mxu0 0.0
        %1630 = vmatpush2.msra.mxu0 0.0
        %1631 = vmatprep.subr.mxu0 0.0
        %1632 = vmatpush2.msra.mxu0 0.0
        %1633 = vmatprep.subr.mxu0 0.0
        %1634 = vmatpush2.msra.mxu0 0.0
        %1635 = vmatprep.subr.mxu0 0.0
        %1636 = vmatpush2.msra.mxu0 0.0
        %1637 = vmatprep.subr.mxu0 0.0
        %1638 = vmatpush2.msra.mxu0 0.0
        %1639 = vmatprep.subr.mxu0 0.0
        %1640 = vmatpush2.msra.mxu0 0.0
        %1641 = vmatprep.subr.mxu0 0.0
        %1642 = vmatpush2.msra.mxu0 0.0
        %1643 = vmatprep.subr.mxu0 0.0
        %1644 = vmatpush2.msra.mxu0 0.0
        %1645 = vmatprep.subr.mxu0 0.0
        %1646 = vmatpush2.msra.mxu0 0.0
        %1647 = vmatprep.subr.mxu0 0.0
        %1648 = vmatpush2.msra.mxu0 0.0
        %1649 = vmatprep.mubr.f32.mxu0 0.0
        %1650 = vmatmul.mubr.f32.gmra.mxu0 %v1583
        %v1651 = vpop.f32.mrf.mxu0
        %v1652 = vadd.f32 %v1580, %v1651
        %v1653 = vpop.f32.mrf.mxu0
        %1654 = vdwg.mxu0
        %v1655 = vadd.f32 %v1482, %v1652
        %v1656 = vsel %vm409, %v1655, 0.0
        %1657 = vadd.xlane.f32.xlu0 %v1656
        %v1658 = vpop.xlane.xlu0 %1657
        %v1659 = vmul.f32 %v1658, %v1460
        %v1660 = vsub.f32 %v1655, %v1659
        %v1661 = vmul.f32 %v1660, %v1660
        %v1662 = vsel %vm409, %v1661, 0.0
        %1663 = vadd.xlane.f32.xlu0 %v1662
        %v1664 = vpop.xlane.xlu0 %1663
        %v1665 = vmul.f32 %v1664, %v1460
        %v1666 = vadd.f32 %v1665, 1e-05
        %v1667 = vrsqrt.pop %v1666
        %v1668 = vmul.f32 %v1660, %v1667
        %v1669 = vld [vmem:[%s8 + $0x4] sm:$0x1]
        %v1670 = vlaneseq
        %v1671 = vshrl.u32 %v1670, 7
        %v1672 = vsub.s32 0, %v1671
        %v1673 = vrot.slane %v1669, %v1672
        %v1674 = vmul.f32 %v1668, %v1673
        %v1675 = vld [vmem:[%s8 + $0x5] sm:$0x1]
        %v1676 = vlaneseq
        %v1677 = vshrl.u32 %v1676, 7
        %v1678 = vsub.s32 0, %v1677
        %v1679 = vrot.slane %v1675, %v1678
        %v1680 = vadd.f32 %v1674, %v1679
        %1681 = vst.msk [vmem:[%s391] sm:$0xff] %vm409, %v1680
        %s1682 = sand.u32 %s234, 1
        %s1683 = scalar_lea.sflag [#allocation4], %s1682
        %s1684 = sand.u32 %s234, 1
        %s1685 = smul.addr %s1684, 8
        %s1686 = scalar_lea.vmem [#allocation8], %s1685
        // Predicated region
        $region69: #{tpu_custom_call.1} parent=55 // pred_check
          %p1687 = pneg %p244
        $region70: #{tpu_custom_call.1} parent=55 // pred_check_branch
          %1689 = sbr.rel (%p1687) target = $region72
        $region71: #{tpu_custom_call.1} parent=55 // pred_region
          %s1691 = ssub.s32 128, 128
          %1692 = vsyncadd %s1683, %s1691
          %s1693 = smul.addr %s27, 128
          %s1694 = scalar_lea.hbm %s9, %s1693
          %s1696 = sshll.u32 %s1686, 4
          %s1697 = int_to_ptr.vmem [resolvable:$true] %s1696
          %1699 = dma.vmem_to_hbm [thread:$0]  %s1697, 128, %s1694, %s1683
        $region72: #{tpu_custom_call.1} parent=55 // pred_fallthru
          _
      $region56: #{tpu_custom_call.1} parent=5 // pred_fallthru
        _
      %p1700 = scmp.le.s32.totalorder 2, %s22
      // Predicated region
      $region73: #{tpu_custom_call.1} parent=5 // pred_check
        %p1701 = pneg %p1700
      $region74: #{tpu_custom_call.1} parent=5 // pred_check_branch
        %1703 = sbr.rel (%p1701) target = $region76
      $region75: #{tpu_custom_call.1} parent=5 // pred_region
        %s1704 = ssub.s32 %s22, 2
        // Predicated region
        $region77: #{tpu_custom_call.1} parent=75 // pred_check
          %p1705 = pneg %p250
        $region78: #{tpu_custom_call.1} parent=75 // pred_check_branch
          %1707 = sbr.rel (%p1705) target = $region80
        $region79: #{tpu_custom_call.1} parent=75 // pred_region
          %s1708 = sand.u32 %s235, 1
          %s1709 = scalar_lea.sflag [#allocation4], %s1708
          %s1710 = sand.u32 %s235, 1
          %s1711 = smul.addr %s1710, 8
          %s1712 = scalar_lea.vmem [#allocation8], %s1711
          %1713 = dma.done %s1709, 128
        $region80: #{tpu_custom_call.1} parent=75 // pred_fallthru
          _
      $region76: #{tpu_custom_call.1} parent=5 // pred_fallthru
        _
    $region6: #{tpu_custom_call.1} parent=1 // loop_footer
      %s26 = sadd.s32 1, %s22
    $region7: #{tpu_custom_call.1} parent=1 // loop_footer_branch
      %21 = sbr.rel target = $region3
    $region8: #{tpu_custom_call.1} parent=1 // loop_exit
      _
    %1714 = vsyncpa [#allocation3], 1
    %s1715 = scalar_lea.sflag [#allocation3], 1
    %1716 = vsyncpa %s1715, 1
    %1717 = vsyncpa [#allocation6], 1
    %1718 = vsyncpa [#allocation4], 1
    %s1719 = scalar_lea.sflag [#allocation4], 1
    %1720 = vsyncpa %s1719, 1

// kernel: tpu_custom_call.1
$region0: #{tpu_custom_call.1}
  #allocation0 [shape = 'u32[]', space=smem, size = 0x4, offset = 0x4, fixed_abs, tag = 'smem constant byte address 0x4 - core index']
  #allocation1 [shape = 'u32[144,128]{1,0:T(1,128)}', space=vmem, size = 0x12000, scoped, tag = 'internal scratch']
  %s0 = inlined_call_operand.hbm [shape: f32[16,32], index: 0, kind: input, shape index: {}]
  %s1 = inlined_call_operand.vmem [shape: f32[2,4,8,8], index: 1, kind: input, shape index: {}]
  %s2 = inlined_call_operand.vmem [shape: f32[32,96], index: 2, kind: input, shape index: {}]
  %s3 = inlined_call_operand.vmem [shape: f32[1,96], index: 3, kind: input, shape index: {}]
  %s4 = inlined_call_operand.hbm [shape: f32[32,32], index: 4, kind: input, shape index: {}]
  %s5 = inlined_call_operand.hbm [shape: f32[32,64], index: 5, kind: input, shape index: {}]
  %s6 = inlined_call_operand.vmem [shape: f32[1,64], index: 6, kind: input, shape index: {}]
  %s7 = inlined_call_operand.vmem [shape: f32[64,32], index: 7, kind: input, shape index: {}]
  %s8 = inlined_call_operand.vmem [shape: f32[6,32], index: 8, kind: input, shape index: {}]
  %s9 = inlined_call_operand.hbm [shape: f32[16,32], index: 9, kind: output, shape index: {}]
  %s10 = sld [smem:[#allocation0]]
  $region81: #{tpu_custom_call.1} parent=0
    _
  %s12 = ssub.s32 1, %s10
  %s13 = scalar_select 0, %s12, %s10
  $region1: #{tpu_custom_call.1} parent=0
    #allocation2 [shape = 'u8[8192]{0}', space=vmem, size = 0x2000, scoped, tag = 'input window, operand 0']
    #allocation3 [shape = 's32[2]{0}', space=sflag, size = 0x8, scoped, tag = 'scoped memory for tpu_custom_call.1']
    #allocation4 [shape = 's32[2]{0}', space=sflag, size = 0x8, scoped, tag = 'scoped memory for tpu_custom_call.1']
    #allocation5 [shape = 'u8[16384]{0}', space=vmem, size = 0x4000, scoped, tag = 'input window, operand 4, single buffered']
    #allocation6 [shape = 's32[1]{0}', space=sflag, size = 0x4, scoped, tag = 'scoped memory for tpu_custom_call.1']
    #allocation7 [shape = 'u8[16384]{0}', space=vmem, size = 0x4000, scoped, tag = 'input window, operand 5, single buffered']
    #allocation8 [shape = 'u8[8192]{0}', space=vmem, size = 0x2000, scoped, tag = 'output window, operand 0']
    %14 = vsyncpa [#allocation3], 0
    %s15 = scalar_lea.sflag [#allocation3], 1
    %16 = vsyncpa %s15, 0
    %17 = vsyncpa [#allocation6], 0
    %18 = vsyncpa [#allocation4], 0
    %s19 = scalar_lea.sflag [#allocation4], 1
    %20 = vsyncpa %s19, 0
    loop: start=0, step=1, limit=4
    $region2: #{tpu_custom_call.1} parent=1 // loop_pre_header
      _
    $region3: #{tpu_custom_call.1} parent=1 // loop_header
      %s22 = sphi 0, %s26
      %p23 = scmp.ge.s32.totalorder %s22, 4
      %s32 = sphi 0, %s34
      %s35 = sphi 0, %s32
      %s36 = sphi 0, %s35
      %s52 = sphi 0, %s36
      %s58 = sphi 0, %s60
      %s61 = sphi 0, %s58
      %s62 = sphi 0, %s61
      %s78 = sphi 0, %s62
      %s82 = sphi 0, %s82
      %s84 = sphi 0, %s82
      %s85 = sphi 0, %s84
      %s99 = sphi 0, %s85
      %s103 = sphi 0, %s103
      %s105 = sphi 0, %s103
      %s106 = sphi 0, %s105
      %s120 = sphi 0, %s106
      %s124 = sphi 0, %s124
      %s126 = sphi 0, %s124
      %s127 = sphi 0, %s126
      %s141 = sphi 0, %s127
      %s145 = sphi 0, %s145
      %s147 = sphi 0, %s145
      %s148 = sphi 0, %s147
      %s162 = sphi 0, %s148
      %s166 = sphi 0, %s166
      %s168 = sphi 0, %s166
      %s169 = sphi 0, %s168
      %s183 = sphi 0, %s169
      %s187 = sphi 0, %s187
      %s189 = sphi 0, %s187
      %s190 = sphi 0, %s189
      %s204 = sphi 0, %s190
      %s208 = sphi 0, %s208
      %s210 = sphi 0, %s208
      %s211 = sphi 0, %s210
      %s225 = sphi 0, %s211
      %s231 = sphi 0, %s233
      %s234 = sphi 0, %s231
      %s235 = sphi 0, %s234
      %s251 = sphi 0, %s235
    $region4: #{tpu_custom_call.1} parent=1 // loop_header_branch
      %25 = sbr.rel (%p23) target = $region8
    $region5: #{tpu_custom_call.1} parent=1 // loop_body
      %s27 = ssub.s32 %s22, 1
      %s28 = ssub.s32 %s22, 2
      %s29 = sadd.s32 %s22, 1
      %s30 = ssub.s32 %s22, %s29
      %p31 = scmp.eq.s32.totalorder %s30, 0
      %s33 = sadd.s32 %s32, 1
      %s34 = scalar_select %p31, %s32, %s33
      %p37 = pneg %p31
      %p38 = scmp.eq.s32.totalorder %s22, 1
      %p39 = por %p37, %p38
      %p40 = scmp.ne.s32.totalorder %s32, %s35
      %p41 = scmp.eq.s32.totalorder %s22, 0
      %p42 = por %p40, %p41
      %p43 = scmp.ne.s32.totalorder %s32, %s35
      %p44 = scmp.eq.s32.totalorder %s27, 1
      %p45 = por %p43, %p44
      %p46 = scmp.ne.s32.totalorder %s35, %s36
      %p47 = scmp.eq.s32.totalorder %s27, 0
      %p48 = por %p46, %p47
      %p49 = scmp.ne.s32.totalorder %s35, %s36
      %p50 = scmp.eq.s32.totalorder %s28, 1
      %p51 = por %p49, %p50
      %p53 = scmp.ne.s32.totalorder %s36, %s52
      %p54 = scmp.eq.s32.totalorder %s28, 0
      %p55 = por %p53, %p54
      %s56 = ssub.s32 %s22, %s29
      %p57 = scmp.eq.s32.totalorder %s56, 0
      %s59 = sadd.s32 %s58, 1
      %s60 = scalar_select %p57, %s58, %s59
      %p63 = pneg %p57
      %p64 = scmp.eq.s32.totalorder %s22, 1
      %p65 = por %p63, %p64
      %p66 = scmp.ne.s32.totalorder %s58, %s61
      %p67 = scmp.eq.s32.totalorder %s22, 0
      %p68 = por %p66, %p67
      %p69 = scmp.ne.s32.totalorder %s58, %s61
      %p70 = scmp.eq.s32.totalorder %s27, 1
      %p71 = por %p69, %p70
      %p72 = scmp.ne.s32.totalorder %s61, %s62
      %p73 = scmp.eq.s32.totalorder %s27, 0
      %p74 = por %p72, %p73
      %p75 = scmp.ne.s32.totalorder %s61, %s62
      %p76 = scmp.eq.s32.totalorder %s28, 1
      %p77 = por %p75, %p76
      %p79 = scmp.ne.s32.totalorder %s62, %s78
      %p80 = scmp.eq.s32.totalorder %s28, 0
      %p81 = por %p79, %p80
      %s83 = sadd.s32 %s82, 1
      %p86 = scmp.eq.s32.totalorder %s22, 1
      %p87 = scmp.ne.s32.totalorder %s82, %s84
      %p88 = scmp.eq.s32.totalorder %s22, 0
      %p89 = por %p87, %p88
      %p90 = scmp.ne.s32.totalorder %s82, %s84
      %p91 = scmp.eq.s32.totalorder %s27, 1
      %p92 = por %p90, %p91
      %p93 = scmp.ne.s32.totalorder %s84, %s85
      %p94 = scmp.eq.s32.totalorder %s27, 0
      %p95 = por %p93, %p94
      %p96 = scmp.ne.s32.totalorder %s84, %s85
      %p97 = scmp.eq.s32.totalorder %s28, 1
      %p98 = por %p96, %p97
      %p100 = scmp.ne.s32.totalorder %s85, %s99
      %p101 = scmp.eq.s32.totalorder %s28, 0
      %p102 = por %p100, %p101
      %s104 = sadd.s32 %s103, 1
      %p107 = scmp.eq.s32.totalorder %s22, 1
      %p108 = scmp.ne.s32.totalorder %s103, %s105
      %p109 = scmp.eq.s32.totalorder %s22, 0
      %p110 = por %p108, %p109
      %p111 = scmp.ne.s32.totalorder %s103, %s105
      %p112 = scmp.eq.s32.totalorder %s27, 1
      %p113 = por %p111, %p112
      %p114 = scmp.ne.s32.totalorder %s105, %s106
      %p115 = scmp.eq.s32.totalorder %s27, 0
      %p116 = por %p114, %p115
      %p117 = scmp.ne.s32.totalorder %s105, %s106
      %p118 = scmp.eq.s32.totalorder %s28, 1
      %p119 = por %p117, %p118
      %p121 = scmp.ne.s32.totalorder %s106, %s120
      %p122 = scmp.eq.s32.totalorder %s28, 0
      %p123 = por %p121, %p122
      %s125 = sadd.s32 %s124, 1
      %p128 = scmp.eq.s32.totalorder %s22, 1
      %p129 = scmp.ne.s32.totalorder %s124, %s126
      %p130 = scmp.eq.s32.totalorder %s22, 0
      %p131 = por %p129, %p130
      %p132 = scmp.ne.s32.totalorder %s124, %s126
      %p133 = scmp.eq.s32.totalorder %s27, 1
      %p134 = por %p132, %p133
      %p135 = scmp.ne.s32.totalorder %s126, %s127
      %p136 = scmp.eq.s32.totalorder %s27, 0
      %p137 = por %p135, %p136
      %p138 = scmp.ne.s32.totalorder %s126, %s127
      %p139 = scmp.eq.s32.totalorder %s28, 1
      %p140 = por %p138, %p139
      %p142 = scmp.ne.s32.totalorder %s127, %s141
      %p143 = scmp.eq.s32.totalorder %s28, 0
      %p144 = por %p142, %p143
      %s146 = sadd.s32 %s145, 1
      %p149 = scmp.eq.s32.totalorder %s22, 1
      %p150 = scmp.ne.s32.totalorder %s145, %s147
      %p151 = scmp.eq.s32.totalorder %s22, 0
      %p152 = por %p150, %p151
      %p153 = scmp.ne.s32.totalorder %s145, %s147
      %p154 = scmp.eq.s32.totalorder %s27, 1
      %p155 = por %p153, %p154
      %p156 = scmp.ne.s32.totalorder %s147, %s148
      %p157 = scmp.eq.s32.totalorder %s27, 0
      %p158 = por %p156, %p157
      %p159 = scmp.ne.s32.totalorder %s147, %s148
      %p160 = scmp.eq.s32.totalorder %s28, 1
      %p161 = por %p159, %p160
      %p163 = scmp.ne.s32.totalorder %s148, %s162
      %p164 = scmp.eq.s32.totalorder %s28, 0
      %p165 = por %p163, %p164
      %s167 = sadd.s32 %s166, 1
      %p170 = scmp.eq.s32.totalorder %s22, 1
      %p171 = scmp.ne.s32.totalorder %s166, %s168
      %p172 = scmp.eq.s32.totalorder %s22, 0
      %p173 = por %p171, %p172
      %p174 = scmp.ne.s32.totalorder %s166, %s168
      %p175 = scmp.eq.s32.totalorder %s27, 1
      %p176 = por %p174, %p175
      %p177 = scmp.ne.s32.totalorder %s168, %s169
      %p178 = scmp.eq.s32.totalorder %s27, 0
      %p179 = por %p177, %p178
      %p180 = scmp.ne.s32.totalorder %s168, %s169
      %p181 = scmp.eq.s32.totalorder %s28, 1
      %p182 = por %p180, %p181
      %p184 = scmp.ne.s32.totalorder %s169, %s183
      %p185 = scmp.eq.s32.totalorder %s28, 0
      %p186 = por %p184, %p185
      %s188 = sadd.s32 %s187, 1
      %p191 = scmp.eq.s32.totalorder %s22, 1
      %p192 = scmp.ne.s32.totalorder %s187, %s189
      %p193 = scmp.eq.s32.totalorder %s22, 0
      %p194 = por %p192, %p193
      %p195 = scmp.ne.s32.totalorder %s187, %s189
      %p196 = scmp.eq.s32.totalorder %s27, 1
      %p197 = por %p195, %p196
      %p198 = scmp.ne.s32.totalorder %s189, %s190
      %p199 = scmp.eq.s32.totalorder %s27, 0
      %p200 = por %p198, %p199
      %p201 = scmp.ne.s32.totalorder %s189, %s190
      %p202 = scmp.eq.s32.totalorder %s28, 1
      %p203 = por %p201, %p202
      %p205 = scmp.ne.s32.totalorder %s190, %s204
      %p206 = scmp.eq.s32.totalorder %s28, 0
      %p207 = por %p205, %p206
      %s209 = sadd.s32 %s208, 1
      %p212 = scmp.eq.s32.totalorder %s22, 1
      %p213 = scmp.ne.s32.totalorder %s208, %s210
      %p214 = scmp.eq.s32.totalorder %s22, 0
      %p215 = por %p213, %p214
      %p216 = scmp.ne.s32.totalorder %s208, %s210
      %p217 = scmp.eq.s32.totalorder %s27, 1
      %p218 = por %p216, %p217
      %p219 = scmp.ne.s32.totalorder %s210, %s211
      %p220 = scmp.eq.s32.totalorder %s27, 0
      %p221 = por %p219, %p220
      %p222 = scmp.ne.s32.totalorder %s210, %s211
      %p223 = scmp.eq.s32.totalorder %s28, 1
      %p224 = por %p222, %p223
      %p226 = scmp.ne.s32.totalorder %s211, %s225
      %p227 = scmp.eq.s32.totalorder %s28, 0
      %p228 = por %p226, %p227
      %s229 = ssub.s32 %s22, %s29
      %p230 = scmp.eq.s32.totalorder %s229, 0
      %s232 = sadd.s32 %s231, 1
      %s233 = scalar_select %p230, %s231, %s232
      %p236 = pneg %p230
      %p237 = scmp.eq.s32.totalorder %s22, 1
      %p238 = por %p236, %p237
      %p239 = scmp.ne.s32.totalorder %s231, %s234
      %p240 = scmp.eq.s32.totalorder %s22, 0
      %p241 = por %p239, %p240
      %p242 = scmp.ne.s32.totalorder %s231, %s234
      %p243 = scmp.eq.s32.totalorder %s27, 1
      %p244 = por %p242, %p243
      %p245 = scmp.ne.s32.totalorder %s234, %s235
      %p246 = scmp.eq.s32.totalorder %s27, 0
      %p247 = por %p245, %p246
      %p248 = scmp.ne.s32.totalorder %s234, %s235
      %p249 = scmp.eq.s32.totalorder %s28, 1
      %p250 = por %p248, %p249
      %p252 = scmp.ne.s32.totalorder %s235, %s251
      %p253 = scmp.eq.s32.totalorder %s28, 0
      %p254 = por %p252, %p253
      %p255 = scmp.le.s32.totalorder 1, %s22
      %p256 = scmp.lt.s32.totalorder %s22, 3
      %p257 = pnand %p255, %p256
      %p258 = pneg %p257
      // Predicated region
      $region9: #{tpu_custom_call.1} parent=5 // pred_check
        _
      $region10: #{tpu_custom_call.1} parent=5 // pred_check_branch
        %260 = sbr.rel (%p257) target = $region12
      $region11: #{tpu_custom_call.1} parent=5 // pred_region
        %s261 = ssub.s32 %s22, 1
        // Predicated region
        $region13: #{tpu_custom_call.1} parent=11 // pred_check
          %p262 = pneg %p95
        $region14: #{tpu_custom_call.1} parent=11 // pred_check_branch
          %264 = sbr.rel (%p262) target = $region16
        $region15: #{tpu_custom_call.1} parent=11 // pred_region
          _
        $region16: #{tpu_custom_call.1} parent=11 // pred_fallthru
          _
        // Predicated region
        $region17: #{tpu_custom_call.1} parent=11 // pred_check
          %p265 = pneg %p116
        $region18: #{tpu_custom_call.1} parent=11 // pred_check_branch
          %267 = sbr.rel (%p265) target = $region20
        $region19: #{tpu_custom_call.1} parent=11 // pred_region
          _
        $region20: #{tpu_custom_call.1} parent=11 // pred_fallthru
          _
        // Predicated region
        $region21: #{tpu_custom_call.1} parent=11 // pred_check
          %p268 = pneg %p137
        $region22: #{tpu_custom_call.1} parent=11 // pred_check_branch
          %270 = sbr.rel (%p268) target = $region24
        $region23: #{tpu_custom_call.1} parent=11 // pred_region
          %s272 = ssub.s32 512, 512
          %273 = vsyncadd [#allocation6], %s272
          %s274 = sshll.u32 [#allocation5], 4
          %s275 = int_to_ptr.vmem [resolvable:$true] %s274
          %280 = dma.hbm_to_vmem [thread:$0]  %s4, 512, %s275, [#allocation6], 128, 128, 8
        $region24: #{tpu_custom_call.1} parent=11 // pred_fallthru
          _
        // Predicated region
        $region25: #{tpu_custom_call.1} parent=11 // pred_check
          %p281 = pneg %p158
        $region26: #{tpu_custom_call.1} parent=11 // pred_check_branch
          %283 = sbr.rel (%p281) target = $region28
        $region27: #{tpu_custom_call.1} parent=11 // pred_region
          %s285 = ssub.s32 512, 512
          %286 = vsyncadd [#allocation6], %s285
          %s287 = sshll.u32 [#allocation7], 4
          %s288 = int_to_ptr.vmem [resolvable:$true] %s287
          %293 = dma.hbm_to_vmem [thread:$0]  %s5, 512, %s288, [#allocation6], 128, 128, 8
        $region28: #{tpu_custom_call.1} parent=11 // pred_fallthru
          _
        // Predicated region
        $region29: #{tpu_custom_call.1} parent=11 // pred_check
          %p294 = pneg %p179
        $region30: #{tpu_custom_call.1} parent=11 // pred_check_branch
          %296 = sbr.rel (%p294) target = $region32
        $region31: #{tpu_custom_call.1} parent=11 // pred_region
          _
        $region32: #{tpu_custom_call.1} parent=11 // pred_fallthru
          _
        // Predicated region
        $region33: #{tpu_custom_call.1} parent=11 // pred_check
          %p297 = pneg %p200
        $region34: #{tpu_custom_call.1} parent=11 // pred_check_branch
          %299 = sbr.rel (%p297) target = $region36
        $region35: #{tpu_custom_call.1} parent=11 // pred_region
          _
        $region36: #{tpu_custom_call.1} parent=11 // pred_fallthru
          _
        // Predicated region
        $region37: #{tpu_custom_call.1} parent=11 // pred_check
          %p300 = pneg %p221
        $region38: #{tpu_custom_call.1} parent=11 // pred_check_branch
          %302 = sbr.rel (%p300) target = $region40
        $region39: #{tpu_custom_call.1} parent=11 // pred_region
          _
        $region40: #{tpu_custom_call.1} parent=11 // pred_fallthru
          _
      $region12: #{tpu_custom_call.1} parent=5 // pred_fallthru
        _
      %p303 = scmp.lt.s32.totalorder %s22, 2
      // Predicated region
      $region41: #{tpu_custom_call.1} parent=5 // pred_check
        %p304 = pneg %p303
      $region42: #{tpu_custom_call.1} parent=5 // pred_check_branch
        %306 = sbr.rel (%p304) target = $region44
      $region43: #{tpu_custom_call.1} parent=5 // pred_region
        // Predicated region
        $region45: #{tpu_custom_call.1} parent=43 // pred_check
          %p307 = pneg %p42
        $region46: #{tpu_custom_call.1} parent=43 // pred_check_branch
          %309 = sbr.rel (%p307) target = $region48
        $region47: #{tpu_custom_call.1} parent=43 // pred_region
          %s310 = sand.u32 %s32, 1
          %s311 = scalar_lea.sflag [#allocation3], %s310
          %s312 = sand.u32 %s32, 1
          %s313 = smul.addr %s312, 8
          %s314 = scalar_lea.vmem [#allocation2], %s313
          %s316 = ssub.s32 128, 128
          %317 = vsyncadd %s311, %s316
          %s318 = smul.addr %s22, 128
          %s319 = scalar_lea.hbm %s0, %s318
          %s321 = sshll.u32 %s314, 4
          %s322 = int_to_ptr.vmem [resolvable:$true] %s321
          %324 = dma.hbm_to_vmem [thread:$0]  %s319, 128, %s322, %s311
        $region48: #{tpu_custom_call.1} parent=43 // pred_fallthru
          _
        // Predicated region
        $region49: #{tpu_custom_call.1} parent=43 // pred_check
          %p325 = pneg %p68
        $region50: #{tpu_custom_call.1} parent=43 // pred_check_branch
          %327 = sbr.rel (%p325) target = $region52
        $region51: #{tpu_custom_call.1} parent=43 // pred_region
          %p328 = scmp.lt.s32.totalorder %s22, 1
          %s329 = scalar_select %p328, %s22, 1
          %s330 = smul.addr %s329, 4
          %s331 = smul.addr %s330, 8
          %s332 = scalar_lea.vmem %s1, %s331
        $region52: #{tpu_custom_call.1} parent=43 // pred_fallthru
          _
      $region44: #{tpu_custom_call.1} parent=5 // pred_fallthru
        _
      %p333 = scmp.le.s32.totalorder 1, %s22
      %p334 = scmp.lt.s32.totalorder %s22, 3
      %p335 = pnand %p333, %p334
      %p336 = pneg %p335
      // Predicated region
      $region53: #{tpu_custom_call.1} parent=5 // pred_check
        _
      $region54: #{tpu_custom_call.1} parent=5 // pred_check_branch
        %338 = sbr.rel (%p335) target = $region56
      $region55: #{tpu_custom_call.1} parent=5 // pred_region
        %s339 = ssub.s32 %s22, 1
        %s340 = sand.u32 %s35, 1
        %s341 = scalar_lea.sflag [#allocation3], %s340
        %s342 = sand.u32 %s35, 1
        %s343 = smul.addr %s342, 8
        %s344 = scalar_lea.vmem [#allocation2], %s343
        // Predicated region
        $region57: #{tpu_custom_call.1} parent=55 // pred_check
          %p345 = pneg %p48
        $region58: #{tpu_custom_call.1} parent=55 // pred_check_branch
          %347 = sbr.rel (%p345) target = $region60
        $region59: #{tpu_custom_call.1} parent=55 // pred_region
          %348 = dma.done %s341, 128
        $region60: #{tpu_custom_call.1} parent=55 // pred_fallthru
          _
        // Predicated region
        $region61: #{tpu_custom_call.1} parent=55 // pred_check
          %p349 = pneg %p137
        $region62: #{tpu_custom_call.1} parent=55 // pred_check_branch
          %351 = sbr.rel (%p349) target = $region64
        $region63: #{tpu_custom_call.1} parent=55 // pred_region
          %352 = dma.done [#allocation6], 512
        $region64: #{tpu_custom_call.1} parent=55 // pred_fallthru
          _
        // Predicated region
        $region65: #{tpu_custom_call.1} parent=55 // pred_check
          %p353 = pneg %p158
        $region66: #{tpu_custom_call.1} parent=55 // pred_check_branch
          %355 = sbr.rel (%p353) target = $region68
        $region67: #{tpu_custom_call.1} parent=55 // pred_region
          %356 = dma.done [#allocation6], 512
        $region68: #{tpu_custom_call.1} parent=55 // pred_fallthru
          _
        %s357 = sand.u32 %s35, 1
        %s358 = scalar_lea.sflag [#allocation3], %s357
        %s359 = sand.u32 %s35, 1
        %s360 = smul.addr %s359, 8
        %s361 = scalar_lea.vmem [#allocation2], %s360
        %p362 = pneg %p48
        %p363 = pneg %p45
        %p364 = scmp.lt.s32.totalorder %s27, 1
        %s365 = scalar_select %p364, %s27, 1
        %s366 = smul.addr %s365, 4
        %s367 = smul.addr %s366, 8
        %s368 = scalar_lea.vmem %s1, %s367
        %p369 = pneg %p74
        %p370 = pneg %p71
        %p371 = pneg %p95
        %p372 = pneg %p92
        %p373 = pneg %p116
        %p374 = pneg %p113
        %p375 = pneg %p137
        %p376 = pneg %p134
        %p377 = pneg %p158
        %p378 = pneg %p155
        %p379 = pneg %p179
        %p380 = pneg %p176
        %p381 = pneg %p200
        %p382 = pneg %p197
        %p383 = pneg %p221
        %p384 = pneg %p218
        %p385 = pneg %p247
        %p386 = pneg %p244
        %s387 = sand.u32 %s234, 1
        %s388 = scalar_lea.sflag [#allocation4], %s387
        %s389 = sand.u32 %s234, 1
        %s390 = smul.addr %s389, 8
        %s391 = scalar_lea.vmem [#allocation8], %s390
        %p392 = scmp.lt.s32.totalorder %s27, 1
        %s393 = scalar_select %p392, %s27, 1
        %s394 = smul.addr %s393, 4
        %s395 = smul.addr %s394, 8
        %s396 = scalar_lea.vmem %s1, %s395
        %v397 = vld [vmem:[%s344] sm:$0xff]
        %v398 = vld [vmem:[%s2] sm:$0xff]
        %v399 = vld [vmem:[%s2 + $0x8] sm:$0xff]
        %v400 = vld [vmem:[%s2 + $0x10] sm:$0xff]
        %v401 = vld [vmem:[%s2 + $0x18] sm:$0xff]
        %v402 = vld [vmem:[%s3] sm:$0x1]
        %v404 = vlaneseq
        %v405 = vshrl.u32 %v404, 7
        %v406 = vsub.s32 0, %v405
        %v407 = vrot.slane %v402, %v406
        %vm409 = vcmask 261120
        %v411 = vsel %vm409, %v397, 0
        %413 = vmatprep.subr.mxu0 0.0
        %414 = vmatpush1.msra.mxu0 0.0
        %415 = vmatprep.subr.mxu0 0.0
        %416 = vmatpush1.msra.mxu0 0.0
        %417 = vmatprep.subr.mxu0 0.0
        %418 = vmatpush1.msra.mxu0 0.0
        %419 = vmatprep.subr.mxu0 0.0
        %420 = vmatpush1.msra.mxu0 0.0
        %421 = vmatprep.subr.mxu0 0.0
        %422 = vmatpush1.msra.mxu0 0.0
        %423 = vmatprep.subr.mxu0 0.0
        %424 = vmatpush1.msra.mxu0 0.0
        %425 = vmatprep.subr.mxu0 0.0
        %426 = vmatpush1.msra.mxu0 0.0
        %427 = vmatprep.subr.mxu0 0.0
        %428 = vmatpush1.msra.mxu0 0.0
        %429 = vmatprep.subr.mxu0 0.0
        %430 = vmatpush1.msra.mxu0 0.0
        %431 = vmatprep.subr.mxu0 0.0
        %432 = vmatpush1.msra.mxu0 0.0
        %433 = vmatprep.subr.mxu0 0.0
        %434 = vmatpush1.msra.mxu0 0.0
        %435 = vmatprep.subr.mxu0 0.0
        %436 = vmatpush1.msra.mxu0 0.0
        %437 = vmatprep.subr.mxu0 0.0
        %438 = vmatpush1.msra.mxu0 %v401
        %439 = vmatprep.subr.mxu0 0.0
        %440 = vmatpush1.msra.mxu0 %v400
        %441 = vmatprep.subr.mxu0 0.0
        %442 = vmatpush1.msra.mxu0 %v399
        %443 = vmatprep.subr.mxu0 0.0
        %444 = vmatpush1.msra.mxu0 %v398
        %445 = vmatprep.subr.mxu0 0.0
        %446 = vmatpush2.msra.mxu0 0.0
        %447 = vmatprep.subr.mxu0 0.0
        %448 = vmatpush2.msra.mxu0 0.0
        %449 = vmatprep.subr.mxu0 0.0
        %450 = vmatpush2.msra.mxu0 0.0
        %451 = vmatprep.subr.mxu0 0.0
        %452 = vmatpush2.msra.mxu0 0.0
        %453 = vmatprep.subr.mxu0 0.0
        %454 = vmatpush2.msra.mxu0 0.0
        %455 = vmatprep.subr.mxu0 0.0
        %456 = vmatpush2.msra.mxu0 0.0
        %457 = vmatprep.subr.mxu0 0.0
        %458 = vmatpush2.msra.mxu0 0.0
        %459 = vmatprep.subr.mxu0 0.0
        %460 = vmatpush2.msra.mxu0 0.0
        %461 = vmatprep.subr.mxu0 0.0
        %462 = vmatpush2.msra.mxu0 0.0
        %463 = vmatprep.subr.mxu0 0.0
        %464 = vmatpush2.msra.mxu0 0.0
        %465 = vmatprep.subr.mxu0 0.0
        %466 = vmatpush2.msra.mxu0 0.0
        %467 = vmatprep.subr.mxu0 0.0
        %468 = vmatpush2.msra.mxu0 0.0
        %469 = vmatprep.subr.mxu0 0.0
        %470 = vmatpush2.msra.mxu0 0.0
        %471 = vmatprep.subr.mxu0 0.0
        %472 = vmatpush2.msra.mxu0 0.0
        %473 = vmatprep.subr.mxu0 0.0
        %474 = vmatpush2.msra.mxu0 0.0
        %475 = vmatprep.subr.mxu0 0.0
        %476 = vmatpush2.msra.mxu0 0.0
        %477 = vmatprep.mubr.f32.mxu0 0.0
        %478 = vmatmul.mubr.f32.gmra.mxu0 %v411
        %v479 = vpop.f32.mrf.mxu0
        %v480 = vadd.f32 %v407, %v479
        %v481 = vpop.f32.mrf.mxu0
        %482 = vdwg.mxu0
        %v483 = vmul.f32 %v480, 0.35355338
        %v484 = vld [vmem:[%s396] sm:$0xff]
        %486 = vrot.lane.b32.xlu0 %v480, 96
        %v487 = vpop.permute.xlu0 %486
        %vm488 = vcmask 64512
        %v490 = vsel %vm488, %v483, 0
        %v492 = vsel %vm488, %v487, 0
        %494 = vmatprep.subr.mxu0 0.0
        %495 = vmatpush1.xpose.msra.mxu0 0.0
        %496 = vmatprep.subr.mxu0 0.0
        %497 = vmatpush1.xpose.msra.mxu0 0.0
        %498 = vmatprep.subr.mxu0 0.0
        %499 = vmatpush1.xpose.msra.mxu0 0.0
        %500 = vmatprep.subr.mxu0 0.0
        %501 = vmatpush1.xpose.msra.mxu0 0.0
        %502 = vmatprep.subr.mxu0 0.0
        %503 = vmatpush1.xpose.msra.mxu0 0.0
        %504 = vmatprep.subr.mxu0 0.0
        %505 = vmatpush1.xpose.msra.mxu0 0.0
        %506 = vmatprep.subr.mxu0 0.0
        %507 = vmatpush1.xpose.msra.mxu0 0.0
        %508 = vmatprep.subr.mxu0 0.0
        %509 = vmatpush1.xpose.msra.mxu0 0.0
        %510 = vmatprep.subr.mxu0 0.0
        %511 = vmatpush1.xpose.msra.mxu0 0.0
        %512 = vmatprep.subr.mxu0 0.0
        %513 = vmatpush1.xpose.msra.mxu0 0.0
        %514 = vmatprep.subr.mxu0 0.0
        %515 = vmatpush1.xpose.msra.mxu0 0.0
        %516 = vmatprep.subr.mxu0 0.0
        %517 = vmatpush1.xpose.msra.mxu0 0.0
        %518 = vmatprep.subr.mxu0 0.0
        %519 = vmatpush1.xpose.msra.mxu0 0.0
        %520 = vmatprep.subr.mxu0 0.0
        %521 = vmatpush1.xpose.msra.mxu0 0.0
        %522 = vmatprep.subr.mxu0 0.0
        %523 = vmatpush1.xpose.msra.mxu0 0.0
        %524 = vmatprep.subr.mxu0 0.0
        %525 = vmatpush1.xpose.msra.mxu0 %v492
        %526 = vmatprep.subr.mxu0 0.0
        %527 = vmatpush2.xpose.msra.mxu0 0.0
        %528 = vmatprep.subr.mxu0 0.0
        %529 = vmatpush2.xpose.msra.mxu0 0.0
        %530 = vmatprep.subr.mxu0 0.0
        %531 = vmatpush2.xpose.msra.mxu0 0.0
        %532 = vmatprep.subr.mxu0 0.0
        %533 = vmatpush2.xpose.msra.mxu0 0.0
        %534 = vmatprep.subr.mxu0 0.0
        %535 = vmatpush2.xpose.msra.mxu0 0.0
        %536 = vmatprep.subr.mxu0 0.0
        %537 = vmatpush2.xpose.msra.mxu0 0.0
        %538 = vmatprep.subr.mxu0 0.0
        %539 = vmatpush2.xpose.msra.mxu0 0.0
        %540 = vmatprep.subr.mxu0 0.0
        %541 = vmatpush2.xpose.msra.mxu0 0.0
        %542 = vmatprep.subr.mxu0 0.0
        %543 = vmatpush2.xpose.msra.mxu0 0.0
        %544 = vmatprep.subr.mxu0 0.0
        %545 = vmatpush2.xpose.msra.mxu0 0.0
        %546 = vmatprep.subr.mxu0 0.0
        %547 = vmatpush2.xpose.msra.mxu0 0.0
        %548 = vmatprep.subr.mxu0 0.0
        %549 = vmatpush2.xpose.msra.mxu0 0.0
        %550 = vmatprep.subr.mxu0 0.0
        %551 = vmatpush2.xpose.msra.mxu0 0.0
        %552 = vmatprep.subr.mxu0 0.0
        %553 = vmatpush2.xpose.msra.mxu0 0.0
        %554 = vmatprep.subr.mxu0 0.0
        %555 = vmatpush2.xpose.msra.mxu0 0.0
        %556 = vmatprep.subr.mxu0 0.0
        %557 = vmatpush2.xpose.msra.mxu0 0.0
        %558 = vmatprep.mubr.f32.mxu0 0.0
        %559 = vmatmul.mubr.f32.gmra.mxu0 %v490
        %v560 = vpop.f32.mrf.mxu0
        %v561 = vadd.f32 %v484, %v560
        %v562 = vpop.f32.mrf.mxu0
        %563 = vdwg.mxu0
        %v564 = vsel %vm488, %v561, -inf
        %565 = vmax.xlane.f32.xlu0 %v564
        %v566 = vpop.xlane.xlu0 %565
        %v567 = vsub.f32 %v561, %v566
        %v568 = vmul.f32 %v567, 1.442695
        %v569 = vpow.pop %v568
        %v570 = vsel %vm488, %v569, 0.0
        %571 = vadd.xlane.f32.xlu0 %v570
        %v572 = vpop.xlane.xlu0 %571
        %v573 = vrcp.pop %v572
        %v574 = vmul.f32 %v569, %v573
        %575 = vrot.lane.b32.xlu0 %v480, 64
        %v576 = vpop.permute.xlu0 %575
        %v579 = vsel %vm488, %v574, 0
        %581 = vmatprep.subr.mxu0 0.0
        %582 = vmatpush1.msra.mxu0 0.0
        %583 = vmatprep.subr.mxu0 0.0
        %584 = vmatpush1.msra.mxu0 0.0
        %585 = vmatprep.subr.mxu0 0.0
        %586 = vmatpush1.msra.mxu0 0.0
        %587 = vmatprep.subr.mxu0 0.0
        %588 = vmatpush1.msra.mxu0 0.0
        %589 = vmatprep.subr.mxu0 0.0
        %590 = vmatpush1.msra.mxu0 0.0
        %591 = vmatprep.subr.mxu0 0.0
        %592 = vmatpush1.msra.mxu0 0.0
        %593 = vmatprep.subr.mxu0 0.0
        %594 = vmatpush1.msra.mxu0 0.0
        %595 = vmatprep.subr.mxu0 0.0
        %596 = vmatpush1.msra.mxu0 0.0
        %597 = vmatprep.subr.mxu0 0.0
        %598 = vmatpush1.msra.mxu0 0.0
        %599 = vmatprep.subr.mxu0 0.0
        %600 = vmatpush1.msra.mxu0 0.0
        %601 = vmatprep.subr.mxu0 0.0
        %602 = vmatpush1.msra.mxu0 0.0
        %603 = vmatprep.subr.mxu0 0.0
        %604 = vmatpush1.msra.mxu0 0.0
        %605 = vmatprep.subr.mxu0 0.0
        %606 = vmatpush1.msra.mxu0 0.0
        %607 = vmatprep.subr.mxu0 0.0
        %608 = vmatpush1.msra.mxu0 0.0
        %609 = vmatprep.subr.mxu0 0.0
        %610 = vmatpush1.msra.mxu0 0.0
        %611 = vmatprep.subr.mxu0 0.0
        %612 = vmatpush1.msra.mxu0 %v576
        %613 = vmatprep.subr.mxu0 0.0
        %614 = vmatpush2.msra.mxu0 0.0
        %615 = vmatprep.subr.mxu0 0.0
        %616 = vmatpush2.msra.mxu0 0.0
        %617 = vmatprep.subr.mxu0 0.0
        %618 = vmatpush2.msra.mxu0 0.0
        %619 = vmatprep.subr.mxu0 0.0
        %620 = vmatpush2.msra.mxu0 0.0
        %621 = vmatprep.subr.mxu0 0.0
        %622 = vmatpush2.msra.mxu0 0.0
        %623 = vmatprep.subr.mxu0 0.0
        %624 = vmatpush2.msra.mxu0 0.0
        %625 = vmatprep.subr.mxu0 0.0
        %626 = vmatpush2.msra.mxu0 0.0
        %627 = vmatprep.subr.mxu0 0.0
        %628 = vmatpush2.msra.mxu0 0.0
        %629 = vmatprep.subr.mxu0 0.0
        %630 = vmatpush2.msra.mxu0 0.0
        %631 = vmatprep.subr.mxu0 0.0
        %632 = vmatpush2.msra.mxu0 0.0
        %633 = vmatprep.subr.mxu0 0.0
        %634 = vmatpush2.msra.mxu0 0.0
        %635 = vmatprep.subr.mxu0 0.0
        %636 = vmatpush2.msra.mxu0 0.0
        %637 = vmatprep.subr.mxu0 0.0
        %638 = vmatpush2.msra.mxu0 0.0
        %639 = vmatprep.subr.mxu0 0.0
        %640 = vmatpush2.msra.mxu0 0.0
        %641 = vmatprep.subr.mxu0 0.0
        %642 = vmatpush2.msra.mxu0 0.0
        %643 = vmatprep.subr.mxu0 0.0
        %644 = vmatpush2.msra.mxu0 0.0
        %645 = vmatprep.mubr.f32.mxu0 0.0
        %646 = vmatmul.mubr.f32.gmra.mxu0 %v579
        %v647 = vpop.f32.mrf.mxu0
        %v648 = vadd.f32 0.0, %v647
        %v649 = vpop.f32.mrf.mxu0
        %650 = vdwg.mxu0
        %v651 = vld [vmem:[#allocation5] sm:$0xff]
        %s652 = scalar_lea.vmem %s396, 8
        %v653 = vld [vmem:[%s652] sm:$0xff]
        %654 = vrot.lane.b32.xlu0 %v483, 120
        %v655 = vpop.permute.xlu0 %654
        %656 = vrot.lane.b32.xlu0 %v480, 88
        %v657 = vpop.permute.xlu0 %656
        %v658 = vsel %vm488, %v655, 0
        %v660 = vsel %vm488, %v657, 0
        %662 = vmatprep.subr.mxu0 0.0
        %663 = vmatpush1.xpose.msra.mxu0 0.0
        %664 = vmatprep.subr.mxu0 0.0
        %665 = vmatpush1.xpose.msra.mxu0 0.0
        %666 = vmatprep.subr.mxu0 0.0
        %667 = vmatpush1.xpose.msra.mxu0 0.0
        %668 = vmatprep.subr.mxu0 0.0
        %669 = vmatpush1.xpose.msra.mxu0 0.0
        %670 = vmatprep.subr.mxu0 0.0
        %671 = vmatpush1.xpose.msra.mxu0 0.0
        %672 = vmatprep.subr.mxu0 0.0
        %673 = vmatpush1.xpose.msra.mxu0 0.0
        %674 = vmatprep.subr.mxu0 0.0
        %675 = vmatpush1.xpose.msra.mxu0 0.0
        %676 = vmatprep.subr.mxu0 0.0
        %677 = vmatpush1.xpose.msra.mxu0 0.0
        %678 = vmatprep.subr.mxu0 0.0
        %679 = vmatpush1.xpose.msra.mxu0 0.0
        %680 = vmatprep.subr.mxu0 0.0
        %681 = vmatpush1.xpose.msra.mxu0 0.0
        %682 = vmatprep.subr.mxu0 0.0
        %683 = vmatpush1.xpose.msra.mxu0 0.0
        %684 = vmatprep.subr.mxu0 0.0
        %685 = vmatpush1.xpose.msra.mxu0 0.0
        %686 = vmatprep.subr.mxu0 0.0
        %687 = vmatpush1.xpose.msra.mxu0 0.0
        %688 = vmatprep.subr.mxu0 0.0
        %689 = vmatpush1.xpose.msra.mxu0 0.0
        %690 = vmatprep.subr.mxu0 0.0
        %691 = vmatpush1.xpose.msra.mxu0 0.0
        %692 = vmatprep.subr.mxu0 0.0
        %693 = vmatpush1.xpose.msra.mxu0 %v660
        %694 = vmatprep.subr.mxu0 0.0
        %695 = vmatpush2.xpose.msra.mxu0 0.0
        %696 = vmatprep.subr.mxu0 0.0
        %697 = vmatpush2.xpose.msra.mxu0 0.0
        %698 = vmatprep.subr.mxu0 0.0
        %699 = vmatpush2.xpose.msra.mxu0 0.0
        %700 = vmatprep.subr.mxu0 0.0
        %701 = vmatpush2.xpose.msra.mxu0 0.0
        %702 = vmatprep.subr.mxu0 0.0
        %703 = vmatpush2.xpose.msra.mxu0 0.0
        %704 = vmatprep.subr.mxu0 0.0
        %705 = vmatpush2.xpose.msra.mxu0 0.0
        %706 = vmatprep.subr.mxu0 0.0
        %707 = vmatpush2.xpose.msra.mxu0 0.0
        %708 = vmatprep.subr.mxu0 0.0
        %709 = vmatpush2.xpose.msra.mxu0 0.0
        %710 = vmatprep.subr.mxu0 0.0
        %711 = vmatpush2.xpose.msra.mxu0 0.0
        %712 = vmatprep.subr.mxu0 0.0
        %713 = vmatpush2.xpose.msra.mxu0 0.0
        %714 = vmatprep.subr.mxu0 0.0
        %715 = vmatpush2.xpose.msra.mxu0 0.0
        %716 = vmatprep.subr.mxu0 0.0
        %717 = vmatpush2.xpose.msra.mxu0 0.0
        %718 = vmatprep.subr.mxu0 0.0
        %719 = vmatpush2.xpose.msra.mxu0 0.0
        %720 = vmatprep.subr.mxu0 0.0
        %721 = vmatpush2.xpose.msra.mxu0 0.0
        %722 = vmatprep.subr.mxu0 0.0
        %723 = vmatpush2.xpose.msra.mxu0 0.0
        %724 = vmatprep.subr.mxu0 0.0
        %725 = vmatpush2.xpose.msra.mxu0 0.0
        %726 = vmatprep.mubr.f32.mxu0 0.0
        %727 = vmatmul.mubr.f32.gmra.mxu0 %v658
        %v728 = vpop.f32.mrf.mxu0
        %v729 = vadd.f32 %v653, %v728
        %v730 = vpop.f32.mrf.mxu0
        %731 = vdwg.mxu0
        %v732 = vsel %vm488, %v729, -inf
        %733 = vmax.xlane.f32.xlu0 %v732
        %v734 = vpop.xlane.xlu0 %733
        %v735 = vsub.f32 %v729, %v734
        %v736 = vmul.f32 %v735, 1.442695
        %v737 = vpow.pop %v736
        %v738 = vsel %vm488, %v737, 0.0
        %739 = vadd.xlane.f32.xlu0 %v738
        %v740 = vpop.xlane.xlu0 %739
        %v741 = vrcp.pop %v740
        %v742 = vmul.f32 %v737, %v741
        %743 = vrot.lane.b32.xlu0 %v480, 56
        %v744 = vpop.permute.xlu0 %743
        %v747 = vsel %vm488, %v742, 0
        %749 = vmatprep.subr.mxu0 0.0
        %750 = vmatpush1.msra.mxu0 0.0
        %751 = vmatprep.subr.mxu0 0.0
        %752 = vmatpush1.msra.mxu0 0.0
        %753 = vmatprep.subr.mxu0 0.0
        %754 = vmatpush1.msra.mxu0 0.0
        %755 = vmatprep.subr.mxu0 0.0
        %756 = vmatpush1.msra.mxu0 0.0
        %757 = vmatprep.subr.mxu0 0.0
        %758 = vmatpush1.msra.mxu0 0.0
        %759 = vmatprep.subr.mxu0 0.0
        %760 = vmatpush1.msra.mxu0 0.0
        %761 = vmatprep.subr.mxu0 0.0
        %762 = vmatpush1.msra.mxu0 0.0
        %763 = vmatprep.subr.mxu0 0.0
        %764 = vmatpush1.msra.mxu0 0.0
        %765 = vmatprep.subr.mxu0 0.0
        %766 = vmatpush1.msra.mxu0 0.0
        %767 = vmatprep.subr.mxu0 0.0
        %768 = vmatpush1.msra.mxu0 0.0
        %769 = vmatprep.subr.mxu0 0.0
        %770 = vmatpush1.msra.mxu0 0.0
        %771 = vmatprep.subr.mxu0 0.0
        %772 = vmatpush1.msra.mxu0 0.0
        %773 = vmatprep.subr.mxu0 0.0
        %774 = vmatpush1.msra.mxu0 0.0
        %775 = vmatprep.subr.mxu0 0.0
        %776 = vmatpush1.msra.mxu0 0.0
        %777 = vmatprep.subr.mxu0 0.0
        %778 = vmatpush1.msra.mxu0 0.0
        %779 = vmatprep.subr.mxu0 0.0
        %780 = vmatpush1.msra.mxu0 %v744
        %781 = vmatprep.subr.mxu0 0.0
        %782 = vmatpush2.msra.mxu0 0.0
        %783 = vmatprep.subr.mxu0 0.0
        %784 = vmatpush2.msra.mxu0 0.0
        %785 = vmatprep.subr.mxu0 0.0
        %786 = vmatpush2.msra.mxu0 0.0
        %787 = vmatprep.subr.mxu0 0.0
        %788 = vmatpush2.msra.mxu0 0.0
        %789 = vmatprep.subr.mxu0 0.0
        %790 = vmatpush2.msra.mxu0 0.0
        %791 = vmatprep.subr.mxu0 0.0
        %792 = vmatpush2.msra.mxu0 0.0
        %793 = vmatprep.subr.mxu0 0.0
        %794 = vmatpush2.msra.mxu0 0.0
        %795 = vmatprep.subr.mxu0 0.0
        %796 = vmatpush2.msra.mxu0 0.0
        %797 = vmatprep.subr.mxu0 0.0
        %798 = vmatpush2.msra.mxu0 0.0
        %799 = vmatprep.subr.mxu0 0.0
        %800 = vmatpush2.msra.mxu0 0.0
        %801 = vmatprep.subr.mxu0 0.0
        %802 = vmatpush2.msra.mxu0 0.0
        %803 = vmatprep.subr.mxu0 0.0
        %804 = vmatpush2.msra.mxu0 0.0
        %805 = vmatprep.subr.mxu0 0.0
        %806 = vmatpush2.msra.mxu0 0.0
        %807 = vmatprep.subr.mxu0 0.0
        %808 = vmatpush2.msra.mxu0 0.0
        %809 = vmatprep.subr.mxu0 0.0
        %810 = vmatpush2.msra.mxu0 0.0
        %811 = vmatprep.subr.mxu0 0.0
        %812 = vmatpush2.msra.mxu0 0.0
        %813 = vmatprep.mubr.f32.mxu0 0.0
        %814 = vmatmul.mubr.f32.gmra.mxu0 %v747
        %v815 = vpop.f32.mrf.mxu0
        %v816 = vadd.f32 0.0, %v815
        %v817 = vpop.f32.mrf.mxu0
        %818 = vdwg.mxu0
        %v819 = vld [vmem:[#allocation5 + $0x8] sm:$0xff]
        %v821 = vsel %vm488, %v816, 0
        %823 = vmatprep.subr.mxu0 0.0
        %824 = vmatpush1.msra.mxu0 0.0
        %825 = vmatprep.subr.mxu0 0.0
        %826 = vmatpush1.msra.mxu0 0.0
        %827 = vmatprep.subr.mxu0 0.0
        %828 = vmatpush1.msra.mxu0 0.0
        %829 = vmatprep.subr.mxu0 0.0
        %830 = vmatpush1.msra.mxu0 0.0
        %831 = vmatprep.subr.mxu0 0.0
        %832 = vmatpush1.msra.mxu0 0.0
        %833 = vmatprep.subr.mxu0 0.0
        %834 = vmatpush1.msra.mxu0 0.0
        %835 = vmatprep.subr.mxu0 0.0
        %836 = vmatpush1.msra.mxu0 0.0
        %837 = vmatprep.subr.mxu0 0.0
        %838 = vmatpush1.msra.mxu0 0.0
        %839 = vmatprep.subr.mxu0 0.0
        %840 = vmatpush1.msra.mxu0 0.0
        %841 = vmatprep.subr.mxu0 0.0
        %842 = vmatpush1.msra.mxu0 0.0
        %843 = vmatprep.subr.mxu0 0.0
        %844 = vmatpush1.msra.mxu0 0.0
        %845 = vmatprep.subr.mxu0 0.0
        %846 = vmatpush1.msra.mxu0 0.0
        %847 = vmatprep.subr.mxu0 0.0
        %848 = vmatpush1.msra.mxu0 0.0
        %849 = vmatprep.subr.mxu0 0.0
        %850 = vmatpush1.msra.mxu0 0.0
        %851 = vmatprep.subr.mxu0 0.0
        %852 = vmatpush1.msra.mxu0 0.0
        %853 = vmatprep.subr.mxu0 0.0
        %854 = vmatpush1.msra.mxu0 %v819
        %855 = vmatprep.subr.mxu0 0.0
        %856 = vmatpush2.msra.mxu0 0.0
        %857 = vmatprep.subr.mxu0 0.0
        %858 = vmatpush2.msra.mxu0 0.0
        %859 = vmatprep.subr.mxu0 0.0
        %860 = vmatpush2.msra.mxu0 0.0
        %861 = vmatprep.subr.mxu0 0.0
        %862 = vmatpush2.msra.mxu0 0.0
        %863 = vmatprep.subr.mxu0 0.0
        %864 = vmatpush2.msra.mxu0 0.0
        %865 = vmatprep.subr.mxu0 0.0
        %866 = vmatpush2.msra.mxu0 0.0
        %867 = vmatprep.subr.mxu0 0.0
        %868 = vmatpush2.msra.mxu0 0.0
        %869 = vmatprep.subr.mxu0 0.0
        %870 = vmatpush2.msra.mxu0 0.0
        %871 = vmatprep.subr.mxu0 0.0
        %872 = vmatpush2.msra.mxu0 0.0
        %873 = vmatprep.subr.mxu0 0.0
        %874 = vmatpush2.msra.mxu0 0.0
        %875 = vmatprep.subr.mxu0 0.0
        %876 = vmatpush2.msra.mxu0 0.0
        %877 = vmatprep.subr.mxu0 0.0
        %878 = vmatpush2.msra.mxu0 0.0
        %879 = vmatprep.subr.mxu0 0.0
        %880 = vmatpush2.msra.mxu0 0.0
        %881 = vmatprep.subr.mxu0 0.0
        %882 = vmatpush2.msra.mxu0 0.0
        %883 = vmatprep.subr.mxu0 0.0
        %884 = vmatpush2.msra.mxu0 0.0
        %885 = vmatprep.subr.mxu0 0.0
        %886 = vmatpush2.msra.mxu0 0.0
        %887 = vmatprep.mubr.f32.mxu0 0.0
        %888 = vmatmul.mubr.f32.gmra.mxu0 %v821
        %v889 = vpop.f32.mrf.mxu0
        %v890 = vadd.f32 0.0, %v889
        %v891 = vpop.f32.mrf.mxu0
        %892 = vdwg.mxu0
        %v894 = vsel %vm488, %v648, 0
        %896 = vmatprep.subr.mxu0 0.0
        %897 = vmatpush1.msra.mxu0 0.0
        %898 = vmatprep.subr.mxu0 0.0
        %899 = vmatpush1.msra.mxu0 0.0
        %900 = vmatprep.subr.mxu0 0.0
        %901 = vmatpush1.msra.mxu0 0.0
        %902 = vmatprep.subr.mxu0 0.0
        %903 = vmatpush1.msra.mxu0 0.0
        %904 = vmatprep.subr.mxu0 0.0
        %905 = vmatpush1.msra.mxu0 0.0
        %906 = vmatprep.subr.mxu0 0.0
        %907 = vmatpush1.msra.mxu0 0.0
        %908 = vmatprep.subr.mxu0 0.0
        %909 = vmatpush1.msra.mxu0 0.0
        %910 = vmatprep.subr.mxu0 0.0
        %911 = vmatpush1.msra.mxu0 0.0
        %912 = vmatprep.subr.mxu0 0.0
        %913 = vmatpush1.msra.mxu0 0.0
        %914 = vmatprep.subr.mxu0 0.0
        %915 = vmatpush1.msra.mxu0 0.0
        %916 = vmatprep.subr.mxu0 0.0
        %917 = vmatpush1.msra.mxu0 0.0
        %918 = vmatprep.subr.mxu0 0.0
        %919 = vmatpush1.msra.mxu0 0.0
        %920 = vmatprep.subr.mxu0 0.0
        %921 = vmatpush1.msra.mxu0 0.0
        %922 = vmatprep.subr.mxu0 0.0
        %923 = vmatpush1.msra.mxu0 0.0
        %924 = vmatprep.subr.mxu0 0.0
        %925 = vmatpush1.msra.mxu0 0.0
        %926 = vmatprep.subr.mxu0 0.0
        %927 = vmatpush1.msra.mxu0 %v651
        %928 = vmatprep.subr.mxu0 0.0
        %929 = vmatpush2.msra.mxu0 0.0
        %930 = vmatprep.subr.mxu0 0.0
        %931 = vmatpush2.msra.mxu0 0.0
        %932 = vmatprep.subr.mxu0 0.0
        %933 = vmatpush2.msra.mxu0 0.0
        %934 = vmatprep.subr.mxu0 0.0
        %935 = vmatpush2.msra.mxu0 0.0
        %936 = vmatprep.subr.mxu0 0.0
        %937 = vmatpush2.msra.mxu0 0.0
        %938 = vmatprep.subr.mxu0 0.0
        %939 = vmatpush2.msra.mxu0 0.0
        %940 = vmatprep.subr.mxu0 0.0
        %941 = vmatpush2.msra.mxu0 0.0
        %942 = vmatprep.subr.mxu0 0.0
        %943 = vmatpush2.msra.mxu0 0.0
        %944 = vmatprep.subr.mxu0 0.0
        %945 = vmatpush2.msra.mxu0 0.0
        %946 = vmatprep.subr.mxu0 0.0
        %947 = vmatpush2.msra.mxu0 0.0
        %948 = vmatprep.subr.mxu0 0.0
        %949 = vmatpush2.msra.mxu0 0.0
        %950 = vmatprep.subr.mxu0 0.0
        %951 = vmatpush2.msra.mxu0 0.0
        %952 = vmatprep.subr.mxu0 0.0
        %953 = vmatpush2.msra.mxu0 0.0
        %954 = vmatprep.subr.mxu0 0.0
        %955 = vmatpush2.msra.mxu0 0.0
        %956 = vmatprep.subr.mxu0 0.0
        %957 = vmatpush2.msra.mxu0 0.0
        %958 = vmatprep.subr.mxu0 0.0
        %959 = vmatpush2.msra.mxu0 0.0
        %960 = vmatprep.mubr.f32.mxu0 0.0
        %961 = vmatmul.mubr.f32.gmra.mxu0 %v894
        %v962 = vpop.f32.mrf.mxu0
        %v963 = vadd.f32 %v890, %v962
        %v964 = vpop.f32.mrf.mxu0
        %965 = vdwg.mxu0
        %s966 = scalar_lea.vmem %s396, 16
        %v967 = vld [vmem:[%s966] sm:$0xff]
        %968 = vrot.lane.b32.xlu0 %v483, 112
        %v969 = vpop.permute.xlu0 %968
        %970 = vrot.lane.b32.xlu0 %v480, 80
        %v971 = vpop.permute.xlu0 %970
        %v972 = vsel %vm488, %v969, 0
        %v974 = vsel %vm488, %v971, 0
        %976 = vmatprep.subr.mxu0 0.0
        %977 = vmatpush1.xpose.msra.mxu0 0.0
        %978 = vmatprep.subr.mxu0 0.0
        %979 = vmatpush1.xpose.msra.mxu0 0.0
        %980 = vmatprep.subr.mxu0 0.0
        %981 = vmatpush1.xpose.msra.mxu0 0.0
        %982 = vmatprep.subr.mxu0 0.0
        %983 = vmatpush1.xpose.msra.mxu0 0.0
        %984 = vmatprep.subr.mxu0 0.0
        %985 = vmatpush1.xpose.msra.mxu0 0.0
        %986 = vmatprep.subr.mxu0 0.0
        %987 = vmatpush1.xpose.msra.mxu0 0.0
        %988 = vmatprep.subr.mxu0 0.0
        %989 = vmatpush1.xpose.msra.mxu0 0.0
        %990 = vmatprep.subr.mxu0 0.0
        %991 = vmatpush1.xpose.msra.mxu0 0.0
        %992 = vmatprep.subr.mxu0 0.0
        %993 = vmatpush1.xpose.msra.mxu0 0.0
        %994 = vmatprep.subr.mxu0 0.0
        %995 = vmatpush1.xpose.msra.mxu0 0.0
        %996 = vmatprep.subr.mxu0 0.0
        %997 = vmatpush1.xpose.msra.mxu0 0.0
        %998 = vmatprep.subr.mxu0 0.0
        %999 = vmatpush1.xpose.msra.mxu0 0.0
        %1000 = vmatprep.subr.mxu0 0.0
        %1001 = vmatpush1.xpose.msra.mxu0 0.0
        %1002 = vmatprep.subr.mxu0 0.0
        %1003 = vmatpush1.xpose.msra.mxu0 0.0
        %1004 = vmatprep.subr.mxu0 0.0
        %1005 = vmatpush1.xpose.msra.mxu0 0.0
        %1006 = vmatprep.subr.mxu0 0.0
        %1007 = vmatpush1.xpose.msra.mxu0 %v974
        %1008 = vmatprep.subr.mxu0 0.0
        %1009 = vmatpush2.xpose.msra.mxu0 0.0
        %1010 = vmatprep.subr.mxu0 0.0
        %1011 = vmatpush2.xpose.msra.mxu0 0.0
        %1012 = vmatprep.subr.mxu0 0.0
        %1013 = vmatpush2.xpose.msra.mxu0 0.0
        %1014 = vmatprep.subr.mxu0 0.0
        %1015 = vmatpush2.xpose.msra.mxu0 0.0
        %1016 = vmatprep.subr.mxu0 0.0
        %1017 = vmatpush2.xpose.msra.mxu0 0.0
        %1018 = vmatprep.subr.mxu0 0.0
        %1019 = vmatpush2.xpose.msra.mxu0 0.0
        %1020 = vmatprep.subr.mxu0 0.0
        %1021 = vmatpush2.xpose.msra.mxu0 0.0
        %1022 = vmatprep.subr.mxu0 0.0
        %1023 = vmatpush2.xpose.msra.mxu0 0.0
        %1024 = vmatprep.subr.mxu0 0.0
        %1025 = vmatpush2.xpose.msra.mxu0 0.0
        %1026 = vmatprep.subr.mxu0 0.0
        %1027 = vmatpush2.xpose.msra.mxu0 0.0
        %1028 = vmatprep.subr.mxu0 0.0
        %1029 = vmatpush2.xpose.msra.mxu0 0.0
        %1030 = vmatprep.subr.mxu0 0.0
        %1031 = vmatpush2.xpose.msra.mxu0 0.0
        %1032 = vmatprep.subr.mxu0 0.0
        %1033 = vmatpush2.xpose.msra.mxu0 0.0
        %1034 = vmatprep.subr.mxu0 0.0
        %1035 = vmatpush2.xpose.msra.mxu0 0.0
        %1036 = vmatprep.subr.mxu0 0.0
        %1037 = vmatpush2.xpose.msra.mxu0 0.0
        %1038 = vmatprep.subr.mxu0 0.0
        %1039 = vmatpush2.xpose.msra.mxu0 0.0
        %1040 = vmatprep.mubr.f32.mxu0 0.0
        %1041 = vmatmul.mubr.f32.gmra.mxu0 %v972
        %v1042 = vpop.f32.mrf.mxu0
        %v1043 = vadd.f32 %v967, %v1042
        %v1044 = vpop.f32.mrf.mxu0
        %1045 = vdwg.mxu0
        %v1046 = vsel %vm488, %v1043, -inf
        %1047 = vmax.xlane.f32.xlu0 %v1046
        %v1048 = vpop.xlane.xlu0 %1047
        %v1049 = vsub.f32 %v1043, %v1048
        %v1050 = vmul.f32 %v1049, 1.442695
        %v1051 = vpow.pop %v1050
        %v1052 = vsel %vm488, %v1051, 0.0
        %1053 = vadd.xlane.f32.xlu0 %v1052
        %v1054 = vpop.xlane.xlu0 %1053
        %v1055 = vrcp.pop %v1054
        %v1056 = vmul.f32 %v1051, %v1055
        %1057 = vrot.lane.b32.xlu0 %v480, 48
        %v1058 = vpop.permute.xlu0 %1057
        %v1061 = vsel %vm488, %v1056, 0
        %1063 = vmatprep.subr.mxu0 0.0
        %1064 = vmatpush1.msra.mxu0 0.0
        %1065 = vmatprep.subr.mxu0 0.0
        %1066 = vmatpush1.msra.mxu0 0.0
        %1067 = vmatprep.subr.mxu0 0.0
        %1068 = vmatpush1.msra.mxu0 0.0
        %1069 = vmatprep.subr.mxu0 0.0
        %1070 = vmatpush1.msra.mxu0 0.0
        %1071 = vmatprep.subr.mxu0 0.0
        %1072 = vmatpush1.msra.mxu0 0.0
        %1073 = vmatprep.subr.mxu0 0.0
        %1074 = vmatpush1.msra.mxu0 0.0
        %1075 = vmatprep.subr.mxu0 0.0
        %1076 = vmatpush1.msra.mxu0 0.0
        %1077 = vmatprep.subr.mxu0 0.0
        %1078 = vmatpush1.msra.mxu0 0.0
        %1079 = vmatprep.subr.mxu0 0.0
        %1080 = vmatpush1.msra.mxu0 0.0
        %1081 = vmatprep.subr.mxu0 0.0
        %1082 = vmatpush1.msra.mxu0 0.0
        %1083 = vmatprep.subr.mxu0 0.0
        %1084 = vmatpush1.msra.mxu0 0.0
        %1085 = vmatprep.subr.mxu0 0.0
        %1086 = vmatpush1.msra.mxu0 0.0
        %1087 = vmatprep.subr.mxu0 0.0
        %1088 = vmatpush1.msra.mxu0 0.0
        %1089 = vmatprep.subr.mxu0 0.0
        %1090 = vmatpush1.msra.mxu0 0.0
        %1091 = vmatprep.subr.mxu0 0.0
        %1092 = vmatpush1.msra.mxu0 0.0
        %1093 = vmatprep.subr.mxu0 0.0
        %1094 = vmatpush1.msra.mxu0 %v1058
        %1095 = vmatprep.subr.mxu0 0.0
        %1096 = vmatpush2.msra.mxu0 0.0
        %1097 = vmatprep.subr.mxu0 0.0
        %1098 = vmatpush2.msra.mxu0 0.0
        %1099 = vmatprep.subr.mxu0 0.0
        %1100 = vmatpush2.msra.mxu0 0.0
        %1101 = vmatprep.subr.mxu0 0.0
        %1102 = vmatpush2.msra.mxu0 0.0
        %1103 = vmatprep.subr.mxu0 0.0
        %1104 = vmatpush2.msra.mxu0 0.0
        %1105 = vmatprep.subr.mxu0 0.0
        %1106 = vmatpush2.msra.mxu0 0.0
        %1107 = vmatprep.subr.mxu0 0.0
        %1108 = vmatpush2.msra.mxu0 0.0
        %1109 = vmatprep.subr.mxu0 0.0
        %1110 = vmatpush2.msra.mxu0 0.0
        %1111 = vmatprep.subr.mxu0 0.0
        %1112 = vmatpush2.msra.mxu0 0.0
        %1113 = vmatprep.subr.mxu0 0.0
        %1114 = vmatpush2.msra.mxu0 0.0
        %1115 = vmatprep.subr.mxu0 0.0
        %1116 = vmatpush2.msra.mxu0 0.0
        %1117 = vmatprep.subr.mxu0 0.0
        %1118 = vmatpush2.msra.mxu0 0.0
        %1119 = vmatprep.subr.mxu0 0.0
        %1120 = vmatpush2.msra.mxu0 0.0
        %1121 = vmatprep.subr.mxu0 0.0
        %1122 = vmatpush2.msra.mxu0 0.0
        %1123 = vmatprep.subr.mxu0 0.0
        %1124 = vmatpush2.msra.mxu0 0.0
        %1125 = vmatprep.subr.mxu0 0.0
        %1126 = vmatpush2.msra.mxu0 0.0
        %1127 = vmatprep.mubr.f32.mxu0 0.0
        %1128 = vmatmul.mubr.f32.gmra.mxu0 %v1061
        %v1129 = vpop.f32.mrf.mxu0
        %v1130 = vadd.f32 0.0, %v1129
        %v1131 = vpop.f32.mrf.mxu0
        %1132 = vdwg.mxu0
        %v1133 = vld [vmem:[#allocation5 + $0x10] sm:$0xff]
        %v1135 = vsel %vm488, %v1130, 0
        %1137 = vmatprep.subr.mxu0 0.0
        %1138 = vmatpush1.msra.mxu0 0.0
        %1139 = vmatprep.subr.mxu0 0.0
        %1140 = vmatpush1.msra.mxu0 0.0
        %1141 = vmatprep.subr.mxu0 0.0
        %1142 = vmatpush1.msra.mxu0 0.0
        %1143 = vmatprep.subr.mxu0 0.0
        %1144 = vmatpush1.msra.mxu0 0.0
        %1145 = vmatprep.subr.mxu0 0.0
        %1146 = vmatpush1.msra.mxu0 0.0
        %1147 = vmatprep.subr.mxu0 0.0
        %1148 = vmatpush1.msra.mxu0 0.0
        %1149 = vmatprep.subr.mxu0 0.0
        %1150 = vmatpush1.msra.mxu0 0.0
        %1151 = vmatprep.subr.mxu0 0.0
        %1152 = vmatpush1.msra.mxu0 0.0
        %1153 = vmatprep.subr.mxu0 0.0
        %1154 = vmatpush1.msra.mxu0 0.0
        %1155 = vmatprep.subr.mxu0 0.0
        %1156 = vmatpush1.msra.mxu0 0.0
        %1157 = vmatprep.subr.mxu0 0.0
        %1158 = vmatpush1.msra.mxu0 0.0
        %1159 = vmatprep.subr.mxu0 0.0
        %1160 = vmatpush1.msra.mxu0 0.0
        %1161 = vmatprep.subr.mxu0 0.0
        %1162 = vmatpush1.msra.mxu0 0.0
        %1163 = vmatprep.subr.mxu0 0.0
        %1164 = vmatpush1.msra.mxu0 0.0
        %1165 = vmatprep.subr.mxu0 0.0
        %1166 = vmatpush1.msra.mxu0 0.0
        %1167 = vmatprep.subr.mxu0 0.0
        %1168 = vmatpush1.msra.mxu0 %v1133
        %1169 = vmatprep.subr.mxu0 0.0
        %1170 = vmatpush2.msra.mxu0 0.0
        %1171 = vmatprep.subr.mxu0 0.0
        %1172 = vmatpush2.msra.mxu0 0.0
        %1173 = vmatprep.subr.mxu0 0.0
        %1174 = vmatpush2.msra.mxu0 0.0
        %1175 = vmatprep.subr.mxu0 0.0
        %1176 = vmatpush2.msra.mxu0 0.0
        %1177 = vmatprep.subr.mxu0 0.0
        %1178 = vmatpush2.msra.mxu0 0.0
        %1179 = vmatprep.subr.mxu0 0.0
        %1180 = vmatpush2.msra.mxu0 0.0
        %1181 = vmatprep.subr.mxu0 0.0
        %1182 = vmatpush2.msra.mxu0 0.0
        %1183 = vmatprep.subr.mxu0 0.0
        %1184 = vmatpush2.msra.mxu0 0.0
        %1185 = vmatprep.subr.mxu0 0.0
        %1186 = vmatpush2.msra.mxu0 0.0
        %1187 = vmatprep.subr.mxu0 0.0
        %1188 = vmatpush2.msra.mxu0 0.0
        %1189 = vmatprep.subr.mxu0 0.0
        %1190 = vmatpush2.msra.mxu0 0.0
        %1191 = vmatprep.subr.mxu0 0.0
        %1192 = vmatpush2.msra.mxu0 0.0
        %1193 = vmatprep.subr.mxu0 0.0
        %1194 = vmatpush2.msra.mxu0 0.0
        %1195 = vmatprep.subr.mxu0 0.0
        %1196 = vmatpush2.msra.mxu0 0.0
        %1197 = vmatprep.subr.mxu0 0.0
        %1198 = vmatpush2.msra.mxu0 0.0
        %1199 = vmatprep.subr.mxu0 0.0
        %1200 = vmatpush2.msra.mxu0 0.0
        %1201 = vmatprep.mubr.f32.mxu0 0.0
        %1202 = vmatmul.mubr.f32.gmra.mxu0 %v1135
        %v1203 = vpop.f32.mrf.mxu0
        %v1204 = vadd.f32 0.0, %v1203
        %v1205 = vpop.f32.mrf.mxu0
        %1206 = vdwg.mxu0
        %v1207 = vadd.f32 %v963, %v1204
        %s1208 = scalar_lea.vmem %s396, 24
        %v1209 = vld [vmem:[%s1208] sm:$0xff]
        %1210 = vrot.lane.b32.xlu0 %v483, 104
        %v1211 = vpop.permute.xlu0 %1210
        %1212 = vrot.lane.b32.xlu0 %v480, 72
        %v1213 = vpop.permute.xlu0 %1212
        %v1214 = vsel %vm488, %v1211, 0
        %v1216 = vsel %vm488, %v1213, 0
        %1218 = vmatprep.subr.mxu0 0.0
        %1219 = vmatpush1.xpose.msra.mxu0 0.0
        %1220 = vmatprep.subr.mxu0 0.0
        %1221 = vmatpush1.xpose.msra.mxu0 0.0
        %1222 = vmatprep.subr.mxu0 0.0
        %1223 = vmatpush1.xpose.msra.mxu0 0.0
        %1224 = vmatprep.subr.mxu0 0.0
        %1225 = vmatpush1.xpose.msra.mxu0 0.0
        %1226 = vmatprep.subr.mxu0 0.0
        %1227 = vmatpush1.xpose.msra.mxu0 0.0
        %1228 = vmatprep.subr.mxu0 0.0
        %1229 = vmatpush1.xpose.msra.mxu0 0.0
        %1230 = vmatprep.subr.mxu0 0.0
        %1231 = vmatpush1.xpose.msra.mxu0 0.0
        %1232 = vmatprep.subr.mxu0 0.0
        %1233 = vmatpush1.xpose.msra.mxu0 0.0
        %1234 = vmatprep.subr.mxu0 0.0
        %1235 = vmatpush1.xpose.msra.mxu0 0.0
        %1236 = vmatprep.subr.mxu0 0.0
        %1237 = vmatpush1.xpose.msra.mxu0 0.0
        %1238 = vmatprep.subr.mxu0 0.0
        %1239 = vmatpush1.xpose.msra.mxu0 0.0
        %1240 = vmatprep.subr.mxu0 0.0
        %1241 = vmatpush1.xpose.msra.mxu0 0.0
        %1242 = vmatprep.subr.mxu0 0.0
        %1243 = vmatpush1.xpose.msra.mxu0 0.0
        %1244 = vmatprep.subr.mxu0 0.0
        %1245 = vmatpush1.xpose.msra.mxu0 0.0
        %1246 = vmatprep.subr.mxu0 0.0
        %1247 = vmatpush1.xpose.msra.mxu0 0.0
        %1248 = vmatprep.subr.mxu0 0.0
        %1249 = vmatpush1.xpose.msra.mxu0 %v1216
        %1250 = vmatprep.subr.mxu0 0.0
        %1251 = vmatpush2.xpose.msra.mxu0 0.0
        %1252 = vmatprep.subr.mxu0 0.0
        %1253 = vmatpush2.xpose.msra.mxu0 0.0
        %1254 = vmatprep.subr.mxu0 0.0
        %1255 = vmatpush2.xpose.msra.mxu0 0.0
        %1256 = vmatprep.subr.mxu0 0.0
        %1257 = vmatpush2.xpose.msra.mxu0 0.0
        %1258 = vmatprep.subr.mxu0 0.0
        %1259 = vmatpush2.xpose.msra.mxu0 0.0
        %1260 = vmatprep.subr.mxu0 0.0
        %1261 = vmatpush2.xpose.msra.mxu0 0.0
        %1262 = vmatprep.subr.mxu0 0.0
        %1263 = vmatpush2.xpose.msra.mxu0 0.0
        %1264 = vmatprep.subr.mxu0 0.0
        %1265 = vmatpush2.xpose.msra.mxu0 0.0
        %1266 = vmatprep.subr.mxu0 0.0
        %1267 = vmatpush2.xpose.msra.mxu0 0.0
        %1268 = vmatprep.subr.mxu0 0.0
        %1269 = vmatpush2.xpose.msra.mxu0 0.0
        %1270 = vmatprep.subr.mxu0 0.0
        %1271 = vmatpush2.xpose.msra.mxu0 0.0
        %1272 = vmatprep.subr.mxu0 0.0
        %1273 = vmatpush2.xpose.msra.mxu0 0.0
        %1274 = vmatprep.subr.mxu0 0.0
        %1275 = vmatpush2.xpose.msra.mxu0 0.0
        %1276 = vmatprep.subr.mxu0 0.0
        %1277 = vmatpush2.xpose.msra.mxu0 0.0
        %1278 = vmatprep.subr.mxu0 0.0
        %1279 = vmatpush2.xpose.msra.mxu0 0.0
        %1280 = vmatprep.subr.mxu0 0.0
        %1281 = vmatpush2.xpose.msra.mxu0 0.0
        %1282 = vmatprep.mubr.f32.mxu0 0.0
        %1283 = vmatmul.mubr.f32.gmra.mxu0 %v1214
        %v1284 = vpop.f32.mrf.mxu0
        %v1285 = vadd.f32 %v1209, %v1284
        %v1286 = vpop.f32.mrf.mxu0
        %1287 = vdwg.mxu0
        %v1288 = vsel %vm488, %v1285, -inf
        %1289 = vmax.xlane.f32.xlu0 %v1288
        %v1290 = vpop.xlane.xlu0 %1289
        %v1291 = vsub.f32 %v1285, %v1290
        %v1292 = vmul.f32 %v1291, 1.442695
        %v1293 = vpow.pop %v1292
        %v1294 = vsel %vm488, %v1293, 0.0
        %1295 = vadd.xlane.f32.xlu0 %v1294
        %v1296 = vpop.xlane.xlu0 %1295
        %v1297 = vrcp.pop %v1296
        %v1298 = vmul.f32 %v1293, %v1297
        %1299 = vrot.lane.b32.xlu0 %v480, 40
        %v1300 = vpop.permute.xlu0 %1299
        %v1303 = vsel %vm488, %v1298, 0
        %1305 = vmatprep.subr.mxu0 0.0
        %1306 = vmatpush1.msra.mxu0 0.0
        %1307 = vmatprep.subr.mxu0 0.0
        %1308 = vmatpush1.msra.mxu0 0.0
        %1309 = vmatprep.subr.mxu0 0.0
        %1310 = vmatpush1.msra.mxu0 0.0
        %1311 = vmatprep.subr.mxu0 0.0
        %1312 = vmatpush1.msra.mxu0 0.0
        %1313 = vmatprep.subr.mxu0 0.0
        %1314 = vmatpush1.msra.mxu0 0.0
        %1315 = vmatprep.subr.mxu0 0.0
        %1316 = vmatpush1.msra.mxu0 0.0
        %1317 = vmatprep.subr.mxu0 0.0
        %1318 = vmatpush1.msra.mxu0 0.0
        %1319 = vmatprep.subr.mxu0 0.0
        %1320 = vmatpush1.msra.mxu0 0.0
        %1321 = vmatprep.subr.mxu0 0.0
        %1322 = vmatpush1.msra.mxu0 0.0
        %1323 = vmatprep.subr.mxu0 0.0
        %1324 = vmatpush1.msra.mxu0 0.0
        %1325 = vmatprep.subr.mxu0 0.0
        %1326 = vmatpush1.msra.mxu0 0.0
        %1327 = vmatprep.subr.mxu0 0.0
        %1328 = vmatpush1.msra.mxu0 0.0
        %1329 = vmatprep.subr.mxu0 0.0
        %1330 = vmatpush1.msra.mxu0 0.0
        %1331 = vmatprep.subr.mxu0 0.0
        %1332 = vmatpush1.msra.mxu0 0.0
        %1333 = vmatprep.subr.mxu0 0.0
        %1334 = vmatpush1.msra.mxu0 0.0
        %1335 = vmatprep.subr.mxu0 0.0
        %1336 = vmatpush1.msra.mxu0 %v1300
        %1337 = vmatprep.subr.mxu0 0.0
        %1338 = vmatpush2.msra.mxu0 0.0
        %1339 = vmatprep.subr.mxu0 0.0
        %1340 = vmatpush2.msra.mxu0 0.0
        %1341 = vmatprep.subr.mxu0 0.0
        %1342 = vmatpush2.msra.mxu0 0.0
        %1343 = vmatprep.subr.mxu0 0.0
        %1344 = vmatpush2.msra.mxu0 0.0
        %1345 = vmatprep.subr.mxu0 0.0
        %1346 = vmatpush2.msra.mxu0 0.0
        %1347 = vmatprep.subr.mxu0 0.0
        %1348 = vmatpush2.msra.mxu0 0.0
        %1349 = vmatprep.subr.mxu0 0.0
        %1350 = vmatpush2.msra.mxu0 0.0
        %1351 = vmatprep.subr.mxu0 0.0
        %1352 = vmatpush2.msra.mxu0 0.0
        %1353 = vmatprep.subr.mxu0 0.0
        %1354 = vmatpush2.msra.mxu0 0.0
        %1355 = vmatprep.subr.mxu0 0.0
        %1356 = vmatpush2.msra.mxu0 0.0
        %1357 = vmatprep.subr.mxu0 0.0
        %1358 = vmatpush2.msra.mxu0 0.0
        %1359 = vmatprep.subr.mxu0 0.0
        %1360 = vmatpush2.msra.mxu0 0.0
        %1361 = vmatprep.subr.mxu0 0.0
        %1362 = vmatpush2.msra.mxu0 0.0
        %1363 = vmatprep.subr.mxu0 0.0
        %1364 = vmatpush2.msra.mxu0 0.0
        %1365 = vmatprep.subr.mxu0 0.0
        %1366 = vmatpush2.msra.mxu0 0.0
        %1367 = vmatprep.subr.mxu0 0.0
        %1368 = vmatpush2.msra.mxu0 0.0
        %1369 = vmatprep.mubr.f32.mxu0 0.0
        %1370 = vmatmul.mubr.f32.gmra.mxu0 %v1303
        %v1371 = vpop.f32.mrf.mxu0
        %v1372 = vadd.f32 0.0, %v1371
        %v1373 = vpop.f32.mrf.mxu0
        %1374 = vdwg.mxu0
        %v1375 = vld [vmem:[#allocation5 + $0x18] sm:$0xff]
        %v1377 = vsel %vm488, %v1372, 0
        %1379 = vmatprep.subr.mxu0 0.0
        %1380 = vmatpush1.msra.mxu0 0.0
        %1381 = vmatprep.subr.mxu0 0.0
        %1382 = vmatpush1.msra.mxu0 0.0
        %1383 = vmatprep.subr.mxu0 0.0
        %1384 = vmatpush1.msra.mxu0 0.0
        %1385 = vmatprep.subr.mxu0 0.0
        %1386 = vmatpush1.msra.mxu0 0.0
        %1387 = vmatprep.subr.mxu0 0.0
        %1388 = vmatpush1.msra.mxu0 0.0
        %1389 = vmatprep.subr.mxu0 0.0
        %1390 = vmatpush1.msra.mxu0 0.0
        %1391 = vmatprep.subr.mxu0 0.0
        %1392 = vmatpush1.msra.mxu0 0.0
        %1393 = vmatprep.subr.mxu0 0.0
        %1394 = vmatpush1.msra.mxu0 0.0
        %1395 = vmatprep.subr.mxu0 0.0
        %1396 = vmatpush1.msra.mxu0 0.0
        %1397 = vmatprep.subr.mxu0 0.0
        %1398 = vmatpush1.msra.mxu0 0.0
        %1399 = vmatprep.subr.mxu0 0.0
        %1400 = vmatpush1.msra.mxu0 0.0
        %1401 = vmatprep.subr.mxu0 0.0
        %1402 = vmatpush1.msra.mxu0 0.0
        %1403 = vmatprep.subr.mxu0 0.0
        %1404 = vmatpush1.msra.mxu0 0.0
        %1405 = vmatprep.subr.mxu0 0.0
        %1406 = vmatpush1.msra.mxu0 0.0
        %1407 = vmatprep.subr.mxu0 0.0
        %1408 = vmatpush1.msra.mxu0 0.0
        %1409 = vmatprep.subr.mxu0 0.0
        %1410 = vmatpush1.msra.mxu0 %v1375
        %1411 = vmatprep.subr.mxu0 0.0
        %1412 = vmatpush2.msra.mxu0 0.0
        %1413 = vmatprep.subr.mxu0 0.0
        %1414 = vmatpush2.msra.mxu0 0.0
        %1415 = vmatprep.subr.mxu0 0.0
        %1416 = vmatpush2.msra.mxu0 0.0
        %1417 = vmatprep.subr.mxu0 0.0
        %1418 = vmatpush2.msra.mxu0 0.0
        %1419 = vmatprep.subr.mxu0 0.0
        %1420 = vmatpush2.msra.mxu0 0.0
        %1421 = vmatprep.subr.mxu0 0.0
        %1422 = vmatpush2.msra.mxu0 0.0
        %1423 = vmatprep.subr.mxu0 0.0
        %1424 = vmatpush2.msra.mxu0 0.0
        %1425 = vmatprep.subr.mxu0 0.0
        %1426 = vmatpush2.msra.mxu0 0.0
        %1427 = vmatprep.subr.mxu0 0.0
        %1428 = vmatpush2.msra.mxu0 0.0
        %1429 = vmatprep.subr.mxu0 0.0
        %1430 = vmatpush2.msra.mxu0 0.0
        %1431 = vmatprep.subr.mxu0 0.0
        %1432 = vmatpush2.msra.mxu0 0.0
        %1433 = vmatprep.subr.mxu0 0.0
        %1434 = vmatpush2.msra.mxu0 0.0
        %1435 = vmatprep.subr.mxu0 0.0
        %1436 = vmatpush2.msra.mxu0 0.0
        %1437 = vmatprep.subr.mxu0 0.0
        %1438 = vmatpush2.msra.mxu0 0.0
        %1439 = vmatprep.subr.mxu0 0.0
        %1440 = vmatpush2.msra.mxu0 0.0
        %1441 = vmatprep.subr.mxu0 0.0
        %1442 = vmatpush2.msra.mxu0 0.0
        %1443 = vmatprep.mubr.f32.mxu0 0.0
        %1444 = vmatmul.mubr.f32.gmra.mxu0 %v1377
        %v1445 = vpop.f32.mrf.mxu0
        %v1446 = vadd.f32 0.0, %v1445
        %v1447 = vpop.f32.mrf.mxu0
        %1448 = vdwg.mxu0
        %v1449 = vadd.f32 %v1207, %v1446
        %v1450 = vld [vmem:[%s8] sm:$0x1]
        %v1451 = vlaneseq
        %v1452 = vshrl.u32 %v1451, 7
        %v1453 = vsub.s32 0, %v1452
        %v1454 = vrot.slane %v1450, %v1453
        %v1455 = vadd.f32 %v1449, %v1454
        %v1456 = vadd.f32 %v397, %v1455
        %v1457 = vsel %vm409, %v1456, 0.0
        %1458 = vadd.xlane.f32.xlu0 %v1457
        %v1459 = vpop.xlane.xlu0 %1458
        %v1460 = vrcp.pop 32.0
        %v1461 = vmul.f32 %v1459, %v1460
        %v1462 = vsub.f32 %v1456, %v1461
        %v1463 = vmul.f32 %v1462, %v1462
        %v1464 = vsel %vm409, %v1463, 0.0
        %1465 = vadd.xlane.f32.xlu0 %v1464
        %v1466 = vpop.xlane.xlu0 %1465
        %v1467 = vmul.f32 %v1466, %v1460
        %v1468 = vadd.f32 %v1467, 1e-05
        %v1469 = vrsqrt.pop %v1468
        %v1470 = vmul.f32 %v1462, %v1469
        %v1471 = vld [vmem:[%s8 + $0x2] sm:$0x1]
        %v1472 = vlaneseq
        %v1473 = vshrl.u32 %v1472, 7
        %v1474 = vsub.s32 0, %v1473
        %v1475 = vrot.slane %v1471, %v1474
        %v1476 = vmul.f32 %v1470, %v1475
        %v1477 = vld [vmem:[%s8 + $0x3] sm:$0x1]
        %v1478 = vlaneseq
        %v1479 = vshrl.u32 %v1478, 7
        %v1480 = vsub.s32 0, %v1479
        %v1481 = vrot.slane %v1477, %v1480
        %v1482 = vadd.f32 %v1476, %v1481
        %v1483 = vld [vmem:[#allocation7] sm:$0xff]
        %v1484 = vld [vmem:[#allocation7 + $0x8] sm:$0xff]
        %v1485 = vld [vmem:[#allocation7 + $0x10] sm:$0xff]
        %v1486 = vld [vmem:[#allocation7 + $0x18] sm:$0xff]
        %v1487 = vld [vmem:[%s6] sm:$0x1]
        %v1489 = vlaneseq
        %v1490 = vshrl.u32 %v1489, 7
        %v1491 = vsub.s32 0, %v1490
        %v1492 = vrot.slane %v1487, %v1491
        %v1495 = vsel %vm409, %v1482, 0
        %1497 = vmatprep.subr.mxu0 0.0
        %1498 = vmatpush1.msra.mxu0 0.0
        %1499 = vmatprep.subr.mxu0 0.0
        %1500 = vmatpush1.msra.mxu0 0.0
        %1501 = vmatprep.subr.mxu0 0.0
        %1502 = vmatpush1.msra.mxu0 0.0
        %1503 = vmatprep.subr.mxu0 0.0
        %1504 = vmatpush1.msra.mxu0 0.0
        %1505 = vmatprep.subr.mxu0 0.0
        %1506 = vmatpush1.msra.mxu0 0.0
        %1507 = vmatprep.subr.mxu0 0.0
        %1508 = vmatpush1.msra.mxu0 0.0
        %1509 = vmatprep.subr.mxu0 0.0
        %1510 = vmatpush1.msra.mxu0 0.0
        %1511 = vmatprep.subr.mxu0 0.0
        %1512 = vmatpush1.msra.mxu0 0.0
        %1513 = vmatprep.subr.mxu0 0.0
        %1514 = vmatpush1.msra.mxu0 0.0
        %1515 = vmatprep.subr.mxu0 0.0
        %1516 = vmatpush1.msra.mxu0 0.0
        %1517 = vmatprep.subr.mxu0 0.0
        %1518 = vmatpush1.msra.mxu0 0.0
        %1519 = vmatprep.subr.mxu0 0.0
        %1520 = vmatpush1.msra.mxu0 0.0
        %1521 = vmatprep.subr.mxu0 0.0
        %1522 = vmatpush1.msra.mxu0 %v1486
        %1523 = vmatprep.subr.mxu0 0.0
        %1524 = vmatpush1.msra.mxu0 %v1485
        %1525 = vmatprep.subr.mxu0 0.0
        %1526 = vmatpush1.msra.mxu0 %v1484
        %1527 = vmatprep.subr.mxu0 0.0
        %1528 = vmatpush1.msra.mxu0 %v1483
        %1529 = vmatprep.subr.mxu0 0.0
        %1530 = vmatpush2.msra.mxu0 0.0
        %1531 = vmatprep.subr.mxu0 0.0
        %1532 = vmatpush2.msra.mxu0 0.0
        %1533 = vmatprep.subr.mxu0 0.0
        %1534 = vmatpush2.msra.mxu0 0.0
        %1535 = vmatprep.subr.mxu0 0.0
        %1536 = vmatpush2.msra.mxu0 0.0
        %1537 = vmatprep.subr.mxu0 0.0
        %1538 = vmatpush2.msra.mxu0 0.0
        %1539 = vmatprep.subr.mxu0 0.0
        %1540 = vmatpush2.msra.mxu0 0.0
        %1541 = vmatprep.subr.mxu0 0.0
        %1542 = vmatpush2.msra.mxu0 0.0
        %1543 = vmatprep.subr.mxu0 0.0
        %1544 = vmatpush2.msra.mxu0 0.0
        %1545 = vmatprep.subr.mxu0 0.0
        %1546 = vmatpush2.msra.mxu0 0.0
        %1547 = vmatprep.subr.mxu0 0.0
        %1548 = vmatpush2.msra.mxu0 0.0
        %1549 = vmatprep.subr.mxu0 0.0
        %1550 = vmatpush2.msra.mxu0 0.0
        %1551 = vmatprep.subr.mxu0 0.0
        %1552 = vmatpush2.msra.mxu0 0.0
        %1553 = vmatprep.subr.mxu0 0.0
        %1554 = vmatpush2.msra.mxu0 0.0
        %1555 = vmatprep.subr.mxu0 0.0
        %1556 = vmatpush2.msra.mxu0 0.0
        %1557 = vmatprep.subr.mxu0 0.0
        %1558 = vmatpush2.msra.mxu0 0.0
        %1559 = vmatprep.subr.mxu0 0.0
        %1560 = vmatpush2.msra.mxu0 0.0
        %1561 = vmatprep.mubr.f32.mxu0 0.0
        %1562 = vmatmul.mubr.f32.gmra.mxu0 %v1495
        %v1563 = vpop.f32.mrf.mxu0
        %v1564 = vadd.f32 %v1492, %v1563
        %v1565 = vpop.f32.mrf.mxu0
        %1566 = vdwg.mxu0
        %v1567 = vmax.f32 %v1564, 0.0
        %v1568 = vld [vmem:[%s7] sm:$0xff]
        %v1569 = vld [vmem:[%s7 + $0x8] sm:$0xff]
        %v1570 = vld [vmem:[%s7 + $0x10] sm:$0xff]
        %v1571 = vld [vmem:[%s7 + $0x18] sm:$0xff]
        %v1572 = vld [vmem:[%s7 + $0x20] sm:$0xff]
        %v1573 = vld [vmem:[%s7 + $0x28] sm:$0xff]
        %v1574 = vld [vmem:[%s7 + $0x30] sm:$0xff]
        %v1575 = vld [vmem:[%s7 + $0x38] sm:$0xff]
        %v1576 = vld [vmem:[%s8 + $0x1] sm:$0x1]
        %v1577 = vlaneseq
        %v1578 = vshrl.u32 %v1577, 7
        %v1579 = vsub.s32 0, %v1578
        %v1580 = vrot.slane %v1576, %v1579
        %vm1581 = vcmask 523264
        %v1583 = vsel %vm1581, %v1567, 0
        %1585 = vmatprep.subr.mxu0 0.0
        %1586 = vmatpush1.msra.mxu0 0.0
        %1587 = vmatprep.subr.mxu0 0.0
        %1588 = vmatpush1.msra.mxu0 0.0
        %1589 = vmatprep.subr.mxu0 0.0
        %1590 = vmatpush1.msra.mxu0 0.0
        %1591 = vmatprep.subr.mxu0 0.0
        %1592 = vmatpush1.msra.mxu0 0.0
        %1593 = vmatprep.subr.mxu0 0.0
        %1594 = vmatpush1.msra.mxu0 0.0
        %1595 = vmatprep.subr.mxu0 0.0
        %1596 = vmatpush1.msra.mxu0 0.0
        %1597 = vmatprep.subr.mxu0 0.0
        %1598 = vmatpush1.msra.mxu0 0.0
        %1599 = vmatprep.subr.mxu0 0.0
        %1600 = vmatpush1.msra.mxu0 0.0
        %1601 = vmatprep.subr.mxu0 0.0
        %1602 = vmatpush1.msra.mxu0 %v1575
        %1603 = vmatprep.subr.mxu0 0.0
        %1604 = vmatpush1.msra.mxu0 %v1574
        %1605 = vmatprep.subr.mxu0 0.0
        %1606 = vmatpush1.msra.mxu0 %v1573
        %1607 = vmatprep.subr.mxu0 0.0
        %1608 = vmatpush1.msra.mxu0 %v1572
        %1609 = vmatprep.subr.mxu0 0.0
        %1610 = vmatpush1.msra.mxu0 %v1571
        %1611 = vmatprep.subr.mxu0 0.0
        %1612 = vmatpush1.msra.mxu0 %v1570
        %1613 = vmatprep.subr.mxu0 0.0
        %1614 = vmatpush1.msra.mxu0 %v1569
        %1615 = vmatprep.subr.mxu0 0.0
        %1616 = vmatpush1.msra.mxu0 %v1568
        %1617 = vmatprep.subr.mxu0 0.0
        %1618 = vmatpush2.msra.mxu0 0.0
        %1619 = vmatprep.subr.mxu0 0.0
        %1620 = vmatpush2.msra.mxu0 0.0
        %1621 = vmatprep.subr.mxu0 0.0
        %1622 = vmatpush2.msra.mxu0 0.0
        %1623 = vmatprep.subr.mxu0 0.0
        %1624 = vmatpush2.msra.mxu0 0.0
        %1625 = vmatprep.subr.mxu0 0.0
        %1626 = vmatpush2.msra.mxu0 0.0
        %1627 = vmatprep.subr.mxu0 0.0
        %1628 = vmatpush2.msra.mxu0 0.0
        %1629 = vmatprep.subr.mxu0 0.0
        %1630 = vmatpush2.msra.mxu0 0.0
        %1631 = vmatprep.subr.mxu0 0.0
        %1632 = vmatpush2.msra.mxu0 0.0
        %1633 = vmatprep.subr.mxu0 0.0
        %1634 = vmatpush2.msra.mxu0 0.0
        %1635 = vmatprep.subr.mxu0 0.0
        %1636 = vmatpush2.msra.mxu0 0.0
        %1637 = vmatprep.subr.mxu0 0.0
        %1638 = vmatpush2.msra.mxu0 0.0
        %1639 = vmatprep.subr.mxu0 0.0
        %1640 = vmatpush2.msra.mxu0 0.0
        %1641 = vmatprep.subr.mxu0 0.0
        %1642 = vmatpush2.msra.mxu0 0.0
        %1643 = vmatprep.subr.mxu0 0.0
        %1644 = vmatpush2.msra.mxu0 0.0
        %1645 = vmatprep.subr.mxu0 0.0
        %1646 = vmatpush2.msra.mxu0 0.0
        %1647 = vmatprep.subr.mxu0 0.0
        %1648 = vmatpush2.msra.mxu0 0.0
        %1649 = vmatprep.mubr.f32.mxu0 0.0
        %1650 = vmatmul.mubr.f32.gmra.mxu0 %v1583
        %v1651 = vpop.f32.mrf.mxu0
        %v1652 = vadd.f32 %v1580, %v1651
        %v1653 = vpop.f32.mrf.mxu0
        %1654 = vdwg.mxu0
        %v1655 = vadd.f32 %v1482, %v1652
        %v1656 = vsel %vm409, %v1655, 0.0
        %1657 = vadd.xlane.f32.xlu0 %v1656
        %v1658 = vpop.xlane.xlu0 %1657
        %v1659 = vmul.f32 %v1658, %v1460
        %v1660 = vsub.f32 %v1655, %v1659
        %v1661 = vmul.f32 %v1660, %v1660
        %v1662 = vsel %vm409, %v1661, 0.0
        %1663 = vadd.xlane.f32.xlu0 %v1662
        %v1664 = vpop.xlane.xlu0 %1663
        %v1665 = vmul.f32 %v1664, %v1460
        %v1666 = vadd.f32 %v1665, 1e-05
        %v1667 = vrsqrt.pop %v1666
        %v1668 = vmul.f32 %v1660, %v1667
        %v1669 = vld [vmem:[%s8 + $0x4] sm:$0x1]
        %v1670 = vlaneseq
        %v1671 = vshrl.u32 %v1670, 7
        %v1672 = vsub.s32 0, %v1671
        %v1673 = vrot.slane %v1669, %v1672
        %v1674 = vmul.f32 %v1668, %v1673
        %v1675 = vld [vmem:[%s8 + $0x5] sm:$0x1]
        %v1676 = vlaneseq
        %v1677 = vshrl.u32 %v1676, 7
        %v1678 = vsub.s32 0, %v1677
        %v1679 = vrot.slane %v1675, %v1678
        %v1680 = vadd.f32 %v1674, %v1679
        %1681 = vst.msk [vmem:[%s391] sm:$0xff] %vm409, %v1680
        %s1682 = sand.u32 %s234, 1
        %s1683 = scalar_lea.sflag [#allocation4], %s1682
        %s1684 = sand.u32 %s234, 1
        %s1685 = smul.addr %s1684, 8
        %s1686 = scalar_lea.vmem [#allocation8], %s1685
        // Predicated region
        $region69: #{tpu_custom_call.1} parent=55 // pred_check
          %p1687 = pneg %p244
        $region70: #{tpu_custom_call.1} parent=55 // pred_check_branch
          %1689 = sbr.rel (%p1687) target = $region72
        $region71: #{tpu_custom_call.1} parent=55 // pred_region
          %s1691 = ssub.s32 128, 128
          %1692 = vsyncadd %s1683, %s1691
          %s1693 = smul.addr %s27, 128
          %s1694 = scalar_lea.hbm %s9, %s1693
          %s1696 = sshll.u32 %s1686, 4
          %s1697 = int_to_ptr.vmem [resolvable:$true] %s1696
          %1699 = dma.vmem_to_hbm [thread:$0]  %s1697, 128, %s1694, %s1683
        $region72: #{tpu_custom_call.1} parent=55 // pred_fallthru
          _
      $region56: #{tpu_custom_call.1} parent=5 // pred_fallthru
        _
      %p1700 = scmp.le.s32.totalorder 2, %s22
      // Predicated region
      $region73: #{tpu_custom_call.1} parent=5 // pred_check
        %p1701 = pneg %p1700
      $region74: #{tpu_custom_call.1} parent=5 // pred_check_branch
        %1703 = sbr.rel (%p1701) target = $region76
      $region75: #{tpu_custom_call.1} parent=5 // pred_region
        %s1704 = ssub.s32 %s22, 2
        // Predicated region
        $region77: #{tpu_custom_call.1} parent=75 // pred_check
          %p1705 = pneg %p250
        $region78: #{tpu_custom_call.1} parent=75 // pred_check_branch
          %1707 = sbr.rel (%p1705) target = $region80
        $region79: #{tpu_custom_call.1} parent=75 // pred_region
          %s1708 = sand.u32 %s235, 1
          %s1709 = scalar_lea.sflag [#allocation4], %s1708
          %s1710 = sand.u32 %s235, 1
          %s1711 = smul.addr %s1710, 8
          %s1712 = scalar_lea.vmem [#allocation8], %s1711
          %1713 = dma.done %s1709, 128
        $region80: #{tpu_custom_call.1} parent=75 // pred_fallthru
          _
      $region76: #{tpu_custom_call.1} parent=5 // pred_fallthru
        _
    $region6: #{tpu_custom_call.1} parent=1 // loop_footer
      %s26 = sadd.s32 1, %s22
    $region7: #{tpu_custom_call.1} parent=1 // loop_footer_branch
      %21 = sbr.rel target = $region3
    $region8: #{tpu_custom_call.1} parent=1 // loop_exit
      _
    %1714 = vsyncpa [#allocation3], 1
    %s1715 = scalar_lea.sflag [#allocation3], 1
    %1716 = vsyncpa %s1715, 1
    %1717 = vsyncpa [#allocation6], 1
    %1718 = vsyncpa [#allocation4], 1
    %s1719 = scalar_lea.sflag [#allocation4], 1
    %1720 = vsyncpa %s1719, 1

</llo_original>
